<compile_context>
chip_gen: v5e
topology: v5e:2x2
jax: 0.10.0
libtpu: 0.0.40
codegen_flags: <defaults>
</compile_context>

<pallas_src>
import jax
import jax.numpy as jnp
from jax.experimental import pallas as pl
from jax.experimental.pallas import tpu as pltpu

_EPS = 1e-5
# Safe on v5e/v6e/v7x; raise (e.g. via pltpu.get_tpu_info()) for long audio on
# v6e's 128 MiB VMEM once the length-tiling TODO lands.
_VMEM_LIMIT_BYTES = 32 * 1024 * 1024


# ----------------------------------------------------------------------------
# In-kernel helpers
# ----------------------------------------------------------------------------
def _instance_norm(h, eps=_EPS):
    # InstanceNorm1d, affine=False, biased variance.
    mean = jnp.mean(h, axis=-1, keepdims=True)
    var = jnp.mean(jnp.square(h - mean), axis=-1, keepdims=True)
    return (h - mean) * jax.lax.rsqrt(var + eps)


def _silu(h):
    return h * jax.nn.sigmoid(h)


def _shift_cols(h, d):
    """out[:, l] = h[:, l + d] (zero-filled out of bounds).  h: (C, L) f32."""
    if d == 0:
        return h
    L = h.shape[-1]
    if L % 128 == 0:
        # Performance path: XLU lane rotate + 1-row boundary mask.
        lane = jax.lax.broadcasted_iota(jnp.int32, (1, L), 1)
        hs = pltpu.roll(h, shift=(-d) % L, axis=h.ndim - 1)  # positive axis (fix)
        valid = (lane < L - d) if d > 0 else (lane >= -d)
        return jnp.where(valid, hs, jnp.zeros_like(hs))
    # Tiny / ragged L fallback: one small (L, L) shift matrix (a few vregs).
    row = jax.lax.broadcasted_iota(jnp.int32, (L, L), 0)
    col = jax.lax.broadcasted_iota(jnp.int32, (L, L), 1)
    sel = (row == col + d).astype(h.dtype)      # sel[j, l] = 1 iff j == l + d
    return jnp.dot(h, sel, preferred_element_type=jnp.float32)


def _conv1d_same(h, w_ref, K, pad):
    """Conv1d(stride=1, 'same') without bias.

    h: (C_in, L) f32.  w_ref: (K, C_out, C_in) bf16 ref (tap-major).
    Per-tap bf16 MXU matmuls with f32 accumulation.  At these channel counts
    the MXU is <2% filled either way, so per-tap vs im2col is perf-neutral and
    avoids in-kernel concatenates.
    """
    acc = None
    for k in range(K):
        hk = _shift_cols(h, k - pad).astype(jnp.bfloat16)
        t = jnp.dot(w_ref[k], hk, preferred_element_type=jnp.float32)
        acc = t if acc is None else acc + t
    return acc


def _conv1d_down4(h, wd_ref):
    """Conv1d(kernel=4, stride=4, no padding) without bias.

    h: (C_in, L) f32 with L % 4 == 0.  wd_ref: (4, C_out, C_in) bf16.
    The 4-phase decimation is done fully in VMEM with small (L, L/4) selection
    matmuls — no HBM phase-pack transpose.
    """
    _, L = h.shape
    T = L // 4
    row = jax.lax.broadcasted_iota(jnp.int32, (L, T), 0)
    col = jax.lax.broadcasted_iota(jnp.int32, (L, T), 1)
    hb = h.astype(jnp.bfloat16)
    acc = None
    for k in range(4):
        sel = (row == 4 * col + k).astype(jnp.bfloat16)   # picks lanes 4t + k
        ph = jnp.dot(hb, sel, preferred_element_type=jnp.float32)      # (C_in, T)
        t = jnp.dot(wd_ref[k], ph.astype(jnp.bfloat16),
                    preferred_element_type=jnp.float32)                # (C_out, T)
        acc = t if acc is None else acc + t
    return acc


# ----------------------------------------------------------------------------
# Single fused kernel for the whole Discriminator forward (one batch element
# per grid step).
# ----------------------------------------------------------------------------
def _build_kernel(num_layers):
    def kernel(x_ref, w_in_ref, b_in_ref, *rest):
        layer_refs = rest[:5 * num_layers]
        w_out_ref, b_out_ref, o_ref = rest[5 * num_layers:]

        h = x_ref[0].astype(jnp.float32)                    # (C_in, L)
        # conv_in (k=3, s=1, pad=1)
        h = _conv1d_same(h, w_in_ref, 3, 1) + b_in_ref[...]

        for i in range(num_layers):
            wd, ws, w1, w2, b4 = layer_refs[5 * i:5 * i + 5]
            bias = b4[...]                                  # (C_out, 4)
            # down: Conv1d(k=4, s=4)
            h = _conv1d_down4(h, wd) + bias[:, 0:1]
            # Residual: shortcut / conv1 / conv2 (k=3, pad=1), all in VMEM.
            g0 = _silu(_instance_norm(h))
            res = jnp.dot(ws[...], g0.astype(jnp.bfloat16),
                          preferred_element_type=jnp.float32) + bias[:, 1:2]
            h1 = _conv1d_same(g0, w1, 3, 1) + bias[:, 2:3]
            g1 = _silu(_instance_norm(h1))
            h2 = _conv1d_same(g1, w2, 3, 1) + bias[:, 3:4]
            h = res + h2                                    # residual add in f32

        # norm_out -> SiLU -> conv_latent_out -> sigmoid
        g = _silu(_instance_norm(h))
        y = _conv1d_same(g, w_out_ref, 3, 1) + b_out_ref[...]
        o_ref[0] = jax.nn.sigmoid(y).astype(o_ref.dtype)

    return kernel


def discriminator_forward(x, params):
    n, c_in, length = x.shape
    num_layers = len(params["layers"])
    assert length % (4 ** num_layers) == 0, "stride-4 chain needs divisible length"

    def taps(w):  # PyTorch (C_out, C_in, K) -> tap-major (K, C_out, C_in) bf16
        return jnp.transpose(w, (2, 0, 1)).astype(jnp.bfloat16)

    inputs = [x]
    in_specs = [pl.BlockSpec((1, c_in, length), lambda i: (i, 0, 0))]

    def add_full(arr):
        inputs.append(arr)
        zeros = (0,) * arr.ndim
        in_specs.append(pl.BlockSpec(arr.shape, lambda i, _z=zeros: _z))

    # conv_in
    add_full(taps(params["conv_in_w"]))
    add_full(params["conv_in_b"].reshape(-1, 1).astype(jnp.float32))
    # DownBlocks (weights bf16; the 4 biases packed into one (C_out, 4) operand)
    for p in params["layers"]:
        add_full(taps(p["down_w"]))                         # (4, C_out, C_in)
        add_full(p["sc_w"][:, :, 0].astype(jnp.bfloat16))   # (C_out, C_out) 1x1
        add_full(taps(p["c1_w"]))                           # (3, C_out, C_out)
        add_full(taps(p["c2_w"]))                           # (3, C_out, C_out)
        add_full(jnp.stack([p["down_b"], p["sc_b"], p["c1_b"], p["c2_b"]],
                           axis=1).astype(jnp.float32))     # (C_out, 4)
    # tail
    add_full(taps(params["out_w"]))
    add_full(params["out_b"].reshape(-1, 1).astype(jnp.float32))

    latent = params["out_w"].shape[0]
    t_final = length // 4 ** num_layers

    return pl.pallas_call(
        _build_kernel(num_layers),
        out_shape=jax.ShapeDtypeStruct((n, latent, t_final), jnp.float32),
        grid=(n,),
        in_specs=in_specs,
        out_specs=pl.BlockSpec((1, latent, t_final), lambda i: (i, 0, 0)),
        compiler_params=pltpu.CompilerParams(
            dimension_semantics=("parallel",),
            vmem_limit_bytes=_VMEM_LIMIT_BYTES,
        ),
    )(*inputs)


# ----------------------------------------------------------------------------
# Pure-JAX reference (correctness check)
# ----------------------------------------------------------------------------
def _inorm_ref(x, eps=_EPS):
    m = jnp.mean(x, axis=-1, keepdims=True)
    v = jnp.mean((x - m) ** 2, axis=-1, keepdims=True)
    return (x - m) * jax.lax.rsqrt(v + eps)


def _silu_ref(x):
    return x * jax.nn.sigmoid(x)


def _conv1d_ref(x, w, b, stride, pad):
    out = jax.lax.conv_general_dilated(
        x, w, window_strides=(stride,), padding=[(pad, pad)],
        dimension_numbers=("NCH", "OIH", "NCH"))
    return out + b[None, :, None]


def discriminator_ref(x, params):
    x = _conv1d_ref(x, params["conv_in_w"], params["conv_in_b"], 1, 1)
    for p in params["layers"]:
        x = _conv1d_ref(x, p["down_w"], p["down_b"], 4, 0)
        res = _conv1d_ref(_silu_ref(_inorm_ref(x)), p["sc_w"], p["sc_b"], 1, 0)
        h = _conv1d_ref(_silu_ref(_inorm_ref(x)), p["c1_w"], p["c1_b"], 1, 1)
        h = _conv1d_ref(_silu_ref(_inorm_ref(h)), p["c2_w"], p["c2_b"], 1, 1)
        x = res + h
    x = _conv1d_ref(_silu_ref(_inorm_ref(x)), params["out_w"], params["out_b"], 1, 1)
    return jax.nn.sigmoid(x)


# ----------------------------------------------------------------------------
# Deterministic parameter init (synthetic; matches PyTorch module shapes)
# ----------------------------------------------------------------------------
def init_params(key, in_channels, base_channels, num_layers, latent_size):
    keys = iter(jax.random.split(key, 4 + 8 * num_layers + 4))

    def conv(cout, cin, k):
        w = 0.2 * jax.random.normal(next(keys), (cout, cin, k), jnp.float32)
        b = 0.1 * jax.random.normal(next(keys), (cout,), jnp.float32)
        return w, b

    params = {}
    params["conv_in_w"], params["conv_in_b"] = conv(base_channels, in_channels, 3)
    layers = []
    for i in range(num_layers):
        cin = base_channels * 2 ** i
        cout = base_channels * 2 ** (i + 1)
        lp = {}
        lp["down_w"], lp["down_b"] = conv(cout, cin, 4)
        lp["c1_w"], lp["c1_b"] = conv(cout, cout, 3)
        lp["c2_w"], lp["c2_b"] = conv(cout, cout, 3)
        lp["sc_w"], lp["sc_b"] = conv(cout, cout, 1)
        layers.append(lp)
    params["layers"] = layers
    last = base_channels * 2 ** num_layers
    params["out_w"], params["out_b"] = conv(latent_size, last, 3)
    # NOTE: latent_scale (30.0) is unused in the PyTorch forward; nothing to do.
    return params


if __name__ == "__main__":
    key = jax.random.PRNGKey(0)
    kx, kp = jax.random.split(key)

    # batch=2, in_channels=2, length=256, base=4, 2 down layers, latent=16
    # -> output (2, 16, 16).  L=256 exercises the roll+mask path; the later
    # (shorter) layers exercise the small-L shift-matrix fallback.
    N, C_IN, L = 2, 2, 256
    BASE, NUM_LAYERS, LATENT = 4, 2, 16

    x = jax.random.normal(kx, (N, C_IN, L), jnp.float32)
    params = init_params(kp, C_IN, BASE, NUM_LAYERS, LATENT)

    out = jax.block_until_ready(discriminator_forward(x, params))
    assert out.shape == (N, LATENT, L // 4 ** NUM_LAYERS), out.shape

    ref = discriminator_ref(x, params)
    err = float(jnp.max(jnp.abs(out - ref)))
    assert err < 5e-2, f"max abs error vs reference: {err}"  # bf16 MXU tolerance

    print("KERNEL_OK")
</pallas_src>

<mosaic_0001>
module attributes {stable_mosaic.version = 11 : i64} {
  func.func @kernel(%arg0: i32, %arg1: memref<1x2x256xf32, #tpu.memory_space<vmem>>, %arg2: memref<3x4x2xbf16, #tpu.memory_space<vmem>>, %arg3: memref<4x1xf32, #tpu.memory_space<vmem>>, %arg4: memref<4x8x4xbf16, #tpu.memory_space<vmem>>, %arg5: memref<8x8xbf16, #tpu.memory_space<vmem>>, %arg6: memref<3x8x8xbf16, #tpu.memory_space<vmem>>, %arg7: memref<3x8x8xbf16, #tpu.memory_space<vmem>>, %arg8: memref<8x4xf32, #tpu.memory_space<vmem>>, %arg9: memref<4x16x8xbf16, #tpu.memory_space<vmem>>, %arg10: memref<16x16xbf16, #tpu.memory_space<vmem>>, %arg11: memref<3x16x16xbf16, #tpu.memory_space<vmem>>, %arg12: memref<3x16x16xbf16, #tpu.memory_space<vmem>>, %arg13: memref<16x4xf32, #tpu.memory_space<vmem>>, %arg14: memref<3x16x16xbf16, #tpu.memory_space<vmem>>, %arg15: memref<16x1xf32, #tpu.memory_space<vmem>>, %arg16: memref<1x16x16xf32, #tpu.memory_space<vmem>>) attributes {dimension_semantics = [#tpu.dimension_semantics<parallel>], iteration_bounds = array<i64: 2>, scalar_prefetch = 0 : i64, scratch_operands = 0 : i64, tpu.core_type = #tpu.core_type<tc>, window_params = [{transform_indices = @transform_0, window_bounds = array<i64: 1, 2, 256>}, {pipeline_mode = #tpu.pipeline_mode<synchronous>, transform_indices = @transform_1, window_bounds = array<i64: 3, 4, 2>}, {pipeline_mode = #tpu.pipeline_mode<synchronous>, transform_indices = @transform_2, window_bounds = array<i64: 4, 1>}, {pipeline_mode = #tpu.pipeline_mode<synchronous>, transform_indices = @transform_3, window_bounds = array<i64: 4, 8, 4>}, {pipeline_mode = #tpu.pipeline_mode<synchronous>, transform_indices = @transform_4, window_bounds = array<i64: 8, 8>}, {pipeline_mode = #tpu.pipeline_mode<synchronous>, transform_indices = @transform_5, window_bounds = array<i64: 3, 8, 8>}, {pipeline_mode = #tpu.pipeline_mode<synchronous>, transform_indices = @transform_6, window_bounds = array<i64: 3, 8, 8>}, {pipeline_mode = #tpu.pipeline_mode<synchronous>, transform_indices = @transform_7, window_bounds = array<i64: 8, 4>}, {pipeline_mode = #tpu.pipeline_mode<synchronous>, transform_indices = @transform_8, window_bounds = array<i64: 4, 16, 8>}, {pipeline_mode = #tpu.pipeline_mode<synchronous>, transform_indices = @transform_9, window_bounds = array<i64: 16, 16>}, {pipeline_mode = #tpu.pipeline_mode<synchronous>, transform_indices = @transform_10, window_bounds = array<i64: 3, 16, 16>}, {pipeline_mode = #tpu.pipeline_mode<synchronous>, transform_indices = @transform_11, window_bounds = array<i64: 3, 16, 16>}, {pipeline_mode = #tpu.pipeline_mode<synchronous>, transform_indices = @transform_12, window_bounds = array<i64: 16, 4>}, {pipeline_mode = #tpu.pipeline_mode<synchronous>, transform_indices = @transform_13, window_bounds = array<i64: 3, 16, 16>}, {pipeline_mode = #tpu.pipeline_mode<synchronous>, transform_indices = @transform_14, window_bounds = array<i64: 16, 1>}, {transform_indices = @transform_15, window_bounds = array<i64: 1, 16, 16>}]} {
    %c0 = arith.constant 0 : index
    %c0_0 = arith.constant 0 : index
    %c0_1 = arith.constant 0 : index
    %0 = vector.load %arg1[%c0, %c0_0, %c0_1] : memref<1x2x256xf32, #tpu.memory_space<vmem>>, vector<1x2x256xf32>
    %1 = vector.shape_cast %0 : vector<1x2x256xf32> to vector<2x256xf32>
    %2 = tpu.iota {dimensions = array<i32: 1>} : vector<1x256xi32>
    %c1_i32 = arith.constant 1 : i32
    %3 = tpu.dynamic_rotate %1 by %c1_i32 dim 1 : vector<2x256xf32>, i32 -> vector<2x256xf32>
    %c1_i32_2 = arith.constant 1 : i32
    %4 = vector.broadcast %c1_i32_2 : i32 to vector<1x256xi32>
    %5 = arith.cmpi sge, %2, %4 : vector<1x256xi32>
    %cst = arith.constant 0.000000e+00 : f32
    %6 = vector.broadcast %cst : f32 to vector<2x256xf32>
    %7 = vector.shape_cast %5 : vector<1x256xi1> to vector<1x256xi1>
    %8 = vector.broadcast %7 : vector<1x256xi1> to vector<2x256xi1>
    %9 = arith.select %8, %3, %6 : vector<2x256xi1>, vector<2x256xf32>
    %10 = arith.truncf %9 : vector<2x256xf32> to vector<2x256xbf16>
    %c0_3 = arith.constant 0 : index
    %c0_4 = arith.constant 0 : index
    %c0_5 = arith.constant 0 : index
    %11 = vector.load %arg2[%c0_3, %c0_4, %c0_5] : memref<3x4x2xbf16, #tpu.memory_space<vmem>>, vector<1x4x2xbf16>
    %12 = vector.shape_cast %11 : vector<1x4x2xbf16> to vector<4x2xbf16>
    %cst_6 = arith.constant dense<0.000000e+00> : vector<4x256xf32>
    %13 = tpu.matmul %12, %10, %cst_6 {dimension_numbers = #tpu.dot_dimension_numbers<[1], [0], [0], [1], [0, 0, 1, 1], [], []>} : vector<4x2xbf16>, vector<2x256xbf16>, vector<4x256xf32> -> vector<4x256xf32>
    %14 = arith.truncf %1 : vector<2x256xf32> to vector<2x256xbf16>
    %c1 = arith.constant 1 : index
    %c0_7 = arith.constant 0 : index
    %c0_8 = arith.constant 0 : index
    %15 = vector.load %arg2[%c1, %c0_7, %c0_8] : memref<3x4x2xbf16, #tpu.memory_space<vmem>>, vector<1x4x2xbf16>
    %16 = vector.shape_cast %15 : vector<1x4x2xbf16> to vector<4x2xbf16>
    %cst_9 = arith.constant dense<0.000000e+00> : vector<4x256xf32>
    %17 = tpu.matmul %16, %14, %cst_9 {dimension_numbers = #tpu.dot_dimension_numbers<[1], [0], [0], [1], [0, 0, 1, 1], [], []>} : vector<4x2xbf16>, vector<2x256xbf16>, vector<4x256xf32> -> vector<4x256xf32>
    %18 = arith.addf %13, %17 : vector<4x256xf32>
    %19 = tpu.iota {dimensions = array<i32: 1>} : vector<1x256xi32>
    %c255_i32 = arith.constant 255 : i32
    %20 = tpu.dynamic_rotate %1 by %c255_i32 dim 1 : vector<2x256xf32>, i32 -> vector<2x256xf32>
    %c255_i32_10 = arith.constant 255 : i32
    %21 = vector.broadcast %c255_i32_10 : i32 to vector<1x256xi32>
    %22 = arith.cmpi slt, %19, %21 : vector<1x256xi32>
    %cst_11 = arith.constant 0.000000e+00 : f32
    %23 = vector.broadcast %cst_11 : f32 to vector<2x256xf32>
    %24 = vector.shape_cast %22 : vector<1x256xi1> to vector<1x256xi1>
    %25 = vector.broadcast %24 : vector<1x256xi1> to vector<2x256xi1>
    %26 = arith.select %25, %20, %23 : vector<2x256xi1>, vector<2x256xf32>
    %27 = arith.truncf %26 : vector<2x256xf32> to vector<2x256xbf16>
    %c2 = arith.constant 2 : index
    %c0_12 = arith.constant 0 : index
    %c0_13 = arith.constant 0 : index
    %28 = vector.load %arg2[%c2, %c0_12, %c0_13] : memref<3x4x2xbf16, #tpu.memory_space<vmem>>, vector<1x4x2xbf16>
    %29 = vector.shape_cast %28 : vector<1x4x2xbf16> to vector<4x2xbf16>
    %cst_14 = arith.constant dense<0.000000e+00> : vector<4x256xf32>
    %30 = tpu.matmul %29, %27, %cst_14 {dimension_numbers = #tpu.dot_dimension_numbers<[1], [0], [0], [1], [0, 0, 1, 1], [], []>} : vector<4x2xbf16>, vector<2x256xbf16>, vector<4x256xf32> -> vector<4x256xf32>
    %31 = arith.addf %18, %30 : vector<4x256xf32>
    %c0_15 = arith.constant 0 : index
    %c0_16 = arith.constant 0 : index
    %32 = vector.load %arg3[%c0_15, %c0_16] : memref<4x1xf32, #tpu.memory_space<vmem>>, vector<4x1xf32>
    %33 = vector.broadcast %32 : vector<4x1xf32> to vector<4x256xf32>
    %34 = arith.addf %31, %33 : vector<4x256xf32>
    %c0_17 = arith.constant 0 : index
    %c0_18 = arith.constant 0 : index
    %35 = vector.load %arg8[%c0_17, %c0_18] : memref<8x4xf32, #tpu.memory_space<vmem>>, vector<8x4xf32>
    %36 = tpu.iota {dimensions = array<i32: 0>} : vector<256x64xi32>
    %37 = tpu.iota {dimensions = array<i32: 1>} : vector<256x64xi32>
    %38 = arith.truncf %34 : vector<4x256xf32> to vector<4x256xbf16>
    %c4_i32 = arith.constant 4 : i32
    %39 = vector.broadcast %c4_i32 : i32 to vector<256x64xi32>
    %40 = arith.muli %39, %37 : vector<256x64xi32>
    %c0_i32 = arith.constant 0 : i32
    %41 = vector.broadcast %c0_i32 : i32 to vector<256x64xi32>
    %42 = arith.addi %40, %41 : vector<256x64xi32>
    %43 = arith.cmpi eq, %36, %42 : vector<256x64xi32>
    %44 = arith.extui %43 : vector<256x64xi1> to vector<256x64xi32>
    %45 = arith.sitofp %44 : vector<256x64xi32> to vector<256x64xf32>
    %46 = arith.truncf %45 : vector<256x64xf32> to vector<256x64xbf16>
    %cst_19 = arith.constant dense<0.000000e+00> : vector<4x64xf32>
    %47 = tpu.matmul %38, %46, %cst_19 {dimension_numbers = #tpu.dot_dimension_numbers<[1], [0], [0], [1], [0, 0, 1, 1], [], []>} : vector<4x256xbf16>, vector<256x64xbf16>, vector<4x64xf32> -> vector<4x64xf32>
    %c0_20 = arith.constant 0 : index
    %c0_21 = arith.constant 0 : index
    %c0_22 = arith.constant 0 : index
    %48 = vector.load %arg4[%c0_20, %c0_21, %c0_22] : memref<4x8x4xbf16, #tpu.memory_space<vmem>>, vector<1x8x4xbf16>
    %49 = vector.shape_cast %48 : vector<1x8x4xbf16> to vector<8x4xbf16>
    %50 = arith.truncf %47 : vector<4x64xf32> to vector<4x64xbf16>
    %cst_23 = arith.constant dense<0.000000e+00> : vector<8x64xf32>
    %51 = tpu.matmul %49, %50, %cst_23 {dimension_numbers = #tpu.dot_dimension_numbers<[1], [0], [0], [1], [0, 0, 1, 1], [], []>} : vector<8x4xbf16>, vector<4x64xbf16>, vector<8x64xf32> -> vector<8x64xf32>
    %c4_i32_24 = arith.constant 4 : i32
    %52 = vector.broadcast %c4_i32_24 : i32 to vector<256x64xi32>
    %53 = arith.muli %52, %37 : vector<256x64xi32>
    %c1_i32_25 = arith.constant 1 : i32
    %54 = vector.broadcast %c1_i32_25 : i32 to vector<256x64xi32>
    %55 = arith.addi %53, %54 : vector<256x64xi32>
    %56 = arith.cmpi eq, %36, %55 : vector<256x64xi32>
    %57 = arith.extui %56 : vector<256x64xi1> to vector<256x64xi32>
    %58 = arith.sitofp %57 : vector<256x64xi32> to vector<256x64xf32>
    %59 = arith.truncf %58 : vector<256x64xf32> to vector<256x64xbf16>
    %cst_26 = arith.constant dense<0.000000e+00> : vector<4x64xf32>
    %60 = tpu.matmul %38, %59, %cst_26 {dimension_numbers = #tpu.dot_dimension_numbers<[1], [0], [0], [1], [0, 0, 1, 1], [], []>} : vector<4x256xbf16>, vector<256x64xbf16>, vector<4x64xf32> -> vector<4x64xf32>
    %c1_27 = arith.constant 1 : index
    %c0_28 = arith.constant 0 : index
    %c0_29 = arith.constant 0 : index
    %61 = vector.load %arg4[%c1_27, %c0_28, %c0_29] : memref<4x8x4xbf16, #tpu.memory_space<vmem>>, vector<1x8x4xbf16>
    %62 = vector.shape_cast %61 : vector<1x8x4xbf16> to vector<8x4xbf16>
    %63 = arith.truncf %60 : vector<4x64xf32> to vector<4x64xbf16>
    %cst_30 = arith.constant dense<0.000000e+00> : vector<8x64xf32>
    %64 = tpu.matmul %62, %63, %cst_30 {dimension_numbers = #tpu.dot_dimension_numbers<[1], [0], [0], [1], [0, 0, 1, 1], [], []>} : vector<8x4xbf16>, vector<4x64xbf16>, vector<8x64xf32> -> vector<8x64xf32>
    %65 = arith.addf %51, %64 : vector<8x64xf32>
    %c4_i32_31 = arith.constant 4 : i32
    %66 = vector.broadcast %c4_i32_31 : i32 to vector<256x64xi32>
    %67 = arith.muli %66, %37 : vector<256x64xi32>
    %c2_i32 = arith.constant 2 : i32
    %68 = vector.broadcast %c2_i32 : i32 to vector<256x64xi32>
    %69 = arith.addi %67, %68 : vector<256x64xi32>
    %70 = arith.cmpi eq, %36, %69 : vector<256x64xi32>
    %71 = arith.extui %70 : vector<256x64xi1> to vector<256x64xi32>
    %72 = arith.sitofp %71 : vector<256x64xi32> to vector<256x64xf32>
    %73 = arith.truncf %72 : vector<256x64xf32> to vector<256x64xbf16>
    %cst_32 = arith.constant dense<0.000000e+00> : vector<4x64xf32>
    %74 = tpu.matmul %38, %73, %cst_32 {dimension_numbers = #tpu.dot_dimension_numbers<[1], [0], [0], [1], [0, 0, 1, 1], [], []>} : vector<4x256xbf16>, vector<256x64xbf16>, vector<4x64xf32> -> vector<4x64xf32>
    %c2_33 = arith.constant 2 : index
    %c0_34 = arith.constant 0 : index
    %c0_35 = arith.constant 0 : index
    %75 = vector.load %arg4[%c2_33, %c0_34, %c0_35] : memref<4x8x4xbf16, #tpu.memory_space<vmem>>, vector<1x8x4xbf16>
    %76 = vector.shape_cast %75 : vector<1x8x4xbf16> to vector<8x4xbf16>
    %77 = arith.truncf %74 : vector<4x64xf32> to vector<4x64xbf16>
    %cst_36 = arith.constant dense<0.000000e+00> : vector<8x64xf32>
    %78 = tpu.matmul %76, %77, %cst_36 {dimension_numbers = #tpu.dot_dimension_numbers<[1], [0], [0], [1], [0, 0, 1, 1], [], []>} : vector<8x4xbf16>, vector<4x64xbf16>, vector<8x64xf32> -> vector<8x64xf32>
    %79 = arith.addf %65, %78 : vector<8x64xf32>
    %c4_i32_37 = arith.constant 4 : i32
    %80 = vector.broadcast %c4_i32_37 : i32 to vector<256x64xi32>
    %81 = arith.muli %80, %37 : vector<256x64xi32>
    %c3_i32 = arith.constant 3 : i32
    %82 = vector.broadcast %c3_i32 : i32 to vector<256x64xi32>
    %83 = arith.addi %81, %82 : vector<256x64xi32>
    %84 = arith.cmpi eq, %36, %83 : vector<256x64xi32>
    %85 = arith.extui %84 : vector<256x64xi1> to vector<256x64xi32>
    %86 = arith.sitofp %85 : vector<256x64xi32> to vector<256x64xf32>
    %87 = arith.truncf %86 : vector<256x64xf32> to vector<256x64xbf16>
    %cst_38 = arith.constant dense<0.000000e+00> : vector<4x64xf32>
    %88 = tpu.matmul %38, %87, %cst_38 {dimension_numbers = #tpu.dot_dimension_numbers<[1], [0], [0], [1], [0, 0, 1, 1], [], []>} : vector<4x256xbf16>, vector<256x64xbf16>, vector<4x64xf32> -> vector<4x64xf32>
    %c3 = arith.constant 3 : index
    %c0_39 = arith.constant 0 : index
    %c0_40 = arith.constant 0 : index
    %89 = vector.load %arg4[%c3, %c0_39, %c0_40] : memref<4x8x4xbf16, #tpu.memory_space<vmem>>, vector<1x8x4xbf16>
    %90 = vector.shape_cast %89 : vector<1x8x4xbf16> to vector<8x4xbf16>
    %91 = arith.truncf %88 : vector<4x64xf32> to vector<4x64xbf16>
    %cst_41 = arith.constant dense<0.000000e+00> : vector<8x64xf32>
    %92 = tpu.matmul %90, %91, %cst_41 {dimension_numbers = #tpu.dot_dimension_numbers<[1], [0], [0], [1], [0, 0, 1, 1], [], []>} : vector<8x4xbf16>, vector<4x64xbf16>, vector<8x64xf32> -> vector<8x64xf32>
    %93 = arith.addf %79, %92 : vector<8x64xf32>
    %94 = vector.extract_strided_slice %35 {offsets = [0, 0], sizes = [8, 1], strides = [1, 1]} : vector<8x4xf32> to vector<8x1xf32>
    %95 = vector.broadcast %94 : vector<8x1xf32> to vector<8x64xf32>
    %96 = arith.addf %93, %95 : vector<8x64xf32>
    %cst_42 = arith.constant dense<0.000000e+00> : vector<8xf32>
    %97 = vector.multi_reduction <add>, %96, %cst_42 [1] : vector<8x64xf32> to vector<8xf32>
    %98 = vector.shape_cast %97 : vector<8xf32> to vector<8x1xf32>
    %cst_43 = arith.constant 6.400000e+01 : f32
    %99 = vector.broadcast %cst_43 : f32 to vector<8x1xf32>
    %100 = arith.divf %98, %99 : vector<8x1xf32>
    %101 = vector.broadcast %100 : vector<8x1xf32> to vector<8x64xf32>
    %102 = arith.subf %96, %101 : vector<8x64xf32>
    %103 = arith.mulf %102, %102 : vector<8x64xf32>
    %cst_44 = arith.constant dense<0.000000e+00> : vector<8xf32>
    %104 = vector.multi_reduction <add>, %103, %cst_44 [1] : vector<8x64xf32> to vector<8xf32>
    %105 = vector.shape_cast %104 : vector<8xf32> to vector<8x1xf32>
    %cst_45 = arith.constant 6.400000e+01 : f32
    %106 = vector.broadcast %cst_45 : f32 to vector<8x1xf32>
    %107 = arith.divf %105, %106 : vector<8x1xf32>
    %108 = vector.broadcast %100 : vector<8x1xf32> to vector<8x64xf32>
    %109 = arith.subf %96, %108 : vector<8x64xf32>
    %cst_46 = arith.constant 9.99999974E-6 : f32
    %110 = vector.broadcast %cst_46 : f32 to vector<8x1xf32>
    %111 = arith.addf %107, %110 : vector<8x1xf32>
    %112 = math.rsqrt %111 : vector<8x1xf32>
    %113 = vector.broadcast %112 : vector<8x1xf32> to vector<8x64xf32>
    %114 = arith.mulf %109, %113 : vector<8x64xf32>
    %115 = arith.negf %114 : vector<8x64xf32>
    %116 = math.exp %115 : vector<8x64xf32>
    %cst_47 = arith.constant 1.000000e+00 : f32
    %117 = vector.broadcast %cst_47 : f32 to vector<8x64xf32>
    %118 = arith.addf %117, %116 : vector<8x64xf32>
    %119 = arith.divf %117, %118 : vector<8x64xf32>
    %120 = arith.mulf %114, %119 : vector<8x64xf32>
    %c0_48 = arith.constant 0 : index
    %c0_49 = arith.constant 0 : index
    %121 = vector.load %arg5[%c0_48, %c0_49] : memref<8x8xbf16, #tpu.memory_space<vmem>>, vector<8x8xbf16>
    %122 = arith.truncf %120 : vector<8x64xf32> to vector<8x64xbf16>
    %cst_50 = arith.constant dense<0.000000e+00> : vector<8x64xf32>
    %123 = tpu.matmul %121, %122, %cst_50 {dimension_numbers = #tpu.dot_dimension_numbers<[1], [0], [0], [1], [0, 0, 1, 1], [], []>} : vector<8x8xbf16>, vector<8x64xbf16>, vector<8x64xf32> -> vector<8x64xf32>
    %124 = vector.extract_strided_slice %35 {offsets = [0, 1], sizes = [8, 1], strides = [1, 1]} : vector<8x4xf32> to vector<8x1xf32>
    %125 = vector.broadcast %124 : vector<8x1xf32> to vector<8x64xf32>
    %126 = arith.addf %123, %125 : vector<8x64xf32>
    %127 = tpu.iota {dimensions = array<i32: 0>} : vector<64x64xi32>
    %128 = tpu.iota {dimensions = array<i32: 1>} : vector<64x64xi32>
    %c-1_i32 = arith.constant -1 : i32
    %129 = vector.broadcast %c-1_i32 : i32 to vector<64x64xi32>
    %130 = arith.addi %128, %129 : vector<64x64xi32>
    %131 = arith.cmpi eq, %127, %130 : vector<64x64xi32>
    %132 = arith.extui %131 : vector<64x64xi1> to vector<64x64xi32>
    %133 = arith.sitofp %132 : vector<64x64xi32> to vector<64x64xf32>
    %cst_51 = arith.constant dense<0.000000e+00> : vector<8x64xf32>
    %134 = tpu.matmul %120, %133, %cst_51 {dimension_numbers = #tpu.dot_dimension_numbers<[1], [0], [0], [1], [0, 0, 1, 1], [], []>} : vector<8x64xf32>, vector<64x64xf32>, vector<8x64xf32> -> vector<8x64xf32>
    %135 = arith.truncf %134 : vector<8x64xf32> to vector<8x64xbf16>
    %c0_52 = arith.constant 0 : index
    %c0_53 = arith.constant 0 : index
    %c0_54 = arith.constant 0 : index
    %136 = vector.load %arg6[%c0_52, %c0_53, %c0_54] : memref<3x8x8xbf16, #tpu.memory_space<vmem>>, vector<1x8x8xbf16>
    %137 = vector.shape_cast %136 : vector<1x8x8xbf16> to vector<8x8xbf16>
    %cst_55 = arith.constant dense<0.000000e+00> : vector<8x64xf32>
    %138 = tpu.matmul %137, %135, %cst_55 {dimension_numbers = #tpu.dot_dimension_numbers<[1], [0], [0], [1], [0, 0, 1, 1], [], []>} : vector<8x8xbf16>, vector<8x64xbf16>, vector<8x64xf32> -> vector<8x64xf32>
    %139 = arith.truncf %120 : vector<8x64xf32> to vector<8x64xbf16>
    %c1_56 = arith.constant 1 : index
    %c0_57 = arith.constant 0 : index
    %c0_58 = arith.constant 0 : index
    %140 = vector.load %arg6[%c1_56, %c0_57, %c0_58] : memref<3x8x8xbf16, #tpu.memory_space<vmem>>, vector<1x8x8xbf16>
    %141 = vector.shape_cast %140 : vector<1x8x8xbf16> to vector<8x8xbf16>
    %cst_59 = arith.constant dense<0.000000e+00> : vector<8x64xf32>
    %142 = tpu.matmul %141, %139, %cst_59 {dimension_numbers = #tpu.dot_dimension_numbers<[1], [0], [0], [1], [0, 0, 1, 1], [], []>} : vector<8x8xbf16>, vector<8x64xbf16>, vector<8x64xf32> -> vector<8x64xf32>
    %143 = arith.addf %138, %142 : vector<8x64xf32>
    %144 = tpu.iota {dimensions = array<i32: 0>} : vector<64x64xi32>
    %145 = tpu.iota {dimensions = array<i32: 1>} : vector<64x64xi32>
    %c1_i32_60 = arith.constant 1 : i32
    %146 = vector.broadcast %c1_i32_60 : i32 to vector<64x64xi32>
    %147 = arith.addi %145, %146 : vector<64x64xi32>
    %148 = arith.cmpi eq, %144, %147 : vector<64x64xi32>
    %149 = arith.extui %148 : vector<64x64xi1> to vector<64x64xi32>
    %150 = arith.sitofp %149 : vector<64x64xi32> to vector<64x64xf32>
    %cst_61 = arith.constant dense<0.000000e+00> : vector<8x64xf32>
    %151 = tpu.matmul %120, %150, %cst_61 {dimension_numbers = #tpu.dot_dimension_numbers<[1], [0], [0], [1], [0, 0, 1, 1], [], []>} : vector<8x64xf32>, vector<64x64xf32>, vector<8x64xf32> -> vector<8x64xf32>
    %152 = arith.truncf %151 : vector<8x64xf32> to vector<8x64xbf16>
    %c2_62 = arith.constant 2 : index
    %c0_63 = arith.constant 0 : index
    %c0_64 = arith.constant 0 : index
    %153 = vector.load %arg6[%c2_62, %c0_63, %c0_64] : memref<3x8x8xbf16, #tpu.memory_space<vmem>>, vector<1x8x8xbf16>
    %154 = vector.shape_cast %153 : vector<1x8x8xbf16> to vector<8x8xbf16>
    %cst_65 = arith.constant dense<0.000000e+00> : vector<8x64xf32>
    %155 = tpu.matmul %154, %152, %cst_65 {dimension_numbers = #tpu.dot_dimension_numbers<[1], [0], [0], [1], [0, 0, 1, 1], [], []>} : vector<8x8xbf16>, vector<8x64xbf16>, vector<8x64xf32> -> vector<8x64xf32>
    %156 = arith.addf %143, %155 : vector<8x64xf32>
    %157 = vector.extract_strided_slice %35 {offsets = [0, 2], sizes = [8, 1], strides = [1, 1]} : vector<8x4xf32> to vector<8x1xf32>
    %158 = vector.broadcast %157 : vector<8x1xf32> to vector<8x64xf32>
    %159 = arith.addf %156, %158 : vector<8x64xf32>
    %cst_66 = arith.constant dense<0.000000e+00> : vector<8xf32>
    %160 = vector.multi_reduction <add>, %159, %cst_66 [1] : vector<8x64xf32> to vector<8xf32>
    %161 = vector.shape_cast %160 : vector<8xf32> to vector<8x1xf32>
    %cst_67 = arith.constant 6.400000e+01 : f32
    %162 = vector.broadcast %cst_67 : f32 to vector<8x1xf32>
    %163 = arith.divf %161, %162 : vector<8x1xf32>
    %164 = vector.broadcast %163 : vector<8x1xf32> to vector<8x64xf32>
    %165 = arith.subf %159, %164 : vector<8x64xf32>
    %166 = arith.mulf %165, %165 : vector<8x64xf32>
    %cst_68 = arith.constant dense<0.000000e+00> : vector<8xf32>
    %167 = vector.multi_reduction <add>, %166, %cst_68 [1] : vector<8x64xf32> to vector<8xf32>
    %168 = vector.shape_cast %167 : vector<8xf32> to vector<8x1xf32>
    %cst_69 = arith.constant 6.400000e+01 : f32
    %169 = vector.broadcast %cst_69 : f32 to vector<8x1xf32>
    %170 = arith.divf %168, %169 : vector<8x1xf32>
    %171 = vector.broadcast %163 : vector<8x1xf32> to vector<8x64xf32>
    %172 = arith.subf %159, %171 : vector<8x64xf32>
    %cst_70 = arith.constant 9.99999974E-6 : f32
    %173 = vector.broadcast %cst_70 : f32 to vector<8x1xf32>
    %174 = arith.addf %170, %173 : vector<8x1xf32>
    %175 = math.rsqrt %174 : vector<8x1xf32>
    %176 = vector.broadcast %175 : vector<8x1xf32> to vector<8x64xf32>
    %177 = arith.mulf %172, %176 : vector<8x64xf32>
    %178 = arith.negf %177 : vector<8x64xf32>
    %179 = math.exp %178 : vector<8x64xf32>
    %cst_71 = arith.constant 1.000000e+00 : f32
    %180 = vector.broadcast %cst_71 : f32 to vector<8x64xf32>
    %181 = arith.addf %180, %179 : vector<8x64xf32>
    %182 = arith.divf %180, %181 : vector<8x64xf32>
    %183 = arith.mulf %177, %182 : vector<8x64xf32>
    %184 = tpu.iota {dimensions = array<i32: 0>} : vector<64x64xi32>
    %185 = tpu.iota {dimensions = array<i32: 1>} : vector<64x64xi32>
    %c-1_i32_72 = arith.constant -1 : i32
    %186 = vector.broadcast %c-1_i32_72 : i32 to vector<64x64xi32>
    %187 = arith.addi %185, %186 : vector<64x64xi32>
    %188 = arith.cmpi eq, %184, %187 : vector<64x64xi32>
    %189 = arith.extui %188 : vector<64x64xi1> to vector<64x64xi32>
    %190 = arith.sitofp %189 : vector<64x64xi32> to vector<64x64xf32>
    %cst_73 = arith.constant dense<0.000000e+00> : vector<8x64xf32>
    %191 = tpu.matmul %183, %190, %cst_73 {dimension_numbers = #tpu.dot_dimension_numbers<[1], [0], [0], [1], [0, 0, 1, 1], [], []>} : vector<8x64xf32>, vector<64x64xf32>, vector<8x64xf32> -> vector<8x64xf32>
    %192 = arith.truncf %191 : vector<8x64xf32> to vector<8x64xbf16>
    %c0_74 = arith.constant 0 : index
    %c0_75 = arith.constant 0 : index
    %c0_76 = arith.constant 0 : index
    %193 = vector.load %arg7[%c0_74, %c0_75, %c0_76] : memref<3x8x8xbf16, #tpu.memory_space<vmem>>, vector<1x8x8xbf16>
    %194 = vector.shape_cast %193 : vector<1x8x8xbf16> to vector<8x8xbf16>
    %cst_77 = arith.constant dense<0.000000e+00> : vector<8x64xf32>
    %195 = tpu.matmul %194, %192, %cst_77 {dimension_numbers = #tpu.dot_dimension_numbers<[1], [0], [0], [1], [0, 0, 1, 1], [], []>} : vector<8x8xbf16>, vector<8x64xbf16>, vector<8x64xf32> -> vector<8x64xf32>
    %196 = arith.truncf %183 : vector<8x64xf32> to vector<8x64xbf16>
    %c1_78 = arith.constant 1 : index
    %c0_79 = arith.constant 0 : index
    %c0_80 = arith.constant 0 : index
    %197 = vector.load %arg7[%c1_78, %c0_79, %c0_80] : memref<3x8x8xbf16, #tpu.memory_space<vmem>>, vector<1x8x8xbf16>
    %198 = vector.shape_cast %197 : vector<1x8x8xbf16> to vector<8x8xbf16>
    %cst_81 = arith.constant dense<0.000000e+00> : vector<8x64xf32>
    %199 = tpu.matmul %198, %196, %cst_81 {dimension_numbers = #tpu.dot_dimension_numbers<[1], [0], [0], [1], [0, 0, 1, 1], [], []>} : vector<8x8xbf16>, vector<8x64xbf16>, vector<8x64xf32> -> vector<8x64xf32>
    %200 = arith.addf %195, %199 : vector<8x64xf32>
    %201 = tpu.iota {dimensions = array<i32: 0>} : vector<64x64xi32>
    %202 = tpu.iota {dimensions = array<i32: 1>} : vector<64x64xi32>
    %c1_i32_82 = arith.constant 1 : i32
    %203 = vector.broadcast %c1_i32_82 : i32 to vector<64x64xi32>
    %204 = arith.addi %202, %203 : vector<64x64xi32>
    %205 = arith.cmpi eq, %201, %204 : vector<64x64xi32>
    %206 = arith.extui %205 : vector<64x64xi1> to vector<64x64xi32>
    %207 = arith.sitofp %206 : vector<64x64xi32> to vector<64x64xf32>
    %cst_83 = arith.constant dense<0.000000e+00> : vector<8x64xf32>
    %208 = tpu.matmul %183, %207, %cst_83 {dimension_numbers = #tpu.dot_dimension_numbers<[1], [0], [0], [1], [0, 0, 1, 1], [], []>} : vector<8x64xf32>, vector<64x64xf32>, vector<8x64xf32> -> vector<8x64xf32>
    %209 = arith.truncf %208 : vector<8x64xf32> to vector<8x64xbf16>
    %c2_84 = arith.constant 2 : index
    %c0_85 = arith.constant 0 : index
    %c0_86 = arith.constant 0 : index
    %210 = vector.load %arg7[%c2_84, %c0_85, %c0_86] : memref<3x8x8xbf16, #tpu.memory_space<vmem>>, vector<1x8x8xbf16>
    %211 = vector.shape_cast %210 : vector<1x8x8xbf16> to vector<8x8xbf16>
    %cst_87 = arith.constant dense<0.000000e+00> : vector<8x64xf32>
    %212 = tpu.matmul %211, %209, %cst_87 {dimension_numbers = #tpu.dot_dimension_numbers<[1], [0], [0], [1], [0, 0, 1, 1], [], []>} : vector<8x8xbf16>, vector<8x64xbf16>, vector<8x64xf32> -> vector<8x64xf32>
    %213 = arith.addf %200, %212 : vector<8x64xf32>
    %214 = vector.extract_strided_slice %35 {offsets = [0, 3], sizes = [8, 1], strides = [1, 1]} : vector<8x4xf32> to vector<8x1xf32>
    %215 = vector.broadcast %214 : vector<8x1xf32> to vector<8x64xf32>
    %216 = arith.addf %213, %215 : vector<8x64xf32>
    %217 = arith.addf %126, %216 : vector<8x64xf32>
    %c0_88 = arith.constant 0 : index
    %c0_89 = arith.constant 0 : index
    %218 = vector.load %arg13[%c0_88, %c0_89] : memref<16x4xf32, #tpu.memory_space<vmem>>, vector<16x4xf32>
    %219 = tpu.iota {dimensions = array<i32: 0>} : vector<64x16xi32>
    %220 = tpu.iota {dimensions = array<i32: 1>} : vector<64x16xi32>
    %221 = arith.truncf %217 : vector<8x64xf32> to vector<8x64xbf16>
    %c4_i32_90 = arith.constant 4 : i32
    %222 = vector.broadcast %c4_i32_90 : i32 to vector<64x16xi32>
    %223 = arith.muli %222, %220 : vector<64x16xi32>
    %c0_i32_91 = arith.constant 0 : i32
    %224 = vector.broadcast %c0_i32_91 : i32 to vector<64x16xi32>
    %225 = arith.addi %223, %224 : vector<64x16xi32>
    %226 = arith.cmpi eq, %219, %225 : vector<64x16xi32>
    %227 = arith.extui %226 : vector<64x16xi1> to vector<64x16xi32>
    %228 = arith.sitofp %227 : vector<64x16xi32> to vector<64x16xf32>
    %229 = arith.truncf %228 : vector<64x16xf32> to vector<64x16xbf16>
    %cst_92 = arith.constant dense<0.000000e+00> : vector<8x16xf32>
    %230 = tpu.matmul %221, %229, %cst_92 {dimension_numbers = #tpu.dot_dimension_numbers<[1], [0], [0], [1], [0, 0, 1, 1], [], []>} : vector<8x64xbf16>, vector<64x16xbf16>, vector<8x16xf32> -> vector<8x16xf32>
    %c0_93 = arith.constant 0 : index
    %c0_94 = arith.constant 0 : index
    %c0_95 = arith.constant 0 : index
    %231 = vector.load %arg9[%c0_93, %c0_94, %c0_95] : memref<4x16x8xbf16, #tpu.memory_space<vmem>>, vector<1x16x8xbf16>
    %232 = vector.shape_cast %231 : vector<1x16x8xbf16> to vector<16x8xbf16>
    %233 = arith.truncf %230 : vector<8x16xf32> to vector<8x16xbf16>
    %cst_96 = arith.constant dense<0.000000e+00> : vector<16x16xf32>
    %234 = tpu.matmul %232, %233, %cst_96 {dimension_numbers = #tpu.dot_dimension_numbers<[1], [0], [0], [1], [0, 0, 1, 1], [], []>} : vector<16x8xbf16>, vector<8x16xbf16>, vector<16x16xf32> -> vector<16x16xf32>
    %c4_i32_97 = arith.constant 4 : i32
    %235 = vector.broadcast %c4_i32_97 : i32 to vector<64x16xi32>
    %236 = arith.muli %235, %220 : vector<64x16xi32>
    %c1_i32_98 = arith.constant 1 : i32
    %237 = vector.broadcast %c1_i32_98 : i32 to vector<64x16xi32>
    %238 = arith.addi %236, %237 : vector<64x16xi32>
    %239 = arith.cmpi eq, %219, %238 : vector<64x16xi32>
    %240 = arith.extui %239 : vector<64x16xi1> to vector<64x16xi32>
    %241 = arith.sitofp %240 : vector<64x16xi32> to vector<64x16xf32>
    %242 = arith.truncf %241 : vector<64x16xf32> to vector<64x16xbf16>
    %cst_99 = arith.constant dense<0.000000e+00> : vector<8x16xf32>
    %243 = tpu.matmul %221, %242, %cst_99 {dimension_numbers = #tpu.dot_dimension_numbers<[1], [0], [0], [1], [0, 0, 1, 1], [], []>} : vector<8x64xbf16>, vector<64x16xbf16>, vector<8x16xf32> -> vector<8x16xf32>
    %c1_100 = arith.constant 1 : index
    %c0_101 = arith.constant 0 : index
    %c0_102 = arith.constant 0 : index
    %244 = vector.load %arg9[%c1_100, %c0_101, %c0_102] : memref<4x16x8xbf16, #tpu.memory_space<vmem>>, vector<1x16x8xbf16>
    %245 = vector.shape_cast %244 : vector<1x16x8xbf16> to vector<16x8xbf16>
    %246 = arith.truncf %243 : vector<8x16xf32> to vector<8x16xbf16>
    %cst_103 = arith.constant dense<0.000000e+00> : vector<16x16xf32>
    %247 = tpu.matmul %245, %246, %cst_103 {dimension_numbers = #tpu.dot_dimension_numbers<[1], [0], [0], [1], [0, 0, 1, 1], [], []>} : vector<16x8xbf16>, vector<8x16xbf16>, vector<16x16xf32> -> vector<16x16xf32>
    %248 = arith.addf %234, %247 : vector<16x16xf32>
    %c4_i32_104 = arith.constant 4 : i32
    %249 = vector.broadcast %c4_i32_104 : i32 to vector<64x16xi32>
    %250 = arith.muli %249, %220 : vector<64x16xi32>
    %c2_i32_105 = arith.constant 2 : i32
    %251 = vector.broadcast %c2_i32_105 : i32 to vector<64x16xi32>
    %252 = arith.addi %250, %251 : vector<64x16xi32>
    %253 = arith.cmpi eq, %219, %252 : vector<64x16xi32>
    %254 = arith.extui %253 : vector<64x16xi1> to vector<64x16xi32>
    %255 = arith.sitofp %254 : vector<64x16xi32> to vector<64x16xf32>
    %256 = arith.truncf %255 : vector<64x16xf32> to vector<64x16xbf16>
    %cst_106 = arith.constant dense<0.000000e+00> : vector<8x16xf32>
    %257 = tpu.matmul %221, %256, %cst_106 {dimension_numbers = #tpu.dot_dimension_numbers<[1], [0], [0], [1], [0, 0, 1, 1], [], []>} : vector<8x64xbf16>, vector<64x16xbf16>, vector<8x16xf32> -> vector<8x16xf32>
    %c2_107 = arith.constant 2 : index
    %c0_108 = arith.constant 0 : index
    %c0_109 = arith.constant 0 : index
    %258 = vector.load %arg9[%c2_107, %c0_108, %c0_109] : memref<4x16x8xbf16, #tpu.memory_space<vmem>>, vector<1x16x8xbf16>
    %259 = vector.shape_cast %258 : vector<1x16x8xbf16> to vector<16x8xbf16>
    %260 = arith.truncf %257 : vector<8x16xf32> to vector<8x16xbf16>
    %cst_110 = arith.constant dense<0.000000e+00> : vector<16x16xf32>
    %261 = tpu.matmul %259, %260, %cst_110 {dimension_numbers = #tpu.dot_dimension_numbers<[1], [0], [0], [1], [0, 0, 1, 1], [], []>} : vector<16x8xbf16>, vector<8x16xbf16>, vector<16x16xf32> -> vector<16x16xf32>
    %262 = arith.addf %248, %261 : vector<16x16xf32>
    %c4_i32_111 = arith.constant 4 : i32
    %263 = vector.broadcast %c4_i32_111 : i32 to vector<64x16xi32>
    %264 = arith.muli %263, %220 : vector<64x16xi32>
    %c3_i32_112 = arith.constant 3 : i32
    %265 = vector.broadcast %c3_i32_112 : i32 to vector<64x16xi32>
    %266 = arith.addi %264, %265 : vector<64x16xi32>
    %267 = arith.cmpi eq, %219, %266 : vector<64x16xi32>
    %268 = arith.extui %267 : vector<64x16xi1> to vector<64x16xi32>
    %269 = arith.sitofp %268 : vector<64x16xi32> to vector<64x16xf32>
    %270 = arith.truncf %269 : vector<64x16xf32> to vector<64x16xbf16>
    %cst_113 = arith.constant dense<0.000000e+00> : vector<8x16xf32>
    %271 = tpu.matmul %221, %270, %cst_113 {dimension_numbers = #tpu.dot_dimension_numbers<[1], [0], [0], [1], [0, 0, 1, 1], [], []>} : vector<8x64xbf16>, vector<64x16xbf16>, vector<8x16xf32> -> vector<8x16xf32>
    %c3_114 = arith.constant 3 : index
    %c0_115 = arith.constant 0 : index
    %c0_116 = arith.constant 0 : index
    %272 = vector.load %arg9[%c3_114, %c0_115, %c0_116] : memref<4x16x8xbf16, #tpu.memory_space<vmem>>, vector<1x16x8xbf16>
    %273 = vector.shape_cast %272 : vector<1x16x8xbf16> to vector<16x8xbf16>
    %274 = arith.truncf %271 : vector<8x16xf32> to vector<8x16xbf16>
    %cst_117 = arith.constant dense<0.000000e+00> : vector<16x16xf32>
    %275 = tpu.matmul %273, %274, %cst_117 {dimension_numbers = #tpu.dot_dimension_numbers<[1], [0], [0], [1], [0, 0, 1, 1], [], []>} : vector<16x8xbf16>, vector<8x16xbf16>, vector<16x16xf32> -> vector<16x16xf32>
    %276 = arith.addf %262, %275 : vector<16x16xf32>
    %277 = vector.extract_strided_slice %218 {offsets = [0, 0], sizes = [16, 1], strides = [1, 1]} : vector<16x4xf32> to vector<16x1xf32>
    %278 = vector.broadcast %277 : vector<16x1xf32> to vector<16x16xf32>
    %279 = arith.addf %276, %278 : vector<16x16xf32>
    %cst_118 = arith.constant dense<0.000000e+00> : vector<16xf32>
    %280 = vector.multi_reduction <add>, %279, %cst_118 [1] : vector<16x16xf32> to vector<16xf32>
    %281 = vector.shape_cast %280 : vector<16xf32> to vector<16x1xf32>
    %cst_119 = arith.constant 1.600000e+01 : f32
    %282 = vector.broadcast %cst_119 : f32 to vector<16x1xf32>
    %283 = arith.divf %281, %282 : vector<16x1xf32>
    %284 = vector.broadcast %283 : vector<16x1xf32> to vector<16x16xf32>
    %285 = arith.subf %279, %284 : vector<16x16xf32>
    %286 = arith.mulf %285, %285 : vector<16x16xf32>
    %cst_120 = arith.constant dense<0.000000e+00> : vector<16xf32>
    %287 = vector.multi_reduction <add>, %286, %cst_120 [1] : vector<16x16xf32> to vector<16xf32>
    %288 = vector.shape_cast %287 : vector<16xf32> to vector<16x1xf32>
    %cst_121 = arith.constant 1.600000e+01 : f32
    %289 = vector.broadcast %cst_121 : f32 to vector<16x1xf32>
    %290 = arith.divf %288, %289 : vector<16x1xf32>
    %291 = vector.broadcast %283 : vector<16x1xf32> to vector<16x16xf32>
    %292 = arith.subf %279, %291 : vector<16x16xf32>
    %cst_122 = arith.constant 9.99999974E-6 : f32
    %293 = vector.broadcast %cst_122 : f32 to vector<16x1xf32>
    %294 = arith.addf %290, %293 : vector<16x1xf32>
    %295 = math.rsqrt %294 : vector<16x1xf32>
    %296 = vector.broadcast %295 : vector<16x1xf32> to vector<16x16xf32>
    %297 = arith.mulf %292, %296 : vector<16x16xf32>
    %298 = arith.negf %297 : vector<16x16xf32>
    %299 = math.exp %298 : vector<16x16xf32>
    %cst_123 = arith.constant 1.000000e+00 : f32
    %300 = vector.broadcast %cst_123 : f32 to vector<16x16xf32>
    %301 = arith.addf %300, %299 : vector<16x16xf32>
    %302 = arith.divf %300, %301 : vector<16x16xf32>
    %303 = arith.mulf %297, %302 : vector<16x16xf32>
    %c0_124 = arith.constant 0 : index
    %c0_125 = arith.constant 0 : index
    %304 = vector.load %arg10[%c0_124, %c0_125] : memref<16x16xbf16, #tpu.memory_space<vmem>>, vector<16x16xbf16>
    %305 = arith.truncf %303 : vector<16x16xf32> to vector<16x16xbf16>
    %cst_126 = arith.constant dense<0.000000e+00> : vector<16x16xf32>
    %306 = tpu.matmul %304, %305, %cst_126 {dimension_numbers = #tpu.dot_dimension_numbers<[1], [0], [0], [1], [0, 0, 1, 1], [], []>} : vector<16x16xbf16>, vector<16x16xbf16>, vector<16x16xf32> -> vector<16x16xf32>
    %307 = vector.extract_strided_slice %218 {offsets = [0, 1], sizes = [16, 1], strides = [1, 1]} : vector<16x4xf32> to vector<16x1xf32>
    %308 = vector.broadcast %307 : vector<16x1xf32> to vector<16x16xf32>
    %309 = arith.addf %306, %308 : vector<16x16xf32>
    %310 = tpu.iota {dimensions = array<i32: 0>} : vector<16x16xi32>
    %311 = tpu.iota {dimensions = array<i32: 1>} : vector<16x16xi32>
    %c-1_i32_127 = arith.constant -1 : i32
    %312 = vector.broadcast %c-1_i32_127 : i32 to vector<16x16xi32>
    %313 = arith.addi %311, %312 : vector<16x16xi32>
    %314 = arith.cmpi eq, %310, %313 : vector<16x16xi32>
    %315 = arith.extui %314 : vector<16x16xi1> to vector<16x16xi32>
    %316 = arith.sitofp %315 : vector<16x16xi32> to vector<16x16xf32>
    %cst_128 = arith.constant dense<0.000000e+00> : vector<16x16xf32>
    %317 = tpu.matmul %303, %316, %cst_128 {dimension_numbers = #tpu.dot_dimension_numbers<[1], [0], [0], [1], [0, 0, 1, 1], [], []>} : vector<16x16xf32>, vector<16x16xf32>, vector<16x16xf32> -> vector<16x16xf32>
    %318 = arith.truncf %317 : vector<16x16xf32> to vector<16x16xbf16>
    %c0_129 = arith.constant 0 : index
    %c0_130 = arith.constant 0 : index
    %c0_131 = arith.constant 0 : index
    %319 = vector.load %arg11[%c0_129, %c0_130, %c0_131] : memref<3x16x16xbf16, #tpu.memory_space<vmem>>, vector<1x16x16xbf16>
    %320 = vector.shape_cast %319 : vector<1x16x16xbf16> to vector<16x16xbf16>
    %cst_132 = arith.constant dense<0.000000e+00> : vector<16x16xf32>
    %321 = tpu.matmul %320, %318, %cst_132 {dimension_numbers = #tpu.dot_dimension_numbers<[1], [0], [0], [1], [0, 0, 1, 1], [], []>} : vector<16x16xbf16>, vector<16x16xbf16>, vector<16x16xf32> -> vector<16x16xf32>
    %322 = arith.truncf %303 : vector<16x16xf32> to vector<16x16xbf16>
    %c1_133 = arith.constant 1 : index
    %c0_134 = arith.constant 0 : index
    %c0_135 = arith.constant 0 : index
    %323 = vector.load %arg11[%c1_133, %c0_134, %c0_135] : memref<3x16x16xbf16, #tpu.memory_space<vmem>>, vector<1x16x16xbf16>
    %324 = vector.shape_cast %323 : vector<1x16x16xbf16> to vector<16x16xbf16>
    %cst_136 = arith.constant dense<0.000000e+00> : vector<16x16xf32>
    %325 = tpu.matmul %324, %322, %cst_136 {dimension_numbers = #tpu.dot_dimension_numbers<[1], [0], [0], [1], [0, 0, 1, 1], [], []>} : vector<16x16xbf16>, vector<16x16xbf16>, vector<16x16xf32> -> vector<16x16xf32>
    %326 = arith.addf %321, %325 : vector<16x16xf32>
    %327 = tpu.iota {dimensions = array<i32: 0>} : vector<16x16xi32>
    %328 = tpu.iota {dimensions = array<i32: 1>} : vector<16x16xi32>
    %c1_i32_137 = arith.constant 1 : i32
    %329 = vector.broadcast %c1_i32_137 : i32 to vector<16x16xi32>
    %330 = arith.addi %328, %329 : vector<16x16xi32>
    %331 = arith.cmpi eq, %327, %330 : vector<16x16xi32>
    %332 = arith.extui %331 : vector<16x16xi1> to vector<16x16xi32>
    %333 = arith.sitofp %332 : vector<16x16xi32> to vector<16x16xf32>
    %cst_138 = arith.constant dense<0.000000e+00> : vector<16x16xf32>
    %334 = tpu.matmul %303, %333, %cst_138 {dimension_numbers = #tpu.dot_dimension_numbers<[1], [0], [0], [1], [0, 0, 1, 1], [], []>} : vector<16x16xf32>, vector<16x16xf32>, vector<16x16xf32> -> vector<16x16xf32>
    %335 = arith.truncf %334 : vector<16x16xf32> to vector<16x16xbf16>
    %c2_139 = arith.constant 2 : index
    %c0_140 = arith.constant 0 : index
    %c0_141 = arith.constant 0 : index
    %336 = vector.load %arg11[%c2_139, %c0_140, %c0_141] : memref<3x16x16xbf16, #tpu.memory_space<vmem>>, vector<1x16x16xbf16>
    %337 = vector.shape_cast %336 : vector<1x16x16xbf16> to vector<16x16xbf16>
    %cst_142 = arith.constant dense<0.000000e+00> : vector<16x16xf32>
    %338 = tpu.matmul %337, %335, %cst_142 {dimension_numbers = #tpu.dot_dimension_numbers<[1], [0], [0], [1], [0, 0, 1, 1], [], []>} : vector<16x16xbf16>, vector<16x16xbf16>, vector<16x16xf32> -> vector<16x16xf32>
    %339 = arith.addf %326, %338 : vector<16x16xf32>
    %340 = vector.extract_strided_slice %218 {offsets = [0, 2], sizes = [16, 1], strides = [1, 1]} : vector<16x4xf32> to vector<16x1xf32>
    %341 = vector.broadcast %340 : vector<16x1xf32> to vector<16x16xf32>
    %342 = arith.addf %339, %341 : vector<16x16xf32>
    %cst_143 = arith.constant dense<0.000000e+00> : vector<16xf32>
    %343 = vector.multi_reduction <add>, %342, %cst_143 [1] : vector<16x16xf32> to vector<16xf32>
    %344 = vector.shape_cast %343 : vector<16xf32> to vector<16x1xf32>
    %cst_144 = arith.constant 1.600000e+01 : f32
    %345 = vector.broadcast %cst_144 : f32 to vector<16x1xf32>
    %346 = arith.divf %344, %345 : vector<16x1xf32>
    %347 = vector.broadcast %346 : vector<16x1xf32> to vector<16x16xf32>
    %348 = arith.subf %342, %347 : vector<16x16xf32>
    %349 = arith.mulf %348, %348 : vector<16x16xf32>
    %cst_145 = arith.constant dense<0.000000e+00> : vector<16xf32>
    %350 = vector.multi_reduction <add>, %349, %cst_145 [1] : vector<16x16xf32> to vector<16xf32>
    %351 = vector.shape_cast %350 : vector<16xf32> to vector<16x1xf32>
    %cst_146 = arith.constant 1.600000e+01 : f32
    %352 = vector.broadcast %cst_146 : f32 to vector<16x1xf32>
    %353 = arith.divf %351, %352 : vector<16x1xf32>
    %354 = vector.broadcast %346 : vector<16x1xf32> to vector<16x16xf32>
    %355 = arith.subf %342, %354 : vector<16x16xf32>
    %cst_147 = arith.constant 9.99999974E-6 : f32
    %356 = vector.broadcast %cst_147 : f32 to vector<16x1xf32>
    %357 = arith.addf %353, %356 : vector<16x1xf32>
    %358 = math.rsqrt %357 : vector<16x1xf32>
    %359 = vector.broadcast %358 : vector<16x1xf32> to vector<16x16xf32>
    %360 = arith.mulf %355, %359 : vector<16x16xf32>
    %361 = arith.negf %360 : vector<16x16xf32>
    %362 = math.exp %361 : vector<16x16xf32>
    %cst_148 = arith.constant 1.000000e+00 : f32
    %363 = vector.broadcast %cst_148 : f32 to vector<16x16xf32>
    %364 = arith.addf %363, %362 : vector<16x16xf32>
    %365 = arith.divf %363, %364 : vector<16x16xf32>
    %366 = arith.mulf %360, %365 : vector<16x16xf32>
    %367 = tpu.iota {dimensions = array<i32: 0>} : vector<16x16xi32>
    %368 = tpu.iota {dimensions = array<i32: 1>} : vector<16x16xi32>
    %c-1_i32_149 = arith.constant -1 : i32
    %369 = vector.broadcast %c-1_i32_149 : i32 to vector<16x16xi32>
    %370 = arith.addi %368, %369 : vector<16x16xi32>
    %371 = arith.cmpi eq, %367, %370 : vector<16x16xi32>
    %372 = arith.extui %371 : vector<16x16xi1> to vector<16x16xi32>
    %373 = arith.sitofp %372 : vector<16x16xi32> to vector<16x16xf32>
    %cst_150 = arith.constant dense<0.000000e+00> : vector<16x16xf32>
    %374 = tpu.matmul %366, %373, %cst_150 {dimension_numbers = #tpu.dot_dimension_numbers<[1], [0], [0], [1], [0, 0, 1, 1], [], []>} : vector<16x16xf32>, vector<16x16xf32>, vector<16x16xf32> -> vector<16x16xf32>
    %375 = arith.truncf %374 : vector<16x16xf32> to vector<16x16xbf16>
    %c0_151 = arith.constant 0 : index
    %c0_152 = arith.constant 0 : index
    %c0_153 = arith.constant 0 : index
    %376 = vector.load %arg12[%c0_151, %c0_152, %c0_153] : memref<3x16x16xbf16, #tpu.memory_space<vmem>>, vector<1x16x16xbf16>
    %377 = vector.shape_cast %376 : vector<1x16x16xbf16> to vector<16x16xbf16>
    %cst_154 = arith.constant dense<0.000000e+00> : vector<16x16xf32>
    %378 = tpu.matmul %377, %375, %cst_154 {dimension_numbers = #tpu.dot_dimension_numbers<[1], [0], [0], [1], [0, 0, 1, 1], [], []>} : vector<16x16xbf16>, vector<16x16xbf16>, vector<16x16xf32> -> vector<16x16xf32>
    %379 = arith.truncf %366 : vector<16x16xf32> to vector<16x16xbf16>
    %c1_155 = arith.constant 1 : index
    %c0_156 = arith.constant 0 : index
    %c0_157 = arith.constant 0 : index
    %380 = vector.load %arg12[%c1_155, %c0_156, %c0_157] : memref<3x16x16xbf16, #tpu.memory_space<vmem>>, vector<1x16x16xbf16>
    %381 = vector.shape_cast %380 : vector<1x16x16xbf16> to vector<16x16xbf16>
    %cst_158 = arith.constant dense<0.000000e+00> : vector<16x16xf32>
    %382 = tpu.matmul %381, %379, %cst_158 {dimension_numbers = #tpu.dot_dimension_numbers<[1], [0], [0], [1], [0, 0, 1, 1], [], []>} : vector<16x16xbf16>, vector<16x16xbf16>, vector<16x16xf32> -> vector<16x16xf32>
    %383 = arith.addf %378, %382 : vector<16x16xf32>
    %384 = tpu.iota {dimensions = array<i32: 0>} : vector<16x16xi32>
    %385 = tpu.iota {dimensions = array<i32: 1>} : vector<16x16xi32>
    %c1_i32_159 = arith.constant 1 : i32
    %386 = vector.broadcast %c1_i32_159 : i32 to vector<16x16xi32>
    %387 = arith.addi %385, %386 : vector<16x16xi32>
    %388 = arith.cmpi eq, %384, %387 : vector<16x16xi32>
    %389 = arith.extui %388 : vector<16x16xi1> to vector<16x16xi32>
    %390 = arith.sitofp %389 : vector<16x16xi32> to vector<16x16xf32>
    %cst_160 = arith.constant dense<0.000000e+00> : vector<16x16xf32>
    %391 = tpu.matmul %366, %390, %cst_160 {dimension_numbers = #tpu.dot_dimension_numbers<[1], [0], [0], [1], [0, 0, 1, 1], [], []>} : vector<16x16xf32>, vector<16x16xf32>, vector<16x16xf32> -> vector<16x16xf32>
    %392 = arith.truncf %391 : vector<16x16xf32> to vector<16x16xbf16>
    %c2_161 = arith.constant 2 : index
    %c0_162 = arith.constant 0 : index
    %c0_163 = arith.constant 0 : index
    %393 = vector.load %arg12[%c2_161, %c0_162, %c0_163] : memref<3x16x16xbf16, #tpu.memory_space<vmem>>, vector<1x16x16xbf16>
    %394 = vector.shape_cast %393 : vector<1x16x16xbf16> to vector<16x16xbf16>
    %cst_164 = arith.constant dense<0.000000e+00> : vector<16x16xf32>
    %395 = tpu.matmul %394, %392, %cst_164 {dimension_numbers = #tpu.dot_dimension_numbers<[1], [0], [0], [1], [0, 0, 1, 1], [], []>} : vector<16x16xbf16>, vector<16x16xbf16>, vector<16x16xf32> -> vector<16x16xf32>
    %396 = arith.addf %383, %395 : vector<16x16xf32>
    %397 = vector.extract_strided_slice %218 {offsets = [0, 3], sizes = [16, 1], strides = [1, 1]} : vector<16x4xf32> to vector<16x1xf32>
    %398 = vector.broadcast %397 : vector<16x1xf32> to vector<16x16xf32>
    %399 = arith.addf %396, %398 : vector<16x16xf32>
    %400 = arith.addf %309, %399 : vector<16x16xf32>
    %cst_165 = arith.constant dense<0.000000e+00> : vector<16xf32>
    %401 = vector.multi_reduction <add>, %400, %cst_165 [1] : vector<16x16xf32> to vector<16xf32>
    %402 = vector.shape_cast %401 : vector<16xf32> to vector<16x1xf32>
    %cst_166 = arith.constant 1.600000e+01 : f32
    %403 = vector.broadcast %cst_166 : f32 to vector<16x1xf32>
    %404 = arith.divf %402, %403 : vector<16x1xf32>
    %405 = vector.broadcast %404 : vector<16x1xf32> to vector<16x16xf32>
    %406 = arith.subf %400, %405 : vector<16x16xf32>
    %407 = arith.mulf %406, %406 : vector<16x16xf32>
    %cst_167 = arith.constant dense<0.000000e+00> : vector<16xf32>
    %408 = vector.multi_reduction <add>, %407, %cst_167 [1] : vector<16x16xf32> to vector<16xf32>
    %409 = vector.shape_cast %408 : vector<16xf32> to vector<16x1xf32>
    %cst_168 = arith.constant 1.600000e+01 : f32
    %410 = vector.broadcast %cst_168 : f32 to vector<16x1xf32>
    %411 = arith.divf %409, %410 : vector<16x1xf32>
    %412 = vector.broadcast %404 : vector<16x1xf32> to vector<16x16xf32>
    %413 = arith.subf %400, %412 : vector<16x16xf32>
    %cst_169 = arith.constant 9.99999974E-6 : f32
    %414 = vector.broadcast %cst_169 : f32 to vector<16x1xf32>
    %415 = arith.addf %411, %414 : vector<16x1xf32>
    %416 = math.rsqrt %415 : vector<16x1xf32>
    %417 = vector.broadcast %416 : vector<16x1xf32> to vector<16x16xf32>
    %418 = arith.mulf %413, %417 : vector<16x16xf32>
    %419 = arith.negf %418 : vector<16x16xf32>
    %420 = math.exp %419 : vector<16x16xf32>
    %cst_170 = arith.constant 1.000000e+00 : f32
    %421 = vector.broadcast %cst_170 : f32 to vector<16x16xf32>
    %422 = arith.addf %421, %420 : vector<16x16xf32>
    %423 = arith.divf %421, %422 : vector<16x16xf32>
    %424 = arith.mulf %418, %423 : vector<16x16xf32>
    %425 = tpu.iota {dimensions = array<i32: 0>} : vector<16x16xi32>
    %426 = tpu.iota {dimensions = array<i32: 1>} : vector<16x16xi32>
    %c-1_i32_171 = arith.constant -1 : i32
    %427 = vector.broadcast %c-1_i32_171 : i32 to vector<16x16xi32>
    %428 = arith.addi %426, %427 : vector<16x16xi32>
    %429 = arith.cmpi eq, %425, %428 : vector<16x16xi32>
    %430 = arith.extui %429 : vector<16x16xi1> to vector<16x16xi32>
    %431 = arith.sitofp %430 : vector<16x16xi32> to vector<16x16xf32>
    %cst_172 = arith.constant dense<0.000000e+00> : vector<16x16xf32>
    %432 = tpu.matmul %424, %431, %cst_172 {dimension_numbers = #tpu.dot_dimension_numbers<[1], [0], [0], [1], [0, 0, 1, 1], [], []>} : vector<16x16xf32>, vector<16x16xf32>, vector<16x16xf32> -> vector<16x16xf32>
    %433 = arith.truncf %432 : vector<16x16xf32> to vector<16x16xbf16>
    %c0_173 = arith.constant 0 : index
    %c0_174 = arith.constant 0 : index
    %c0_175 = arith.constant 0 : index
    %434 = vector.load %arg14[%c0_173, %c0_174, %c0_175] : memref<3x16x16xbf16, #tpu.memory_space<vmem>>, vector<1x16x16xbf16>
    %435 = vector.shape_cast %434 : vector<1x16x16xbf16> to vector<16x16xbf16>
    %cst_176 = arith.constant dense<0.000000e+00> : vector<16x16xf32>
    %436 = tpu.matmul %435, %433, %cst_176 {dimension_numbers = #tpu.dot_dimension_numbers<[1], [0], [0], [1], [0, 0, 1, 1], [], []>} : vector<16x16xbf16>, vector<16x16xbf16>, vector<16x16xf32> -> vector<16x16xf32>
    %437 = arith.truncf %424 : vector<16x16xf32> to vector<16x16xbf16>
    %c1_177 = arith.constant 1 : index
    %c0_178 = arith.constant 0 : index
    %c0_179 = arith.constant 0 : index
    %438 = vector.load %arg14[%c1_177, %c0_178, %c0_179] : memref<3x16x16xbf16, #tpu.memory_space<vmem>>, vector<1x16x16xbf16>
    %439 = vector.shape_cast %438 : vector<1x16x16xbf16> to vector<16x16xbf16>
    %cst_180 = arith.constant dense<0.000000e+00> : vector<16x16xf32>
    %440 = tpu.matmul %439, %437, %cst_180 {dimension_numbers = #tpu.dot_dimension_numbers<[1], [0], [0], [1], [0, 0, 1, 1], [], []>} : vector<16x16xbf16>, vector<16x16xbf16>, vector<16x16xf32> -> vector<16x16xf32>
    %441 = arith.addf %436, %440 : vector<16x16xf32>
    %442 = tpu.iota {dimensions = array<i32: 0>} : vector<16x16xi32>
    %443 = tpu.iota {dimensions = array<i32: 1>} : vector<16x16xi32>
    %c1_i32_181 = arith.constant 1 : i32
    %444 = vector.broadcast %c1_i32_181 : i32 to vector<16x16xi32>
    %445 = arith.addi %443, %444 : vector<16x16xi32>
    %446 = arith.cmpi eq, %442, %445 : vector<16x16xi32>
    %447 = arith.extui %446 : vector<16x16xi1> to vector<16x16xi32>
    %448 = arith.sitofp %447 : vector<16x16xi32> to vector<16x16xf32>
    %cst_182 = arith.constant dense<0.000000e+00> : vector<16x16xf32>
    %449 = tpu.matmul %424, %448, %cst_182 {dimension_numbers = #tpu.dot_dimension_numbers<[1], [0], [0], [1], [0, 0, 1, 1], [], []>} : vector<16x16xf32>, vector<16x16xf32>, vector<16x16xf32> -> vector<16x16xf32>
    %450 = arith.truncf %449 : vector<16x16xf32> to vector<16x16xbf16>
    %c2_183 = arith.constant 2 : index
    %c0_184 = arith.constant 0 : index
    %c0_185 = arith.constant 0 : index
    %451 = vector.load %arg14[%c2_183, %c0_184, %c0_185] : memref<3x16x16xbf16, #tpu.memory_space<vmem>>, vector<1x16x16xbf16>
    %452 = vector.shape_cast %451 : vector<1x16x16xbf16> to vector<16x16xbf16>
    %cst_186 = arith.constant dense<0.000000e+00> : vector<16x16xf32>
    %453 = tpu.matmul %452, %450, %cst_186 {dimension_numbers = #tpu.dot_dimension_numbers<[1], [0], [0], [1], [0, 0, 1, 1], [], []>} : vector<16x16xbf16>, vector<16x16xbf16>, vector<16x16xf32> -> vector<16x16xf32>
    %454 = arith.addf %441, %453 : vector<16x16xf32>
    %c0_187 = arith.constant 0 : index
    %c0_188 = arith.constant 0 : index
    %455 = vector.load %arg15[%c0_187, %c0_188] : memref<16x1xf32, #tpu.memory_space<vmem>>, vector<16x1xf32>
    %456 = vector.broadcast %455 : vector<16x1xf32> to vector<16x16xf32>
    %457 = arith.addf %454, %456 : vector<16x16xf32>
    %458 = arith.negf %457 : vector<16x16xf32>
    %459 = math.exp %458 : vector<16x16xf32>
    %cst_189 = arith.constant 1.000000e+00 : f32
    %460 = vector.broadcast %cst_189 : f32 to vector<16x16xf32>
    %461 = arith.addf %460, %459 : vector<16x16xf32>
    %462 = arith.divf %460, %461 : vector<16x16xf32>
    %c0_190 = arith.constant 0 : index
    %c0_191 = arith.constant 0 : index
    %c0_192 = arith.constant 0 : index
    %463 = vector.load %arg16[%c0_190, %c0_191, %c0_192] : memref<1x16x16xf32, #tpu.memory_space<vmem>>, vector<1x16x16xf32>
    %464 = vector.shape_cast %463 : vector<1x16x16xf32> to vector<16x16xf32>
    %465 = vector.shape_cast %462 : vector<16x16xf32> to vector<1x16x16xf32>
    tpu.vector_store %arg16[%c0_190, %c0_191, %c0_192], %465 {strides = array<i32>} : memref<1x16x16xf32, #tpu.memory_space<vmem>>, vector<1x16x16xf32>,
    return
  }
  func.func @transform_0(%arg0: i32) -> (i32, i32, i32) {
    %c0_i32 = arith.constant 0 : i32
    %c0_i32_0 = arith.constant 0 : i32
    %c0_i32_1 = arith.constant 0 : i32
    return %arg0, %c0_i32, %c0_i32_0 : i32, i32, i32
  }
  func.func @transform_1(%arg0: i32) -> (i32, i32, i32) {
    %c0_i32 = arith.constant 0 : i32
    %c0_i32_0 = arith.constant 0 : i32
    %c0_i32_1 = arith.constant 0 : i32
    %c0_i32_2 = arith.constant 0 : i32
    return %c0_i32, %c0_i32_0, %c0_i32_1 : i32, i32, i32
  }
  func.func @transform_2(%arg0: i32) -> (i32, i32) {
    %c0_i32 = arith.constant 0 : i32
    %c0_i32_0 = arith.constant 0 : i32
    %c0_i32_1 = arith.constant 0 : i32
    return %c0_i32, %c0_i32_0 : i32, i32
  }
  func.func @transform_3(%arg0: i32) -> (i32, i32, i32) {
    %c0_i32 = arith.constant 0 : i32
    %c0_i32_0 = arith.constant 0 : i32
    %c0_i32_1 = arith.constant 0 : i32
    %c0_i32_2 = arith.constant 0 : i32
    return %c0_i32, %c0_i32_0, %c0_i32_1 : i32, i32, i32
  }
  func.func @transform_4(%arg0: i32) -> (i32, i32) {
    %c0_i32 = arith.constant 0 : i32
    %c0_i32_0 = arith.constant 0 : i32
    %c0_i32_1 = arith.constant 0 : i32
    return %c0_i32, %c0_i32_0 : i32, i32
  }
  func.func @transform_5(%arg0: i32) -> (i32, i32, i32) {
    %c0_i32 = arith.constant 0 : i32
    %c0_i32_0 = arith.constant 0 : i32
    %c0_i32_1 = arith.constant 0 : i32
    %c0_i32_2 = arith.constant 0 : i32
    return %c0_i32, %c0_i32_0, %c0_i32_1 : i32, i32, i32
  }
  func.func @transform_6(%arg0: i32) -> (i32, i32, i32) {
    %c0_i32 = arith.constant 0 : i32
    %c0_i32_0 = arith.constant 0 : i32
    %c0_i32_1 = arith.constant 0 : i32
    %c0_i32_2 = arith.constant 0 : i32
    return %c0_i32, %c0_i32_0, %c0_i32_1 : i32, i32, i32
  }
  func.func @transform_7(%arg0: i32) -> (i32, i32) {
    %c0_i32 = arith.constant 0 : i32
    %c0_i32_0 = arith.constant 0 : i32
    %c0_i32_1 = arith.constant 0 : i32
    return %c0_i32, %c0_i32_0 : i32, i32
  }
  func.func @transform_8(%arg0: i32) -> (i32, i32, i32) {
    %c0_i32 = arith.constant 0 : i32
    %c0_i32_0 = arith.constant 0 : i32
    %c0_i32_1 = arith.constant 0 : i32
    %c0_i32_2 = arith.constant 0 : i32
    return %c0_i32, %c0_i32_0, %c0_i32_1 : i32, i32, i32
  }
  func.func @transform_9(%arg0: i32) -> (i32, i32) {
    %c0_i32 = arith.constant 0 : i32
    %c0_i32_0 = arith.constant 0 : i32
    %c0_i32_1 = arith.constant 0 : i32
    return %c0_i32, %c0_i32_0 : i32, i32
  }
  func.func @transform_10(%arg0: i32) -> (i32, i32, i32) {
    %c0_i32 = arith.constant 0 : i32
    %c0_i32_0 = arith.constant 0 : i32
    %c0_i32_1 = arith.constant 0 : i32
    %c0_i32_2 = arith.constant 0 : i32
    return %c0_i32, %c0_i32_0, %c0_i32_1 : i32, i32, i32
  }
  func.func @transform_11(%arg0: i32) -> (i32, i32, i32) {
    %c0_i32 = arith.constant 0 : i32
    %c0_i32_0 = arith.constant 0 : i32
    %c0_i32_1 = arith.constant 0 : i32
    %c0_i32_2 = arith.constant 0 : i32
    return %c0_i32, %c0_i32_0, %c0_i32_1 : i32, i32, i32
  }
  func.func @transform_12(%arg0: i32) -> (i32, i32) {
    %c0_i32 = arith.constant 0 : i32
    %c0_i32_0 = arith.constant 0 : i32
    %c0_i32_1 = arith.constant 0 : i32
    return %c0_i32, %c0_i32_0 : i32, i32
  }
  func.func @transform_13(%arg0: i32) -> (i32, i32, i32) {
    %c0_i32 = arith.constant 0 : i32
    %c0_i32_0 = arith.constant 0 : i32
    %c0_i32_1 = arith.constant 0 : i32
    %c0_i32_2 = arith.constant 0 : i32
    return %c0_i32, %c0_i32_0, %c0_i32_1 : i32, i32, i32
  }
  func.func @transform_14(%arg0: i32) -> (i32, i32) {
    %c0_i32 = arith.constant 0 : i32
    %c0_i32_0 = arith.constant 0 : i32
    %c0_i32_1 = arith.constant 0 : i32
    return %c0_i32, %c0_i32_0 : i32, i32
  }
  func.func @transform_15(%arg0: i32) -> (i32, i32, i32) {
    %c0_i32 = arith.constant 0 : i32
    %c0_i32_0 = arith.constant 0 : i32
    %c0_i32_1 = arith.constant 0 : i32
    return %arg0, %c0_i32, %c0_i32_0 : i32, i32, i32
  }
}

</mosaic_0001>

<llo_original>
// kernel: tpu_custom_call.1
$region0: #{tpu_custom_call.1}
  #allocation0 [shape = 'u32[]', space=smem, size = 0x4, offset = 0x4, fixed_abs, tag = 'smem constant byte address 0x4 - core index']
  #allocation1 [shape = 'u32[72,128]{1,0:T(1,128)}', space=vmem, size = 0x9000, scoped, tag = 'internal scratch']
  %s0 = inlined_call_operand.vmem [shape: f32[2,2,256], index: 0, kind: input, shape index: {}]
  %s1 = inlined_call_operand.vmem [shape: bf16[3,4,2], index: 1, kind: input, shape index: {}]
  %s2 = inlined_call_operand.vmem [shape: f32[4,1], index: 2, kind: input, shape index: {}]
  %s3 = inlined_call_operand.vmem [shape: bf16[4,8,4], index: 3, kind: input, shape index: {}]
  %s4 = inlined_call_operand.vmem [shape: bf16[8,8], index: 4, kind: input, shape index: {}]
  %s5 = inlined_call_operand.vmem [shape: bf16[3,8,8], index: 5, kind: input, shape index: {}]
  %s6 = inlined_call_operand.hbm [shape: bf16[3,8,8], index: 6, kind: input, shape index: {}]
  %s7 = inlined_call_operand.vmem [shape: f32[8,4], index: 7, kind: input, shape index: {}]
  %s8 = inlined_call_operand.vmem [shape: bf16[4,16,8], index: 8, kind: input, shape index: {}]
  %s9 = inlined_call_operand.hbm [shape: bf16[16,16], index: 9, kind: input, shape index: {}]
  %s10 = inlined_call_operand.vmem [shape: bf16[3,16,16], index: 10, kind: input, shape index: {}]
  %s11 = inlined_call_operand.vmem [shape: bf16[3,16,16], index: 11, kind: input, shape index: {}]
  %s12 = inlined_call_operand.vmem [shape: f32[16,4], index: 12, kind: input, shape index: {}]
  %s13 = inlined_call_operand.vmem [shape: bf16[3,16,16], index: 13, kind: input, shape index: {}]
  %s14 = inlined_call_operand.vmem [shape: f32[16,1], index: 14, kind: input, shape index: {}]
  %s15 = inlined_call_operand.hbm [shape: f32[2,16,16], index: 15, kind: output, shape index: {}]
  %s16 = sld [smem:[#allocation0]]
  $region101: #{tpu_custom_call.1} parent=0
    _
  %s18 = ssub.s32 1, %s16
  %s19 = scalar_select 0, %s18, %s16
  $region1: #{tpu_custom_call.1} parent=0
    #allocation2 [shape = 'u8[6144]{0}', space=vmem, size = 0x1800, scoped, tag = 'input window, operand 6, single buffered']
    #allocation3 [shape = 's32[2]{0}', space=sflag, size = 0x8, scoped, tag = 'scoped memory for tpu_custom_call.1']
    #allocation4 [shape = 's32[2]{0}', space=sflag, size = 0x8, scoped, tag = 'scoped memory for tpu_custom_call.1']
    #allocation5 [shape = 'u8[4096]{0}', space=vmem, size = 0x1000, scoped, tag = 'input window, operand 9, single buffered']
    #allocation6 [shape = 's32[1]{0}', space=sflag, size = 0x4, scoped, tag = 'scoped memory for tpu_custom_call.1']
    #allocation7 [shape = 'u8[16384]{0}', space=vmem, size = 0x4000, scoped, tag = 'output window, operand 0']
    %20 = vsyncpa [#allocation3], 0
    %21 = vsyncpa [#allocation6], 0
    %22 = vsyncpa [#allocation4], 0
    %s23 = scalar_lea.sflag [#allocation4], 1
    %24 = vsyncpa %s23, 0
    loop: start=0, step=1, limit=4
    $region2: #{tpu_custom_call.1} parent=1 // loop_pre_header
      _
    $region3: #{tpu_custom_call.1} parent=1 // loop_header
      %s26 = sphi 0, %s30
      %p27 = scmp.ge.s32.totalorder %s26, 4
      %s36 = sphi 0, %s38
      %s39 = sphi 0, %s36
      %s40 = sphi 0, %s39
      %s56 = sphi 0, %s40
      %s60 = sphi 0, %s60
      %s62 = sphi 0, %s60
      %s63 = sphi 0, %s62
      %s77 = sphi 0, %s63
      %s81 = sphi 0, %s81
      %s83 = sphi 0, %s81
      %s84 = sphi 0, %s83
      %s98 = sphi 0, %s84
      %s102 = sphi 0, %s102
      %s104 = sphi 0, %s102
      %s105 = sphi 0, %s104
      %s119 = sphi 0, %s105
      %s123 = sphi 0, %s123
      %s125 = sphi 0, %s123
      %s126 = sphi 0, %s125
      %s140 = sphi 0, %s126
      %s144 = sphi 0, %s144
      %s146 = sphi 0, %s144
      %s147 = sphi 0, %s146
      %s161 = sphi 0, %s147
      %s165 = sphi 0, %s165
      %s167 = sphi 0, %s165
      %s168 = sphi 0, %s167
      %s182 = sphi 0, %s168
      %s186 = sphi 0, %s186
      %s188 = sphi 0, %s186
      %s189 = sphi 0, %s188
      %s203 = sphi 0, %s189
      %s207 = sphi 0, %s207
      %s209 = sphi 0, %s207
      %s210 = sphi 0, %s209
      %s224 = sphi 0, %s210
      %s228 = sphi 0, %s228
      %s230 = sphi 0, %s228
      %s231 = sphi 0, %s230
      %s245 = sphi 0, %s231
      %s249 = sphi 0, %s249
      %s251 = sphi 0, %s249
      %s252 = sphi 0, %s251
      %s266 = sphi 0, %s252
      %s270 = sphi 0, %s270
      %s272 = sphi 0, %s270
      %s273 = sphi 0, %s272
      %s287 = sphi 0, %s273
      %s291 = sphi 0, %s291
      %s293 = sphi 0, %s291
      %s294 = sphi 0, %s293
      %s308 = sphi 0, %s294
      %s312 = sphi 0, %s312
      %s314 = sphi 0, %s312
      %s315 = sphi 0, %s314
      %s329 = sphi 0, %s315
      %s333 = sphi 0, %s333
      %s335 = sphi 0, %s333
      %s336 = sphi 0, %s335
      %s350 = sphi 0, %s336
      %s356 = sphi 0, %s358
      %s359 = sphi 0, %s356
      %s360 = sphi 0, %s359
      %s376 = sphi 0, %s360
    $region4: #{tpu_custom_call.1} parent=1 // loop_header_branch
      %29 = sbr.rel (%p27) target = $region8
    $region5: #{tpu_custom_call.1} parent=1 // loop_body
      %s31 = ssub.s32 %s26, 1
      %s32 = ssub.s32 %s26, 2
      %s33 = sadd.s32 %s26, 1
      %s34 = ssub.s32 %s26, %s33
      %p35 = scmp.eq.s32.totalorder %s34, 0
      %s37 = sadd.s32 %s36, 1
      %s38 = scalar_select %p35, %s36, %s37
      %p41 = pneg %p35
      %p42 = scmp.eq.s32.totalorder %s26, 1
      %p43 = por %p41, %p42
      %p44 = scmp.ne.s32.totalorder %s36, %s39
      %p45 = scmp.eq.s32.totalorder %s26, 0
      %p46 = por %p44, %p45
      %p47 = scmp.ne.s32.totalorder %s36, %s39
      %p48 = scmp.eq.s32.totalorder %s31, 1
      %p49 = por %p47, %p48
      %p50 = scmp.ne.s32.totalorder %s39, %s40
      %p51 = scmp.eq.s32.totalorder %s31, 0
      %p52 = por %p50, %p51
      %p53 = scmp.ne.s32.totalorder %s39, %s40
      %p54 = scmp.eq.s32.totalorder %s32, 1
      %p55 = por %p53, %p54
      %p57 = scmp.ne.s32.totalorder %s40, %s56
      %p58 = scmp.eq.s32.totalorder %s32, 0
      %p59 = por %p57, %p58
      %s61 = sadd.s32 %s60, 1
      %p64 = scmp.eq.s32.totalorder %s26, 1
      %p65 = scmp.ne.s32.totalorder %s60, %s62
      %p66 = scmp.eq.s32.totalorder %s26, 0
      %p67 = por %p65, %p66
      %p68 = scmp.ne.s32.totalorder %s60, %s62
      %p69 = scmp.eq.s32.totalorder %s31, 1
      %p70 = por %p68, %p69
      %p71 = scmp.ne.s32.totalorder %s62, %s63
      %p72 = scmp.eq.s32.totalorder %s31, 0
      %p73 = por %p71, %p72
      %p74 = scmp.ne.s32.totalorder %s62, %s63
      %p75 = scmp.eq.s32.totalorder %s32, 1
      %p76 = por %p74, %p75
      %p78 = scmp.ne.s32.totalorder %s63, %s77
      %p79 = scmp.eq.s32.totalorder %s32, 0
      %p80 = por %p78, %p79
      %s82 = sadd.s32 %s81, 1
      %p85 = scmp.eq.s32.totalorder %s26, 1
      %p86 = scmp.ne.s32.totalorder %s81, %s83
      %p87 = scmp.eq.s32.totalorder %s26, 0
      %p88 = por %p86, %p87
      %p89 = scmp.ne.s32.totalorder %s81, %s83
      %p90 = scmp.eq.s32.totalorder %s31, 1
      %p91 = por %p89, %p90
      %p92 = scmp.ne.s32.totalorder %s83, %s84
      %p93 = scmp.eq.s32.totalorder %s31, 0
      %p94 = por %p92, %p93
      %p95 = scmp.ne.s32.totalorder %s83, %s84
      %p96 = scmp.eq.s32.totalorder %s32, 1
      %p97 = por %p95, %p96
      %p99 = scmp.ne.s32.totalorder %s84, %s98
      %p100 = scmp.eq.s32.totalorder %s32, 0
      %p101 = por %p99, %p100
      %s103 = sadd.s32 %s102, 1
      %p106 = scmp.eq.s32.totalorder %s26, 1
      %p107 = scmp.ne.s32.totalorder %s102, %s104
      %p108 = scmp.eq.s32.totalorder %s26, 0
      %p109 = por %p107, %p108
      %p110 = scmp.ne.s32.totalorder %s102, %s104
      %p111 = scmp.eq.s32.totalorder %s31, 1
      %p112 = por %p110, %p111
      %p113 = scmp.ne.s32.totalorder %s104, %s105
      %p114 = scmp.eq.s32.totalorder %s31, 0
      %p115 = por %p113, %p114
      %p116 = scmp.ne.s32.totalorder %s104, %s105
      %p117 = scmp.eq.s32.totalorder %s32, 1
      %p118 = por %p116, %p117
      %p120 = scmp.ne.s32.totalorder %s105, %s119
      %p121 = scmp.eq.s32.totalorder %s32, 0
      %p122 = por %p120, %p121
      %s124 = sadd.s32 %s123, 1
      %p127 = scmp.eq.s32.totalorder %s26, 1
      %p128 = scmp.ne.s32.totalorder %s123, %s125
      %p129 = scmp.eq.s32.totalorder %s26, 0
      %p130 = por %p128, %p129
      %p131 = scmp.ne.s32.totalorder %s123, %s125
      %p132 = scmp.eq.s32.totalorder %s31, 1
      %p133 = por %p131, %p132
      %p134 = scmp.ne.s32.totalorder %s125, %s126
      %p135 = scmp.eq.s32.totalorder %s31, 0
      %p136 = por %p134, %p135
      %p137 = scmp.ne.s32.totalorder %s125, %s126
      %p138 = scmp.eq.s32.totalorder %s32, 1
      %p139 = por %p137, %p138
      %p141 = scmp.ne.s32.totalorder %s126, %s140
      %p142 = scmp.eq.s32.totalorder %s32, 0
      %p143 = por %p141, %p142
      %s145 = sadd.s32 %s144, 1
      %p148 = scmp.eq.s32.totalorder %s26, 1
      %p149 = scmp.ne.s32.totalorder %s144, %s146
      %p150 = scmp.eq.s32.totalorder %s26, 0
      %p151 = por %p149, %p150
      %p152 = scmp.ne.s32.totalorder %s144, %s146
      %p153 = scmp.eq.s32.totalorder %s31, 1
      %p154 = por %p152, %p153
      %p155 = scmp.ne.s32.totalorder %s146, %s147
      %p156 = scmp.eq.s32.totalorder %s31, 0
      %p157 = por %p155, %p156
      %p158 = scmp.ne.s32.totalorder %s146, %s147
      %p159 = scmp.eq.s32.totalorder %s32, 1
      %p160 = por %p158, %p159
      %p162 = scmp.ne.s32.totalorder %s147, %s161
      %p163 = scmp.eq.s32.totalorder %s32, 0
      %p164 = por %p162, %p163
      %s166 = sadd.s32 %s165, 1
      %p169 = scmp.eq.s32.totalorder %s26, 1
      %p170 = scmp.ne.s32.totalorder %s165, %s167
      %p171 = scmp.eq.s32.totalorder %s26, 0
      %p172 = por %p170, %p171
      %p173 = scmp.ne.s32.totalorder %s165, %s167
      %p174 = scmp.eq.s32.totalorder %s31, 1
      %p175 = por %p173, %p174
      %p176 = scmp.ne.s32.totalorder %s167, %s168
      %p177 = scmp.eq.s32.totalorder %s31, 0
      %p178 = por %p176, %p177
      %p179 = scmp.ne.s32.totalorder %s167, %s168
      %p180 = scmp.eq.s32.totalorder %s32, 1
      %p181 = por %p179, %p180
      %p183 = scmp.ne.s32.totalorder %s168, %s182
      %p184 = scmp.eq.s32.totalorder %s32, 0
      %p185 = por %p183, %p184
      %s187 = sadd.s32 %s186, 1
      %p190 = scmp.eq.s32.totalorder %s26, 1
      %p191 = scmp.ne.s32.totalorder %s186, %s188
      %p192 = scmp.eq.s32.totalorder %s26, 0
      %p193 = por %p191, %p192
      %p194 = scmp.ne.s32.totalorder %s186, %s188
      %p195 = scmp.eq.s32.totalorder %s31, 1
      %p196 = por %p194, %p195
      %p197 = scmp.ne.s32.totalorder %s188, %s189
      %p198 = scmp.eq.s32.totalorder %s31, 0
      %p199 = por %p197, %p198
      %p200 = scmp.ne.s32.totalorder %s188, %s189
      %p201 = scmp.eq.s32.totalorder %s32, 1
      %p202 = por %p200, %p201
      %p204 = scmp.ne.s32.totalorder %s189, %s203
      %p205 = scmp.eq.s32.totalorder %s32, 0
      %p206 = por %p204, %p205
      %s208 = sadd.s32 %s207, 1
      %p211 = scmp.eq.s32.totalorder %s26, 1
      %p212 = scmp.ne.s32.totalorder %s207, %s209
      %p213 = scmp.eq.s32.totalorder %s26, 0
      %p214 = por %p212, %p213
      %p215 = scmp.ne.s32.totalorder %s207, %s209
      %p216 = scmp.eq.s32.totalorder %s31, 1
      %p217 = por %p215, %p216
      %p218 = scmp.ne.s32.totalorder %s209, %s210
      %p219 = scmp.eq.s32.totalorder %s31, 0
      %p220 = por %p218, %p219
      %p221 = scmp.ne.s32.totalorder %s209, %s210
      %p222 = scmp.eq.s32.totalorder %s32, 1
      %p223 = por %p221, %p222
      %p225 = scmp.ne.s32.totalorder %s210, %s224
      %p226 = scmp.eq.s32.totalorder %s32, 0
      %p227 = por %p225, %p226
      %s229 = sadd.s32 %s228, 1
      %p232 = scmp.eq.s32.totalorder %s26, 1
      %p233 = scmp.ne.s32.totalorder %s228, %s230
      %p234 = scmp.eq.s32.totalorder %s26, 0
      %p235 = por %p233, %p234
      %p236 = scmp.ne.s32.totalorder %s228, %s230
      %p237 = scmp.eq.s32.totalorder %s31, 1
      %p238 = por %p236, %p237
      %p239 = scmp.ne.s32.totalorder %s230, %s231
      %p240 = scmp.eq.s32.totalorder %s31, 0
      %p241 = por %p239, %p240
      %p242 = scmp.ne.s32.totalorder %s230, %s231
      %p243 = scmp.eq.s32.totalorder %s32, 1
      %p244 = por %p242, %p243
      %p246 = scmp.ne.s32.totalorder %s231, %s245
      %p247 = scmp.eq.s32.totalorder %s32, 0
      %p248 = por %p246, %p247
      %s250 = sadd.s32 %s249, 1
      %p253 = scmp.eq.s32.totalorder %s26, 1
      %p254 = scmp.ne.s32.totalorder %s249, %s251
      %p255 = scmp.eq.s32.totalorder %s26, 0
      %p256 = por %p254, %p255
      %p257 = scmp.ne.s32.totalorder %s249, %s251
      %p258 = scmp.eq.s32.totalorder %s31, 1
      %p259 = por %p257, %p258
      %p260 = scmp.ne.s32.totalorder %s251, %s252
      %p261 = scmp.eq.s32.totalorder %s31, 0
      %p262 = por %p260, %p261
      %p263 = scmp.ne.s32.totalorder %s251, %s252
      %p264 = scmp.eq.s32.totalorder %s32, 1
      %p265 = por %p263, %p264
      %p267 = scmp.ne.s32.totalorder %s252, %s266
      %p268 = scmp.eq.s32.totalorder %s32, 0
      %p269 = por %p267, %p268
      %s271 = sadd.s32 %s270, 1
      %p274 = scmp.eq.s32.totalorder %s26, 1
      %p275 = scmp.ne.s32.totalorder %s270, %s272
      %p276 = scmp.eq.s32.totalorder %s26, 0
      %p277 = por %p275, %p276
      %p278 = scmp.ne.s32.totalorder %s270, %s272
      %p279 = scmp.eq.s32.totalorder %s31, 1
      %p280 = por %p278, %p279
      %p281 = scmp.ne.s32.totalorder %s272, %s273
      %p282 = scmp.eq.s32.totalorder %s31, 0
      %p283 = por %p281, %p282
      %p284 = scmp.ne.s32.totalorder %s272, %s273
      %p285 = scmp.eq.s32.totalorder %s32, 1
      %p286 = por %p284, %p285
      %p288 = scmp.ne.s32.totalorder %s273, %s287
      %p289 = scmp.eq.s32.totalorder %s32, 0
      %p290 = por %p288, %p289
      %s292 = sadd.s32 %s291, 1
      %p295 = scmp.eq.s32.totalorder %s26, 1
      %p296 = scmp.ne.s32.totalorder %s291, %s293
      %p297 = scmp.eq.s32.totalorder %s26, 0
      %p298 = por %p296, %p297
      %p299 = scmp.ne.s32.totalorder %s291, %s293
      %p300 = scmp.eq.s32.totalorder %s31, 1
      %p301 = por %p299, %p300
      %p302 = scmp.ne.s32.totalorder %s293, %s294
      %p303 = scmp.eq.s32.totalorder %s31, 0
      %p304 = por %p302, %p303
      %p305 = scmp.ne.s32.totalorder %s293, %s294
      %p306 = scmp.eq.s32.totalorder %s32, 1
      %p307 = por %p305, %p306
      %p309 = scmp.ne.s32.totalorder %s294, %s308
      %p310 = scmp.eq.s32.totalorder %s32, 0
      %p311 = por %p309, %p310
      %s313 = sadd.s32 %s312, 1
      %p316 = scmp.eq.s32.totalorder %s26, 1
      %p317 = scmp.ne.s32.totalorder %s312, %s314
      %p318 = scmp.eq.s32.totalorder %s26, 0
      %p319 = por %p317, %p318
      %p320 = scmp.ne.s32.totalorder %s312, %s314
      %p321 = scmp.eq.s32.totalorder %s31, 1
      %p322 = por %p320, %p321
      %p323 = scmp.ne.s32.totalorder %s314, %s315
      %p324 = scmp.eq.s32.totalorder %s31, 0
      %p325 = por %p323, %p324
      %p326 = scmp.ne.s32.totalorder %s314, %s315
      %p327 = scmp.eq.s32.totalorder %s32, 1
      %p328 = por %p326, %p327
      %p330 = scmp.ne.s32.totalorder %s315, %s329
      %p331 = scmp.eq.s32.totalorder %s32, 0
      %p332 = por %p330, %p331
      %s334 = sadd.s32 %s333, 1
      %p337 = scmp.eq.s32.totalorder %s26, 1
      %p338 = scmp.ne.s32.totalorder %s333, %s335
      %p339 = scmp.eq.s32.totalorder %s26, 0
      %p340 = por %p338, %p339
      %p341 = scmp.ne.s32.totalorder %s333, %s335
      %p342 = scmp.eq.s32.totalorder %s31, 1
      %p343 = por %p341, %p342
      %p344 = scmp.ne.s32.totalorder %s335, %s336
      %p345 = scmp.eq.s32.totalorder %s31, 0
      %p346 = por %p344, %p345
      %p347 = scmp.ne.s32.totalorder %s335, %s336
      %p348 = scmp.eq.s32.totalorder %s32, 1
      %p349 = por %p347, %p348
      %p351 = scmp.ne.s32.totalorder %s336, %s350
      %p352 = scmp.eq.s32.totalorder %s32, 0
      %p353 = por %p351, %p352
      %s354 = ssub.s32 %s26, %s33
      %p355 = scmp.eq.s32.totalorder %s354, 0
      %s357 = sadd.s32 %s356, 1
      %s358 = scalar_select %p355, %s356, %s357
      %p361 = pneg %p355
      %p362 = scmp.eq.s32.totalorder %s26, 1
      %p363 = por %p361, %p362
      %p364 = scmp.ne.s32.totalorder %s356, %s359
      %p365 = scmp.eq.s32.totalorder %s26, 0
      %p366 = por %p364, %p365
      %p367 = scmp.ne.s32.totalorder %s356, %s359
      %p368 = scmp.eq.s32.totalorder %s31, 1
      %p369 = por %p367, %p368
      %p370 = scmp.ne.s32.totalorder %s359, %s360
      %p371 = scmp.eq.s32.totalorder %s31, 0
      %p372 = por %p370, %p371
      %p373 = scmp.ne.s32.totalorder %s359, %s360
      %p374 = scmp.eq.s32.totalorder %s32, 1
      %p375 = por %p373, %p374
      %p377 = scmp.ne.s32.totalorder %s360, %s376
      %p378 = scmp.eq.s32.totalorder %s32, 0
      %p379 = por %p377, %p378
      %p380 = scmp.le.s32.totalorder 1, %s26
      %p381 = scmp.lt.s32.totalorder %s26, 3
      %p382 = pnand %p380, %p381
      %p383 = pneg %p382
      // Predicated region
      $region9: #{tpu_custom_call.1} parent=5 // pred_check
        _
      $region10: #{tpu_custom_call.1} parent=5 // pred_check_branch
        %385 = sbr.rel (%p382) target = $region12
      $region11: #{tpu_custom_call.1} parent=5 // pred_region
        %s386 = ssub.s32 %s26, 1
        // Predicated region
        $region13: #{tpu_custom_call.1} parent=11 // pred_check
          %p387 = pneg %p73
        $region14: #{tpu_custom_call.1} parent=11 // pred_check_branch
          %389 = sbr.rel (%p387) target = $region16
        $region15: #{tpu_custom_call.1} parent=11 // pred_region
          _
        $region16: #{tpu_custom_call.1} parent=11 // pred_fallthru
          _
        // Predicated region
        $region17: #{tpu_custom_call.1} parent=11 // pred_check
          %p390 = pneg %p94
        $region18: #{tpu_custom_call.1} parent=11 // pred_check_branch
          %392 = sbr.rel (%p390) target = $region20
        $region19: #{tpu_custom_call.1} parent=11 // pred_region
          _
        $region20: #{tpu_custom_call.1} parent=11 // pred_fallthru
          _
        // Predicated region
        $region21: #{tpu_custom_call.1} parent=11 // pred_check
          %p393 = pneg %p115
        $region22: #{tpu_custom_call.1} parent=11 // pred_check_branch
          %395 = sbr.rel (%p393) target = $region24
        $region23: #{tpu_custom_call.1} parent=11 // pred_region
          _
        $region24: #{tpu_custom_call.1} parent=11 // pred_fallthru
          _
        // Predicated region
        $region25: #{tpu_custom_call.1} parent=11 // pred_check
          %p396 = pneg %p136
        $region26: #{tpu_custom_call.1} parent=11 // pred_check_branch
          %398 = sbr.rel (%p396) target = $region28
        $region27: #{tpu_custom_call.1} parent=11 // pred_region
          _
        $region28: #{tpu_custom_call.1} parent=11 // pred_fallthru
          _
        // Predicated region
        $region29: #{tpu_custom_call.1} parent=11 // pred_check
          %p399 = pneg %p157
        $region30: #{tpu_custom_call.1} parent=11 // pred_check_branch
          %401 = sbr.rel (%p399) target = $region32
        $region31: #{tpu_custom_call.1} parent=11 // pred_region
          _
        $region32: #{tpu_custom_call.1} parent=11 // pred_fallthru
          _
        // Predicated region
        $region33: #{tpu_custom_call.1} parent=11 // pred_check
          %p402 = pneg %p178
        $region34: #{tpu_custom_call.1} parent=11 // pred_check_branch
          %404 = sbr.rel (%p402) target = $region36
        $region35: #{tpu_custom_call.1} parent=11 // pred_region
          %406 = vsyncadd [#allocation3], 0
          %s407 = sshll.u32 %s6, 4
          %s408 = int_to_ptr.hbm [resolvable:$true] %s407
          %s409 = sshll.u32 [#allocation2], 4
          %s410 = int_to_ptr.vmem [resolvable:$true] %s409
          %415 = dma.hbm_to_vmem [thread:$0]  %s408, 192, %s410, [#allocation3], 64, 64, 4
        $region36: #{tpu_custom_call.1} parent=11 // pred_fallthru
          _
        // Predicated region
        $region37: #{tpu_custom_call.1} parent=11 // pred_check
          %p416 = pneg %p199
        $region38: #{tpu_custom_call.1} parent=11 // pred_check_branch
          %418 = sbr.rel (%p416) target = $region40
        $region39: #{tpu_custom_call.1} parent=11 // pred_region
          _
        $region40: #{tpu_custom_call.1} parent=11 // pred_fallthru
          _
        // Predicated region
        $region41: #{tpu_custom_call.1} parent=11 // pred_check
          %p419 = pneg %p220
        $region42: #{tpu_custom_call.1} parent=11 // pred_check_branch
          %421 = sbr.rel (%p419) target = $region44
        $region43: #{tpu_custom_call.1} parent=11 // pred_region
          _
        $region44: #{tpu_custom_call.1} parent=11 // pred_fallthru
          _
        // Predicated region
        $region45: #{tpu_custom_call.1} parent=11 // pred_check
          %p422 = pneg %p241
        $region46: #{tpu_custom_call.1} parent=11 // pred_check_branch
          %424 = sbr.rel (%p422) target = $region48
        $region47: #{tpu_custom_call.1} parent=11 // pred_region
          %426 = vsyncadd [#allocation6], 0
          %s427 = sshll.u32 %s9, 4
          %s428 = int_to_ptr.hbm [resolvable:$true] %s427
          %s429 = sshll.u32 [#allocation5], 4
          %s430 = int_to_ptr.vmem [resolvable:$true] %s429
          %435 = dma.hbm_to_vmem [thread:$0]  %s428, 128, %s430, [#allocation6], 64, 64, 4
        $region48: #{tpu_custom_call.1} parent=11 // pred_fallthru
          _
        // Predicated region
        $region49: #{tpu_custom_call.1} parent=11 // pred_check
          %p436 = pneg %p262
        $region50: #{tpu_custom_call.1} parent=11 // pred_check_branch
          %438 = sbr.rel (%p436) target = $region52
        $region51: #{tpu_custom_call.1} parent=11 // pred_region
          _
        $region52: #{tpu_custom_call.1} parent=11 // pred_fallthru
          _
        // Predicated region
        $region53: #{tpu_custom_call.1} parent=11 // pred_check
          %p439 = pneg %p283
        $region54: #{tpu_custom_call.1} parent=11 // pred_check_branch
          %441 = sbr.rel (%p439) target = $region56
        $region55: #{tpu_custom_call.1} parent=11 // pred_region
          _
        $region56: #{tpu_custom_call.1} parent=11 // pred_fallthru
          _
        // Predicated region
        $region57: #{tpu_custom_call.1} parent=11 // pred_check
          %p442 = pneg %p304
        $region58: #{tpu_custom_call.1} parent=11 // pred_check_branch
          %444 = sbr.rel (%p442) target = $region60
        $region59: #{tpu_custom_call.1} parent=11 // pred_region
          _
        $region60: #{tpu_custom_call.1} parent=11 // pred_fallthru
          _
        // Predicated region
        $region61: #{tpu_custom_call.1} parent=11 // pred_check
          %p445 = pneg %p325
        $region62: #{tpu_custom_call.1} parent=11 // pred_check_branch
          %447 = sbr.rel (%p445) target = $region64
        $region63: #{tpu_custom_call.1} parent=11 // pred_region
          _
        $region64: #{tpu_custom_call.1} parent=11 // pred_fallthru
          _
        // Predicated region
        $region65: #{tpu_custom_call.1} parent=11 // pred_check
          %p448 = pneg %p346
        $region66: #{tpu_custom_call.1} parent=11 // pred_check_branch
          %450 = sbr.rel (%p448) target = $region68
        $region67: #{tpu_custom_call.1} parent=11 // pred_region
          _
        $region68: #{tpu_custom_call.1} parent=11 // pred_fallthru
          _
      $region12: #{tpu_custom_call.1} parent=5 // pred_fallthru
        _
      %p451 = scmp.lt.s32.totalorder %s26, 2
      // Predicated region
      $region69: #{tpu_custom_call.1} parent=5 // pred_check
        %p452 = pneg %p451
      $region70: #{tpu_custom_call.1} parent=5 // pred_check_branch
        %454 = sbr.rel (%p452) target = $region72
      $region71: #{tpu_custom_call.1} parent=5 // pred_region
        // Predicated region
        $region73: #{tpu_custom_call.1} parent=71 // pred_check
          %p455 = pneg %p46
        $region74: #{tpu_custom_call.1} parent=71 // pred_check_branch
          %457 = sbr.rel (%p455) target = $region76
        $region75: #{tpu_custom_call.1} parent=71 // pred_region
          %p458 = scmp.lt.s32.totalorder %s26, 1
          %s459 = scalar_select %p458, %s26, 1
          %s460 = smul.addr %s459, 2
          %s461 = smul.addr %s460, 2
          %s462 = scalar_lea.vmem %s0, %s461
        $region76: #{tpu_custom_call.1} parent=71 // pred_fallthru
          _
      $region72: #{tpu_custom_call.1} parent=5 // pred_fallthru
        _
      %p463 = scmp.le.s32.totalorder 1, %s26
      %p464 = scmp.lt.s32.totalorder %s26, 3
      %p465 = pnand %p463, %p464
      %p466 = pneg %p465
      // Predicated region
      $region77: #{tpu_custom_call.1} parent=5 // pred_check
        _
      $region78: #{tpu_custom_call.1} parent=5 // pred_check_branch
        %468 = sbr.rel (%p465) target = $region80
      $region79: #{tpu_custom_call.1} parent=5 // pred_region
        %s469 = ssub.s32 %s26, 1
        // Predicated region
        $region81: #{tpu_custom_call.1} parent=79 // pred_check
          %p470 = pneg %p178
        $region82: #{tpu_custom_call.1} parent=79 // pred_check_branch
          %472 = sbr.rel (%p470) target = $region84
        $region83: #{tpu_custom_call.1} parent=79 // pred_region
          %474 = dma.done [#allocation3], 192
        $region84: #{tpu_custom_call.1} parent=79 // pred_fallthru
          _
        // Predicated region
        $region85: #{tpu_custom_call.1} parent=79 // pred_check
          %p475 = pneg %p241
        $region86: #{tpu_custom_call.1} parent=79 // pred_check_branch
          %477 = sbr.rel (%p475) target = $region88
        $region87: #{tpu_custom_call.1} parent=79 // pred_region
          %479 = dma.done [#allocation6], 128
        $region88: #{tpu_custom_call.1} parent=79 // pred_fallthru
          _
        %p480 = scmp.lt.s32.totalorder %s31, 1
        %s481 = scalar_select %p480, %s31, 1
        %s482 = smul.addr %s481, 2
        %s483 = smul.addr %s482, 2
        %s484 = scalar_lea.vmem %s0, %s483
        %p485 = pneg %p52
        %p486 = pneg %p49
        %p487 = pneg %p73
        %p488 = pneg %p70
        %p489 = pneg %p94
        %p490 = pneg %p91
        %p491 = pneg %p115
        %p492 = pneg %p112
        %p493 = pneg %p136
        %p494 = pneg %p133
        %p495 = pneg %p157
        %p496 = pneg %p154
        %p497 = pneg %p178
        %p498 = pneg %p175
        %p499 = pneg %p199
        %p500 = pneg %p196
        %p501 = pneg %p220
        %p502 = pneg %p217
        %p503 = pneg %p241
        %p504 = pneg %p238
        %p505 = pneg %p262
        %p506 = pneg %p259
        %p507 = pneg %p283
        %p508 = pneg %p280
        %p509 = pneg %p304
        %p510 = pneg %p301
        %p511 = pneg %p325
        %p512 = pneg %p322
        %p513 = pneg %p346
        %p514 = pneg %p343
        %p515 = pneg %p372
        %p516 = pneg %p369
        %s517 = sand.u32 %s359, 1
        %s518 = scalar_lea.sflag [#allocation4], %s517
        %s519 = sand.u32 %s359, 1
        %s520 = smul.addr %s519, 16
        %s521 = scalar_lea.vmem [#allocation7], %s520
        %p522 = scmp.lt.s32.totalorder %s31, 1
        %s523 = scalar_select %p522, %s31, 1
        %s524 = smul.addr %s523, 2
        %s525 = smul.addr %s524, 2
        %s526 = scalar_lea.vmem %s0, %s525
        %v528 = vld [vmem:[%s526] sm:$0xf]
        %v529 = vlaneseq
        %v530 = vand.u32 %v529, 127
        %v531 = vadd.s32 %v530, 128
        %533 = vst [vmem:[#allocation1] ss:$4 sm:$0xff] %v528
        %v534 = vld.sshfl [vmem:[#allocation1] sm:$0xff pattern:$0x73625140]
        %v535 = vld.sshfl [vmem:[#allocation1 + $0x8] sm:$0xff pattern:$0x73625140]
        %538 = vrot.lane.b32.xlu0 %v534, 1
        %v539 = vpop.permute.xlu0 %538
        %540 = vrot.lane.b32.xlu0 %v535, 1
        %v541 = vpop.permute.xlu0 %540
        %vm542 = vcmp.lt.s32.totalorder %v530, 1
        %v543 = vsel %vm542, %v539, %v541
        %v544 = vsel %vm542, %v541, %v539
        %vm545 = vcmp.ge.s32.totalorder %v530, 1
        %vm546 = vcmp.ge.s32.totalorder %v531, 1
        %v547 = vsel %vm545, 1, 0
        %v548 = vsel %vm546, 1, 0
        %vm549 = vcmp.eq.s32.totalorder %v547, 1
        %vm550 = vcmp.eq.s32.totalorder %v548, 1
        %v551 = vsel %vm549, %v544, 0.0
        %v552 = vsel %vm550, %v543, 0.0
        %v553 = vpack.c.bf16 %v551, %v551
        %v554 = vpack.c.bf16 %v552, %v552
        %v555 = vld [vmem:[%s1] sm:$0x3]
        %556 = vst [vmem:[#allocation1] ss:$4 sm:$0xff] %v528
        %v557 = vld.sshfl [vmem:[#allocation1] sm:$0xff pattern:$0x73625140]
        %v558 = vld.sshfl [vmem:[#allocation1 + $0x8] sm:$0xff pattern:$0x73625140]
        %v561 = vpack.c.bf16 %v557, %v557
        %v562 = vpack.c.bf16 %v558, %v558
        %s563 = scalar_lea.vmem %s1, 2
        %v564 = vld [vmem:[%s563] sm:$0x3]
        %vm565 = vcmask 15360
        %v567 = vsel %vm565, %v564, 0
        %vm569 = vcmask 1040384
        %v571 = vsel %vm569, %v561, 0
        %v574 = vsel %vm569, %v562, 0
        %576 = vmatpush.bf16.msra.mxu0 0
        %577 = vmatpush.bf16.msra.mxu0 0
        %578 = vmatpush.bf16.msra.mxu0 0
        %579 = vmatpush.bf16.msra.mxu0 0
        %580 = vmatpush.bf16.msra.mxu0 0
        %581 = vmatpush.bf16.msra.mxu0 0
        %582 = vmatpush.bf16.msra.mxu0 0
        %583 = vmatpush.bf16.msra.mxu0 %v571
        %584 = vmatmul.bf16.gmra.mxu0 %v567
        %v585 = vpop.f32.mrf.mxu0
        %v586 = vadd.f32 0.0, %v585
        %v587 = vpop.f32.mrf.mxu0
        %588 = vdwg.mxu0
        %589 = vmatpush.bf16.msra.mxu0 0
        %590 = vmatpush.bf16.msra.mxu0 0
        %591 = vmatpush.bf16.msra.mxu0 0
        %592 = vmatpush.bf16.msra.mxu0 0
        %593 = vmatpush.bf16.msra.mxu0 0
        %594 = vmatpush.bf16.msra.mxu0 0
        %595 = vmatpush.bf16.msra.mxu0 0
        %596 = vmatpush.bf16.msra.mxu0 %v574
        %597 = vmatmul.bf16.gmra.mxu0 %v567
        %v598 = vpop.f32.mrf.mxu0
        %v599 = vadd.f32 0.0, %v598
        %v600 = vpop.f32.mrf.mxu0
        %601 = vdwg.mxu0
        %v603 = vsel %vm565, %v555, 0
        %v606 = vsel %vm569, %v553, 0
        %v609 = vsel %vm569, %v554, 0
        %611 = vmatpush.bf16.msra.mxu0 0
        %612 = vmatpush.bf16.msra.mxu0 0
        %613 = vmatpush.bf16.msra.mxu0 0
        %614 = vmatpush.bf16.msra.mxu0 0
        %615 = vmatpush.bf16.msra.mxu0 0
        %616 = vmatpush.bf16.msra.mxu0 0
        %617 = vmatpush.bf16.msra.mxu0 0
        %618 = vmatpush.bf16.msra.mxu0 %v606
        %619 = vmatmul.bf16.gmra.mxu0 %v603
        %v620 = vpop.f32.mrf.mxu0
        %v621 = vadd.f32 %v586, %v620
        %v622 = vpop.f32.mrf.mxu0
        %623 = vdwg.mxu0
        %624 = vmatpush.bf16.msra.mxu0 0
        %625 = vmatpush.bf16.msra.mxu0 0
        %626 = vmatpush.bf16.msra.mxu0 0
        %627 = vmatpush.bf16.msra.mxu0 0
        %628 = vmatpush.bf16.msra.mxu0 0
        %629 = vmatpush.bf16.msra.mxu0 0
        %630 = vmatpush.bf16.msra.mxu0 0
        %631 = vmatpush.bf16.msra.mxu0 %v609
        %632 = vmatmul.bf16.gmra.mxu0 %v603
        %v633 = vpop.f32.mrf.mxu0
        %v634 = vadd.f32 %v599, %v633
        %v635 = vpop.f32.mrf.mxu0
        %636 = vdwg.mxu0
        %637 = vst [vmem:[#allocation1] ss:$4 sm:$0xff] %v528
        %v638 = vld.sshfl [vmem:[#allocation1] sm:$0xff pattern:$0x73625140]
        %v639 = vld.sshfl [vmem:[#allocation1 + $0x8] sm:$0xff pattern:$0x73625140]
        %642 = vrot.lane.b32.xlu0 %v638, 127
        %v643 = vpop.permute.xlu0 %642
        %644 = vrot.lane.b32.xlu0 %v639, 127
        %v645 = vpop.permute.xlu0 %644
        %vm646 = vcmp.lt.s32.totalorder %v530, 127
        %v647 = vsel %vm646, %v643, %v645
        %v648 = vsel %vm646, %v645, %v643
        %vm649 = vcmp.lt.s32.totalorder %v530, 255
        %vm650 = vcmp.lt.s32.totalorder %v531, 255
        %v651 = vsel %vm649, 1, 0
        %v652 = vsel %vm650, 1, 0
        %vm653 = vcmp.eq.s32.totalorder %v651, 1
        %vm654 = vcmp.eq.s32.totalorder %v652, 1
        %v655 = vsel %vm653, %v647, 0.0
        %v656 = vsel %vm654, %v648, 0.0
        %v657 = vpack.c.bf16 %v655, %v655
        %v658 = vpack.c.bf16 %v656, %v656
        %s659 = scalar_lea.vmem %s1, 4
        %v660 = vld [vmem:[%s659] sm:$0x3]
        %v662 = vsel %vm565, %v660, 0
        %v665 = vsel %vm569, %v657, 0
        %v668 = vsel %vm569, %v658, 0
        %670 = vmatpush.bf16.msra.mxu0 0
        %671 = vmatpush.bf16.msra.mxu0 0
        %672 = vmatpush.bf16.msra.mxu0 0
        %673 = vmatpush.bf16.msra.mxu0 0
        %674 = vmatpush.bf16.msra.mxu0 0
        %675 = vmatpush.bf16.msra.mxu0 0
        %676 = vmatpush.bf16.msra.mxu0 0
        %677 = vmatpush.bf16.msra.mxu0 %v665
        %678 = vmatmul.bf16.gmra.mxu0 %v662
        %v679 = vpop.f32.mrf.mxu0
        %v680 = vadd.f32 0.0, %v679
        %v681 = vpop.f32.mrf.mxu0
        %682 = vdwg.mxu0
        %683 = vmatpush.bf16.msra.mxu0 0
        %684 = vmatpush.bf16.msra.mxu0 0
        %685 = vmatpush.bf16.msra.mxu0 0
        %686 = vmatpush.bf16.msra.mxu0 0
        %687 = vmatpush.bf16.msra.mxu0 0
        %688 = vmatpush.bf16.msra.mxu0 0
        %689 = vmatpush.bf16.msra.mxu0 0
        %690 = vmatpush.bf16.msra.mxu0 %v668
        %691 = vmatmul.bf16.gmra.mxu0 %v662
        %v692 = vpop.f32.mrf.mxu0
        %v693 = vadd.f32 0.0, %v692
        %v694 = vpop.f32.mrf.mxu0
        %695 = vdwg.mxu0
        %v696 = vadd.f32 %v621, %v680
        %v697 = vadd.f32 %v634, %v693
        %v698 = vld [vmem:[%s2] sm:$0xf]
        %700 = vset.pattern.permute.xlu0 0
        %701 = vperm.xlu0 %700, %v698
        %v702 = vpop.permute.xlu0 %701
        %v704 = vadd.f32 %v696, %v702
        %v705 = vadd.f32 %v697, %v702
        %v706 = vld [vmem:[%s7] sm:$0xff]
        %v707 = vlaneseq
        %v708 = vshrl.u32 %v707, 7
        %v709 = vadd.s32 %v708, 8
        %v710 = vadd.s32 %v708, 16
        %v711 = vadd.s32 %v708, 24
        %v712 = vadd.s32 %v708, 32
        %v713 = vadd.s32 %v708, 40
        %v714 = vadd.s32 %v708, 48
        %v715 = vadd.s32 %v708, 56
        %v716 = vadd.s32 %v708, 64
        %v717 = vadd.s32 %v708, 72
        %v718 = vadd.s32 %v708, 80
        %v719 = vadd.s32 %v708, 88
        %v720 = vadd.s32 %v708, 96
        %v721 = vadd.s32 %v708, 104
        %v722 = vadd.s32 %v708, 112
        %v723 = vadd.s32 %v708, 120
        %v724 = vadd.s32 %v708, 128
        %v725 = vadd.s32 %v708, 136
        %v726 = vadd.s32 %v708, 144
        %v727 = vadd.s32 %v708, 152
        %v728 = vadd.s32 %v708, 160
        %v729 = vadd.s32 %v708, 168
        %v730 = vadd.s32 %v708, 176
        %v731 = vadd.s32 %v708, 184
        %v732 = vadd.s32 %v708, 192
        %v733 = vadd.s32 %v708, 200
        %v734 = vadd.s32 %v708, 208
        %v735 = vadd.s32 %v708, 216
        %v736 = vadd.s32 %v708, 224
        %v737 = vadd.s32 %v708, 232
        %v738 = vadd.s32 %v708, 240
        %v739 = vadd.s32 %v708, 248
        %v740 = vpack.c.bf16 %v704, %v704
        %v741 = vpack.c.bf16 %v705, %v705
        %v742 = vmul.u32 %v530, 4
        %vm743 = vcmp.eq.s32.totalorder %v708, %v742
        %vm744 = vcmp.eq.s32.totalorder %v709, %v742
        %vm745 = vcmp.eq.s32.totalorder %v710, %v742
        %vm746 = vcmp.eq.s32.totalorder %v711, %v742
        %vm747 = vcmp.eq.s32.totalorder %v712, %v742
        %vm748 = vcmp.eq.s32.totalorder %v713, %v742
        %vm749 = vcmp.eq.s32.totalorder %v714, %v742
        %vm750 = vcmp.eq.s32.totalorder %v715, %v742
        %vm751 = vcmp.eq.s32.totalorder %v716, %v742
        %vm752 = vcmp.eq.s32.totalorder %v717, %v742
        %vm753 = vcmp.eq.s32.totalorder %v718, %v742
        %vm754 = vcmp.eq.s32.totalorder %v719, %v742
        %vm755 = vcmp.eq.s32.totalorder %v720, %v742
        %vm756 = vcmp.eq.s32.totalorder %v721, %v742
        %vm757 = vcmp.eq.s32.totalorder %v722, %v742
        %vm758 = vcmp.eq.s32.totalorder %v723, %v742
        %vm759 = vcmp.eq.s32.totalorder %v724, %v742
        %vm760 = vcmp.eq.s32.totalorder %v725, %v742
        %vm761 = vcmp.eq.s32.totalorder %v726, %v742
        %vm762 = vcmp.eq.s32.totalorder %v727, %v742
        %vm763 = vcmp.eq.s32.totalorder %v728, %v742
        %vm764 = vcmp.eq.s32.totalorder %v729, %v742
        %vm765 = vcmp.eq.s32.totalorder %v730, %v742
        %vm766 = vcmp.eq.s32.totalorder %v731, %v742
        %vm767 = vcmp.eq.s32.totalorder %v732, %v742
        %vm768 = vcmp.eq.s32.totalorder %v733, %v742
        %vm769 = vcmp.eq.s32.totalorder %v734, %v742
        %vm770 = vcmp.eq.s32.totalorder %v735, %v742
        %vm771 = vcmp.eq.s32.totalorder %v736, %v742
        %vm772 = vcmp.eq.s32.totalorder %v737, %v742
        %vm773 = vcmp.eq.s32.totalorder %v738, %v742
        %vm774 = vcmp.eq.s32.totalorder %v739, %v742
        %v775 = vsel %vm743, 1, 0
        %v776 = vsel %vm744, 1, 0
        %v777 = vsel %vm745, 1, 0
        %v778 = vsel %vm746, 1, 0
        %v779 = vsel %vm747, 1, 0
        %v780 = vsel %vm748, 1, 0
        %v781 = vsel %vm749, 1, 0
        %v782 = vsel %vm750, 1, 0
        %v783 = vsel %vm751, 1, 0
        %v784 = vsel %vm752, 1, 0
        %v785 = vsel %vm753, 1, 0
        %v786 = vsel %vm754, 1, 0
        %v787 = vsel %vm755, 1, 0
        %v788 = vsel %vm756, 1, 0
        %v789 = vsel %vm757, 1, 0
        %v790 = vsel %vm758, 1, 0
        %v791 = vsel %vm759, 1, 0
        %v792 = vsel %vm760, 1, 0
        %v793 = vsel %vm761, 1, 0
        %v794 = vsel %vm762, 1, 0
        %v795 = vsel %vm763, 1, 0
        %v796 = vsel %vm764, 1, 0
        %v797 = vsel %vm765, 1, 0
        %v798 = vsel %vm766, 1, 0
        %v799 = vsel %vm767, 1, 0
        %v800 = vsel %vm768, 1, 0
        %v801 = vsel %vm769, 1, 0
        %v802 = vsel %vm770, 1, 0
        %v803 = vsel %vm771, 1, 0
        %v804 = vsel %vm772, 1, 0
        %v805 = vsel %vm773, 1, 0
        %v806 = vsel %vm774, 1, 0
        %v807 = vcvt.s32.f32 %v775
        %v808 = vcvt.s32.f32 %v776
        %v809 = vcvt.s32.f32 %v777
        %v810 = vcvt.s32.f32 %v778
        %v811 = vcvt.s32.f32 %v779
        %v812 = vcvt.s32.f32 %v780
        %v813 = vcvt.s32.f32 %v781
        %v814 = vcvt.s32.f32 %v782
        %v815 = vcvt.s32.f32 %v783
        %v816 = vcvt.s32.f32 %v784
        %v817 = vcvt.s32.f32 %v785
        %v818 = vcvt.s32.f32 %v786
        %v819 = vcvt.s32.f32 %v787
        %v820 = vcvt.s32.f32 %v788
        %v821 = vcvt.s32.f32 %v789
        %v822 = vcvt.s32.f32 %v790
        %v823 = vcvt.s32.f32 %v791
        %v824 = vcvt.s32.f32 %v792
        %v825 = vcvt.s32.f32 %v793
        %v826 = vcvt.s32.f32 %v794
        %v827 = vcvt.s32.f32 %v795
        %v828 = vcvt.s32.f32 %v796
        %v829 = vcvt.s32.f32 %v797
        %v830 = vcvt.s32.f32 %v798
        %v831 = vcvt.s32.f32 %v799
        %v832 = vcvt.s32.f32 %v800
        %v833 = vcvt.s32.f32 %v801
        %v834 = vcvt.s32.f32 %v802
        %v835 = vcvt.s32.f32 %v803
        %v836 = vcvt.s32.f32 %v804
        %v837 = vcvt.s32.f32 %v805
        %v838 = vcvt.s32.f32 %v806
        %v839 = vpack.c.bf16 %v808, %v807
        %v840 = vpack.c.bf16 %v810, %v809
        %v841 = vpack.c.bf16 %v812, %v811
        %v842 = vpack.c.bf16 %v814, %v813
        %v843 = vpack.c.bf16 %v816, %v815
        %v844 = vpack.c.bf16 %v818, %v817
        %v845 = vpack.c.bf16 %v820, %v819
        %v846 = vpack.c.bf16 %v822, %v821
        %v847 = vpack.c.bf16 %v824, %v823
        %v848 = vpack.c.bf16 %v826, %v825
        %v849 = vpack.c.bf16 %v828, %v827
        %v850 = vpack.c.bf16 %v830, %v829
        %v851 = vpack.c.bf16 %v832, %v831
        %v852 = vpack.c.bf16 %v834, %v833
        %v853 = vpack.c.bf16 %v836, %v835
        %v854 = vpack.c.bf16 %v838, %v837
        %855 = vmatpush.bf16.msra.mxu0 %v846
        %856 = vmatpush.bf16.msra.mxu0 %v845
        %857 = vmatpush.bf16.msra.mxu0 %v844
        %858 = vmatpush.bf16.msra.mxu0 %v843
        %859 = vmatpush.bf16.msra.mxu0 %v842
        %860 = vmatpush.bf16.msra.mxu0 %v841
        %861 = vmatpush.bf16.msra.mxu0 %v840
        %862 = vmatpush.bf16.msra.mxu0 %v839
        %863 = vmatmul.bf16.gmra.mxu0 %v740
        %v864 = vpop.f32.mrf.mxu0
        %v865 = vadd.f32 0.0, %v864
        %v866 = vpop.f32.mrf.mxu0
        %867 = vdwg.mxu0
        %868 = vmatpush.bf16.msra.mxu0 %v854
        %869 = vmatpush.bf16.msra.mxu0 %v853
        %870 = vmatpush.bf16.msra.mxu0 %v852
        %871 = vmatpush.bf16.msra.mxu0 %v851
        %872 = vmatpush.bf16.msra.mxu0 %v850
        %873 = vmatpush.bf16.msra.mxu0 %v849
        %874 = vmatpush.bf16.msra.mxu0 %v848
        %875 = vmatpush.bf16.msra.mxu0 %v847
        %876 = vmatmul.bf16.gmra.mxu0 %v741
        %v877 = vpop.f32.mrf.mxu0
        %v878 = vadd.f32 %v865, %v877
        %v879 = vpop.f32.mrf.mxu0
        %880 = vdwg.mxu0
        %v881 = vld [vmem:[%s3] sm:$0xf]
        %v882 = vpack.c.bf16 %v878, %v878
        %v883 = vadd.s32 %v742, 1
        %vm884 = vcmp.eq.s32.totalorder %v708, %v883
        %vm885 = vcmp.eq.s32.totalorder %v709, %v883
        %vm886 = vcmp.eq.s32.totalorder %v710, %v883
        %vm887 = vcmp.eq.s32.totalorder %v711, %v883
        %vm888 = vcmp.eq.s32.totalorder %v712, %v883
        %vm889 = vcmp.eq.s32.totalorder %v713, %v883
        %vm890 = vcmp.eq.s32.totalorder %v714, %v883
        %vm891 = vcmp.eq.s32.totalorder %v715, %v883
        %vm892 = vcmp.eq.s32.totalorder %v716, %v883
        %vm893 = vcmp.eq.s32.totalorder %v717, %v883
        %vm894 = vcmp.eq.s32.totalorder %v718, %v883
        %vm895 = vcmp.eq.s32.totalorder %v719, %v883
        %vm896 = vcmp.eq.s32.totalorder %v720, %v883
        %vm897 = vcmp.eq.s32.totalorder %v721, %v883
        %vm898 = vcmp.eq.s32.totalorder %v722, %v883
        %vm899 = vcmp.eq.s32.totalorder %v723, %v883
        %vm900 = vcmp.eq.s32.totalorder %v724, %v883
        %vm901 = vcmp.eq.s32.totalorder %v725, %v883
        %vm902 = vcmp.eq.s32.totalorder %v726, %v883
        %vm903 = vcmp.eq.s32.totalorder %v727, %v883
        %vm904 = vcmp.eq.s32.totalorder %v728, %v883
        %vm905 = vcmp.eq.s32.totalorder %v729, %v883
        %vm906 = vcmp.eq.s32.totalorder %v730, %v883
        %vm907 = vcmp.eq.s32.totalorder %v731, %v883
        %vm908 = vcmp.eq.s32.totalorder %v732, %v883
        %vm909 = vcmp.eq.s32.totalorder %v733, %v883
        %vm910 = vcmp.eq.s32.totalorder %v734, %v883
        %vm911 = vcmp.eq.s32.totalorder %v735, %v883
        %vm912 = vcmp.eq.s32.totalorder %v736, %v883
        %vm913 = vcmp.eq.s32.totalorder %v737, %v883
        %vm914 = vcmp.eq.s32.totalorder %v738, %v883
        %vm915 = vcmp.eq.s32.totalorder %v739, %v883
        %v916 = vsel %vm884, 1, 0
        %v917 = vsel %vm885, 1, 0
        %v918 = vsel %vm886, 1, 0
        %v919 = vsel %vm887, 1, 0
        %v920 = vsel %vm888, 1, 0
        %v921 = vsel %vm889, 1, 0
        %v922 = vsel %vm890, 1, 0
        %v923 = vsel %vm891, 1, 0
        %v924 = vsel %vm892, 1, 0
        %v925 = vsel %vm893, 1, 0
        %v926 = vsel %vm894, 1, 0
        %v927 = vsel %vm895, 1, 0
        %v928 = vsel %vm896, 1, 0
        %v929 = vsel %vm897, 1, 0
        %v930 = vsel %vm898, 1, 0
        %v931 = vsel %vm899, 1, 0
        %v932 = vsel %vm900, 1, 0
        %v933 = vsel %vm901, 1, 0
        %v934 = vsel %vm902, 1, 0
        %v935 = vsel %vm903, 1, 0
        %v936 = vsel %vm904, 1, 0
        %v937 = vsel %vm905, 1, 0
        %v938 = vsel %vm906, 1, 0
        %v939 = vsel %vm907, 1, 0
        %v940 = vsel %vm908, 1, 0
        %v941 = vsel %vm909, 1, 0
        %v942 = vsel %vm910, 1, 0
        %v943 = vsel %vm911, 1, 0
        %v944 = vsel %vm912, 1, 0
        %v945 = vsel %vm913, 1, 0
        %v946 = vsel %vm914, 1, 0
        %v947 = vsel %vm915, 1, 0
        %v948 = vcvt.s32.f32 %v916
        %v949 = vcvt.s32.f32 %v917
        %v950 = vcvt.s32.f32 %v918
        %v951 = vcvt.s32.f32 %v919
        %v952 = vcvt.s32.f32 %v920
        %v953 = vcvt.s32.f32 %v921
        %v954 = vcvt.s32.f32 %v922
        %v955 = vcvt.s32.f32 %v923
        %v956 = vcvt.s32.f32 %v924
        %v957 = vcvt.s32.f32 %v925
        %v958 = vcvt.s32.f32 %v926
        %v959 = vcvt.s32.f32 %v927
        %v960 = vcvt.s32.f32 %v928
        %v961 = vcvt.s32.f32 %v929
        %v962 = vcvt.s32.f32 %v930
        %v963 = vcvt.s32.f32 %v931
        %v964 = vcvt.s32.f32 %v932
        %v965 = vcvt.s32.f32 %v933
        %v966 = vcvt.s32.f32 %v934
        %v967 = vcvt.s32.f32 %v935
        %v968 = vcvt.s32.f32 %v936
        %v969 = vcvt.s32.f32 %v937
        %v970 = vcvt.s32.f32 %v938
        %v971 = vcvt.s32.f32 %v939
        %v972 = vcvt.s32.f32 %v940
        %v973 = vcvt.s32.f32 %v941
        %v974 = vcvt.s32.f32 %v942
        %v975 = vcvt.s32.f32 %v943
        %v976 = vcvt.s32.f32 %v944
        %v977 = vcvt.s32.f32 %v945
        %v978 = vcvt.s32.f32 %v946
        %v979 = vcvt.s32.f32 %v947
        %v980 = vpack.c.bf16 %v949, %v948
        %v981 = vpack.c.bf16 %v951, %v950
        %v982 = vpack.c.bf16 %v953, %v952
        %v983 = vpack.c.bf16 %v955, %v954
        %v984 = vpack.c.bf16 %v957, %v956
        %v985 = vpack.c.bf16 %v959, %v958
        %v986 = vpack.c.bf16 %v961, %v960
        %v987 = vpack.c.bf16 %v963, %v962
        %v988 = vpack.c.bf16 %v965, %v964
        %v989 = vpack.c.bf16 %v967, %v966
        %v990 = vpack.c.bf16 %v969, %v968
        %v991 = vpack.c.bf16 %v971, %v970
        %v992 = vpack.c.bf16 %v973, %v972
        %v993 = vpack.c.bf16 %v975, %v974
        %v994 = vpack.c.bf16 %v977, %v976
        %v995 = vpack.c.bf16 %v979, %v978
        %996 = vmatpush.bf16.msra.mxu0 %v987
        %997 = vmatpush.bf16.msra.mxu0 %v986
        %998 = vmatpush.bf16.msra.mxu0 %v985
        %999 = vmatpush.bf16.msra.mxu0 %v984
        %1000 = vmatpush.bf16.msra.mxu0 %v983
        %1001 = vmatpush.bf16.msra.mxu0 %v982
        %1002 = vmatpush.bf16.msra.mxu0 %v981
        %1003 = vmatpush.bf16.msra.mxu0 %v980
        %1004 = vmatmul.bf16.gmra.mxu0 %v740
        %v1005 = vpop.f32.mrf.mxu0
        %v1006 = vadd.f32 0.0, %v1005
        %v1007 = vpop.f32.mrf.mxu0
        %1008 = vdwg.mxu0
        %1009 = vmatpush.bf16.msra.mxu0 %v995
        %1010 = vmatpush.bf16.msra.mxu0 %v994
        %1011 = vmatpush.bf16.msra.mxu0 %v993
        %1012 = vmatpush.bf16.msra.mxu0 %v992
        %1013 = vmatpush.bf16.msra.mxu0 %v991
        %1014 = vmatpush.bf16.msra.mxu0 %v990
        %1015 = vmatpush.bf16.msra.mxu0 %v989
        %1016 = vmatpush.bf16.msra.mxu0 %v988
        %1017 = vmatmul.bf16.gmra.mxu0 %v741
        %v1018 = vpop.f32.mrf.mxu0
        %v1019 = vadd.f32 %v1006, %v1018
        %v1020 = vpop.f32.mrf.mxu0
        %1021 = vdwg.mxu0
        %s1022 = scalar_lea.vmem %s3, 4
        %v1023 = vld [vmem:[%s1022] sm:$0xf]
        %v1024 = vpack.c.bf16 %v1019, %v1019
        %vm1025 = vcmask 31744
        %v1027 = vsel %vm1025, %v1023, 0
        %vm1029 = vcmask 1041408
        %v1031 = vsel %vm1029, %v1024, 0
        %1033 = vmatpush.bf16.msra.mxu0 0
        %1034 = vmatpush.bf16.msra.mxu0 0
        %1035 = vmatpush.bf16.msra.mxu0 0
        %1036 = vmatpush.bf16.msra.mxu0 0
        %1037 = vmatpush.bf16.msra.mxu0 0
        %1038 = vmatpush.bf16.msra.mxu0 0
        %1039 = vmatpush.bf16.msra.mxu0 0
        %1040 = vmatpush.bf16.msra.mxu0 %v1031
        %1041 = vmatmul.bf16.gmra.mxu0 %v1027
        %v1042 = vpop.f32.mrf.mxu0
        %v1043 = vadd.f32 0.0, %v1042
        %v1044 = vpop.f32.mrf.mxu0
        %1045 = vdwg.mxu0
        %v1047 = vsel %vm1025, %v881, 0
        %v1050 = vsel %vm1029, %v882, 0
        %1052 = vmatpush.bf16.msra.mxu0 0
        %1053 = vmatpush.bf16.msra.mxu0 0
        %1054 = vmatpush.bf16.msra.mxu0 0
        %1055 = vmatpush.bf16.msra.mxu0 0
        %1056 = vmatpush.bf16.msra.mxu0 0
        %1057 = vmatpush.bf16.msra.mxu0 0
        %1058 = vmatpush.bf16.msra.mxu0 0
        %1059 = vmatpush.bf16.msra.mxu0 %v1050
        %1060 = vmatmul.bf16.gmra.mxu0 %v1047
        %v1061 = vpop.f32.mrf.mxu0
        %v1062 = vadd.f32 %v1043, %v1061
        %v1063 = vpop.f32.mrf.mxu0
        %1064 = vdwg.mxu0
        %v1065 = vadd.s32 %v742, 2
        %vm1066 = vcmp.eq.s32.totalorder %v708, %v1065
        %vm1067 = vcmp.eq.s32.totalorder %v709, %v1065
        %vm1068 = vcmp.eq.s32.totalorder %v710, %v1065
        %vm1069 = vcmp.eq.s32.totalorder %v711, %v1065
        %vm1070 = vcmp.eq.s32.totalorder %v712, %v1065
        %vm1071 = vcmp.eq.s32.totalorder %v713, %v1065
        %vm1072 = vcmp.eq.s32.totalorder %v714, %v1065
        %vm1073 = vcmp.eq.s32.totalorder %v715, %v1065
        %vm1074 = vcmp.eq.s32.totalorder %v716, %v1065
        %vm1075 = vcmp.eq.s32.totalorder %v717, %v1065
        %vm1076 = vcmp.eq.s32.totalorder %v718, %v1065
        %vm1077 = vcmp.eq.s32.totalorder %v719, %v1065
        %vm1078 = vcmp.eq.s32.totalorder %v720, %v1065
        %vm1079 = vcmp.eq.s32.totalorder %v721, %v1065
        %vm1080 = vcmp.eq.s32.totalorder %v722, %v1065
        %vm1081 = vcmp.eq.s32.totalorder %v723, %v1065
        %vm1082 = vcmp.eq.s32.totalorder %v724, %v1065
        %vm1083 = vcmp.eq.s32.totalorder %v725, %v1065
        %vm1084 = vcmp.eq.s32.totalorder %v726, %v1065
        %vm1085 = vcmp.eq.s32.totalorder %v727, %v1065
        %vm1086 = vcmp.eq.s32.totalorder %v728, %v1065
        %vm1087 = vcmp.eq.s32.totalorder %v729, %v1065
        %vm1088 = vcmp.eq.s32.totalorder %v730, %v1065
        %vm1089 = vcmp.eq.s32.totalorder %v731, %v1065
        %vm1090 = vcmp.eq.s32.totalorder %v732, %v1065
        %vm1091 = vcmp.eq.s32.totalorder %v733, %v1065
        %vm1092 = vcmp.eq.s32.totalorder %v734, %v1065
        %vm1093 = vcmp.eq.s32.totalorder %v735, %v1065
        %vm1094 = vcmp.eq.s32.totalorder %v736, %v1065
        %vm1095 = vcmp.eq.s32.totalorder %v737, %v1065
        %vm1096 = vcmp.eq.s32.totalorder %v738, %v1065
        %vm1097 = vcmp.eq.s32.totalorder %v739, %v1065
        %v1098 = vsel %vm1066, 1, 0
        %v1099 = vsel %vm1067, 1, 0
        %v1100 = vsel %vm1068, 1, 0
        %v1101 = vsel %vm1069, 1, 0
        %v1102 = vsel %vm1070, 1, 0
        %v1103 = vsel %vm1071, 1, 0
        %v1104 = vsel %vm1072, 1, 0
        %v1105 = vsel %vm1073, 1, 0
        %v1106 = vsel %vm1074, 1, 0
        %v1107 = vsel %vm1075, 1, 0
        %v1108 = vsel %vm1076, 1, 0
        %v1109 = vsel %vm1077, 1, 0
        %v1110 = vsel %vm1078, 1, 0
        %v1111 = vsel %vm1079, 1, 0
        %v1112 = vsel %vm1080, 1, 0
        %v1113 = vsel %vm1081, 1, 0
        %v1114 = vsel %vm1082, 1, 0
        %v1115 = vsel %vm1083, 1, 0
        %v1116 = vsel %vm1084, 1, 0
        %v1117 = vsel %vm1085, 1, 0
        %v1118 = vsel %vm1086, 1, 0
        %v1119 = vsel %vm1087, 1, 0
        %v1120 = vsel %vm1088, 1, 0
        %v1121 = vsel %vm1089, 1, 0
        %v1122 = vsel %vm1090, 1, 0
        %v1123 = vsel %vm1091, 1, 0
        %v1124 = vsel %vm1092, 1, 0
        %v1125 = vsel %vm1093, 1, 0
        %v1126 = vsel %vm1094, 1, 0
        %v1127 = vsel %vm1095, 1, 0
        %v1128 = vsel %vm1096, 1, 0
        %v1129 = vsel %vm1097, 1, 0
        %v1130 = vcvt.s32.f32 %v1098
        %v1131 = vcvt.s32.f32 %v1099
        %v1132 = vcvt.s32.f32 %v1100
        %v1133 = vcvt.s32.f32 %v1101
        %v1134 = vcvt.s32.f32 %v1102
        %v1135 = vcvt.s32.f32 %v1103
        %v1136 = vcvt.s32.f32 %v1104
        %v1137 = vcvt.s32.f32 %v1105
        %v1138 = vcvt.s32.f32 %v1106
        %v1139 = vcvt.s32.f32 %v1107
        %v1140 = vcvt.s32.f32 %v1108
        %v1141 = vcvt.s32.f32 %v1109
        %v1142 = vcvt.s32.f32 %v1110
        %v1143 = vcvt.s32.f32 %v1111
        %v1144 = vcvt.s32.f32 %v1112
        %v1145 = vcvt.s32.f32 %v1113
        %v1146 = vcvt.s32.f32 %v1114
        %v1147 = vcvt.s32.f32 %v1115
        %v1148 = vcvt.s32.f32 %v1116
        %v1149 = vcvt.s32.f32 %v1117
        %v1150 = vcvt.s32.f32 %v1118
        %v1151 = vcvt.s32.f32 %v1119
        %v1152 = vcvt.s32.f32 %v1120
        %v1153 = vcvt.s32.f32 %v1121
        %v1154 = vcvt.s32.f32 %v1122
        %v1155 = vcvt.s32.f32 %v1123
        %v1156 = vcvt.s32.f32 %v1124
        %v1157 = vcvt.s32.f32 %v1125
        %v1158 = vcvt.s32.f32 %v1126
        %v1159 = vcvt.s32.f32 %v1127
        %v1160 = vcvt.s32.f32 %v1128
        %v1161 = vcvt.s32.f32 %v1129
        %v1162 = vpack.c.bf16 %v1131, %v1130
        %v1163 = vpack.c.bf16 %v1133, %v1132
        %v1164 = vpack.c.bf16 %v1135, %v1134
        %v1165 = vpack.c.bf16 %v1137, %v1136
        %v1166 = vpack.c.bf16 %v1139, %v1138
        %v1167 = vpack.c.bf16 %v1141, %v1140
        %v1168 = vpack.c.bf16 %v1143, %v1142
        %v1169 = vpack.c.bf16 %v1145, %v1144
        %v1170 = vpack.c.bf16 %v1147, %v1146
        %v1171 = vpack.c.bf16 %v1149, %v1148
        %v1172 = vpack.c.bf16 %v1151, %v1150
        %v1173 = vpack.c.bf16 %v1153, %v1152
        %v1174 = vpack.c.bf16 %v1155, %v1154
        %v1175 = vpack.c.bf16 %v1157, %v1156
        %v1176 = vpack.c.bf16 %v1159, %v1158
        %v1177 = vpack.c.bf16 %v1161, %v1160
        %1178 = vmatpush.bf16.msra.mxu0 %v1169
        %1179 = vmatpush.bf16.msra.mxu0 %v1168
        %1180 = vmatpush.bf16.msra.mxu0 %v1167
        %1181 = vmatpush.bf16.msra.mxu0 %v1166
        %1182 = vmatpush.bf16.msra.mxu0 %v1165
        %1183 = vmatpush.bf16.msra.mxu0 %v1164
        %1184 = vmatpush.bf16.msra.mxu0 %v1163
        %1185 = vmatpush.bf16.msra.mxu0 %v1162
        %1186 = vmatmul.bf16.gmra.mxu0 %v740
        %v1187 = vpop.f32.mrf.mxu0
        %v1188 = vadd.f32 0.0, %v1187
        %v1189 = vpop.f32.mrf.mxu0
        %1190 = vdwg.mxu0
        %1191 = vmatpush.bf16.msra.mxu0 %v1177
        %1192 = vmatpush.bf16.msra.mxu0 %v1176
        %1193 = vmatpush.bf16.msra.mxu0 %v1175
        %1194 = vmatpush.bf16.msra.mxu0 %v1174
        %1195 = vmatpush.bf16.msra.mxu0 %v1173
        %1196 = vmatpush.bf16.msra.mxu0 %v1172
        %1197 = vmatpush.bf16.msra.mxu0 %v1171
        %1198 = vmatpush.bf16.msra.mxu0 %v1170
        %1199 = vmatmul.bf16.gmra.mxu0 %v741
        %v1200 = vpop.f32.mrf.mxu0
        %v1201 = vadd.f32 %v1188, %v1200
        %v1202 = vpop.f32.mrf.mxu0
        %1203 = vdwg.mxu0
        %s1204 = scalar_lea.vmem %s3, 8
        %v1205 = vld [vmem:[%s1204] sm:$0xf]
        %v1206 = vpack.c.bf16 %v1201, %v1201
        %v1208 = vsel %vm1025, %v1205, 0
        %v1211 = vsel %vm1029, %v1206, 0
        %1213 = vmatpush.bf16.msra.mxu0 0
        %1214 = vmatpush.bf16.msra.mxu0 0
        %1215 = vmatpush.bf16.msra.mxu0 0
        %1216 = vmatpush.bf16.msra.mxu0 0
        %1217 = vmatpush.bf16.msra.mxu0 0
        %1218 = vmatpush.bf16.msra.mxu0 0
        %1219 = vmatpush.bf16.msra.mxu0 0
        %1220 = vmatpush.bf16.msra.mxu0 %v1211
        %1221 = vmatmul.bf16.gmra.mxu0 %v1208
        %v1222 = vpop.f32.mrf.mxu0
        %v1223 = vadd.f32 0.0, %v1222
        %v1224 = vpop.f32.mrf.mxu0
        %1225 = vdwg.mxu0
        %v1226 = vadd.f32 %v1062, %v1223
        %v1227 = vadd.s32 %v742, 3
        %vm1228 = vcmp.eq.s32.totalorder %v708, %v1227
        %vm1229 = vcmp.eq.s32.totalorder %v709, %v1227
        %vm1230 = vcmp.eq.s32.totalorder %v710, %v1227
        %vm1231 = vcmp.eq.s32.totalorder %v711, %v1227
        %vm1232 = vcmp.eq.s32.totalorder %v712, %v1227
        %vm1233 = vcmp.eq.s32.totalorder %v713, %v1227
        %vm1234 = vcmp.eq.s32.totalorder %v714, %v1227
        %vm1235 = vcmp.eq.s32.totalorder %v715, %v1227
        %vm1236 = vcmp.eq.s32.totalorder %v716, %v1227
        %vm1237 = vcmp.eq.s32.totalorder %v717, %v1227
        %vm1238 = vcmp.eq.s32.totalorder %v718, %v1227
        %vm1239 = vcmp.eq.s32.totalorder %v719, %v1227
        %vm1240 = vcmp.eq.s32.totalorder %v720, %v1227
        %vm1241 = vcmp.eq.s32.totalorder %v721, %v1227
        %vm1242 = vcmp.eq.s32.totalorder %v722, %v1227
        %vm1243 = vcmp.eq.s32.totalorder %v723, %v1227
        %vm1244 = vcmp.eq.s32.totalorder %v724, %v1227
        %vm1245 = vcmp.eq.s32.totalorder %v725, %v1227
        %vm1246 = vcmp.eq.s32.totalorder %v726, %v1227
        %vm1247 = vcmp.eq.s32.totalorder %v727, %v1227
        %vm1248 = vcmp.eq.s32.totalorder %v728, %v1227
        %vm1249 = vcmp.eq.s32.totalorder %v729, %v1227
        %vm1250 = vcmp.eq.s32.totalorder %v730, %v1227
        %vm1251 = vcmp.eq.s32.totalorder %v731, %v1227
        %vm1252 = vcmp.eq.s32.totalorder %v732, %v1227
        %vm1253 = vcmp.eq.s32.totalorder %v733, %v1227
        %vm1254 = vcmp.eq.s32.totalorder %v734, %v1227
        %vm1255 = vcmp.eq.s32.totalorder %v735, %v1227
        %vm1256 = vcmp.eq.s32.totalorder %v736, %v1227
        %vm1257 = vcmp.eq.s32.totalorder %v737, %v1227
        %vm1258 = vcmp.eq.s32.totalorder %v738, %v1227
        %vm1259 = vcmp.eq.s32.totalorder %v739, %v1227
        %v1260 = vsel %vm1228, 1, 0
        %v1261 = vsel %vm1229, 1, 0
        %v1262 = vsel %vm1230, 1, 0
        %v1263 = vsel %vm1231, 1, 0
        %v1264 = vsel %vm1232, 1, 0
        %v1265 = vsel %vm1233, 1, 0
        %v1266 = vsel %vm1234, 1, 0
        %v1267 = vsel %vm1235, 1, 0
        %v1268 = vsel %vm1236, 1, 0
        %v1269 = vsel %vm1237, 1, 0
        %v1270 = vsel %vm1238, 1, 0
        %v1271 = vsel %vm1239, 1, 0
        %v1272 = vsel %vm1240, 1, 0
        %v1273 = vsel %vm1241, 1, 0
        %v1274 = vsel %vm1242, 1, 0
        %v1275 = vsel %vm1243, 1, 0
        %v1276 = vsel %vm1244, 1, 0
        %v1277 = vsel %vm1245, 1, 0
        %v1278 = vsel %vm1246, 1, 0
        %v1279 = vsel %vm1247, 1, 0
        %v1280 = vsel %vm1248, 1, 0
        %v1281 = vsel %vm1249, 1, 0
        %v1282 = vsel %vm1250, 1, 0
        %v1283 = vsel %vm1251, 1, 0
        %v1284 = vsel %vm1252, 1, 0
        %v1285 = vsel %vm1253, 1, 0
        %v1286 = vsel %vm1254, 1, 0
        %v1287 = vsel %vm1255, 1, 0
        %v1288 = vsel %vm1256, 1, 0
        %v1289 = vsel %vm1257, 1, 0
        %v1290 = vsel %vm1258, 1, 0
        %v1291 = vsel %vm1259, 1, 0
        %v1292 = vcvt.s32.f32 %v1260
        %v1293 = vcvt.s32.f32 %v1261
        %v1294 = vcvt.s32.f32 %v1262
        %v1295 = vcvt.s32.f32 %v1263
        %v1296 = vcvt.s32.f32 %v1264
        %v1297 = vcvt.s32.f32 %v1265
        %v1298 = vcvt.s32.f32 %v1266
        %v1299 = vcvt.s32.f32 %v1267
        %v1300 = vcvt.s32.f32 %v1268
        %v1301 = vcvt.s32.f32 %v1269
        %v1302 = vcvt.s32.f32 %v1270
        %v1303 = vcvt.s32.f32 %v1271
        %v1304 = vcvt.s32.f32 %v1272
        %v1305 = vcvt.s32.f32 %v1273
        %v1306 = vcvt.s32.f32 %v1274
        %v1307 = vcvt.s32.f32 %v1275
        %v1308 = vcvt.s32.f32 %v1276
        %v1309 = vcvt.s32.f32 %v1277
        %v1310 = vcvt.s32.f32 %v1278
        %v1311 = vcvt.s32.f32 %v1279
        %v1312 = vcvt.s32.f32 %v1280
        %v1313 = vcvt.s32.f32 %v1281
        %v1314 = vcvt.s32.f32 %v1282
        %v1315 = vcvt.s32.f32 %v1283
        %v1316 = vcvt.s32.f32 %v1284
        %v1317 = vcvt.s32.f32 %v1285
        %v1318 = vcvt.s32.f32 %v1286
        %v1319 = vcvt.s32.f32 %v1287
        %v1320 = vcvt.s32.f32 %v1288
        %v1321 = vcvt.s32.f32 %v1289
        %v1322 = vcvt.s32.f32 %v1290
        %v1323 = vcvt.s32.f32 %v1291
        %v1324 = vpack.c.bf16 %v1293, %v1292
        %v1325 = vpack.c.bf16 %v1295, %v1294
        %v1326 = vpack.c.bf16 %v1297, %v1296
        %v1327 = vpack.c.bf16 %v1299, %v1298
        %v1328 = vpack.c.bf16 %v1301, %v1300
        %v1329 = vpack.c.bf16 %v1303, %v1302
        %v1330 = vpack.c.bf16 %v1305, %v1304
        %v1331 = vpack.c.bf16 %v1307, %v1306
        %v1332 = vpack.c.bf16 %v1309, %v1308
        %v1333 = vpack.c.bf16 %v1311, %v1310
        %v1334 = vpack.c.bf16 %v1313, %v1312
        %v1335 = vpack.c.bf16 %v1315, %v1314
        %v1336 = vpack.c.bf16 %v1317, %v1316
        %v1337 = vpack.c.bf16 %v1319, %v1318
        %v1338 = vpack.c.bf16 %v1321, %v1320
        %v1339 = vpack.c.bf16 %v1323, %v1322
        %1340 = vmatpush.bf16.msra.mxu0 %v1331
        %1341 = vmatpush.bf16.msra.mxu0 %v1330
        %1342 = vmatpush.bf16.msra.mxu0 %v1329
        %1343 = vmatpush.bf16.msra.mxu0 %v1328
        %1344 = vmatpush.bf16.msra.mxu0 %v1327
        %1345 = vmatpush.bf16.msra.mxu0 %v1326
        %1346 = vmatpush.bf16.msra.mxu0 %v1325
        %1347 = vmatpush.bf16.msra.mxu0 %v1324
        %1348 = vmatmul.bf16.gmra.mxu0 %v740
        %v1349 = vpop.f32.mrf.mxu0
        %v1350 = vadd.f32 0.0, %v1349
        %v1351 = vpop.f32.mrf.mxu0
        %1352 = vdwg.mxu0
        %1353 = vmatpush.bf16.msra.mxu0 %v1339
        %1354 = vmatpush.bf16.msra.mxu0 %v1338
        %1355 = vmatpush.bf16.msra.mxu0 %v1337
        %1356 = vmatpush.bf16.msra.mxu0 %v1336
        %1357 = vmatpush.bf16.msra.mxu0 %v1335
        %1358 = vmatpush.bf16.msra.mxu0 %v1334
        %1359 = vmatpush.bf16.msra.mxu0 %v1333
        %1360 = vmatpush.bf16.msra.mxu0 %v1332
        %1361 = vmatmul.bf16.gmra.mxu0 %v741
        %v1362 = vpop.f32.mrf.mxu0
        %v1363 = vadd.f32 %v1350, %v1362
        %v1364 = vpop.f32.mrf.mxu0
        %1365 = vdwg.mxu0
        %s1366 = scalar_lea.vmem %s3, 12
        %v1367 = vld [vmem:[%s1366] sm:$0xf]
        %v1368 = vpack.c.bf16 %v1363, %v1363
        %v1370 = vsel %vm1025, %v1367, 0
        %v1373 = vsel %vm1029, %v1368, 0
        %1375 = vmatpush.bf16.msra.mxu0 0
        %1376 = vmatpush.bf16.msra.mxu0 0
        %1377 = vmatpush.bf16.msra.mxu0 0
        %1378 = vmatpush.bf16.msra.mxu0 0
        %1379 = vmatpush.bf16.msra.mxu0 0
        %1380 = vmatpush.bf16.msra.mxu0 0
        %1381 = vmatpush.bf16.msra.mxu0 0
        %1382 = vmatpush.bf16.msra.mxu0 %v1373
        %1383 = vmatmul.bf16.gmra.mxu0 %v1370
        %v1384 = vpop.f32.mrf.mxu0
        %v1385 = vadd.f32 0.0, %v1384
        %v1386 = vpop.f32.mrf.mxu0
        %1387 = vdwg.mxu0
        %v1388 = vadd.f32 %v1226, %v1385
        %1390 = vset.pattern.permute.xlu0 0
        %1391 = vperm.xlu0 %1390, %v706
        %v1392 = vpop.permute.xlu0 %1391
        %v1394 = vadd.f32 %v1388, %v1392
        %vm1395 = vcmask 523264
        %v1396 = vsel %vm1395, %v1394, 0.0
        %1397 = vadd.xlane.f32.xlu0 %v1396
        %v1398 = vpop.xlane.xlu0 %1397
        %v1399 = vrcp.pop 64.0
        %v1400 = vmul.f32 64.0, %v1399
        %v1401 = vsub.f32 1.0, %v1400
        %v1402 = vmul.f32 %v1399, %v1401
        %v1403 = vadd.f32 %v1399, %v1402
        %vm1404 = vweird.f32 %v1399
        %v1405 = vsel %vm1404, %v1399, %v1403
        %v1406 = vmul.f32 %v1398, %v1405
        %v1407 = vsub.f32 %v1394, %v1406
        %v1408 = vmul.f32 %v1407, %v1407
        %v1409 = vsel %vm1395, %v1408, 0.0
        %1410 = vadd.xlane.f32.xlu0 %v1409
        %v1411 = vpop.xlane.xlu0 %1410
        %v1412 = vmul.f32 %v1411, %v1405
        %v1413 = vadd.f32 %v1412, 1e-05
        %v1414 = vrsqrt.pop %v1413
        %v1415 = vmul.f32 %v1414, %v1413
        %v1416 = vmul.f32 %v1415, %v1414
        %v1417 = vmul.f32 0.5, %v1416
        %v1418 = vsub.f32 1.5, %v1417
        %v1419 = vmul.f32 %v1414, %v1418
        %vm1420 = vweird.f32 %v1413
        %vm1421 = vweird.f32 %v1414
        %vm1422 = vmor %vm1420, %vm1421
        %v1423 = vsel %vm1422, %v1414, %v1419
        %v1424 = vmul.f32 %v1407, %v1423
        %v1425 = vxor.u32 %v1424, 2147483648
        %v1426 = vmul.f32 %v1425, 1.442695
        %v1427 = vpow.pop %v1426
        %v1428 = vadd.f32 %v1427, 1.0
        %v1429 = vrcp.pop %v1428
        %v1430 = vmul.f32 %v1428, %v1429
        %v1431 = vsub.f32 1.0, %v1430
        %v1432 = vmul.f32 %v1429, %v1431
        %v1433 = vadd.f32 %v1429, %v1432
        %vm1434 = vweird.f32 %v1428
        %vm1435 = vweird.f32 %v1429
        %vm1436 = vmor %vm1434, %vm1435
        %v1437 = vsel %vm1436, %v1429, %v1433
        %v1438 = vand.u32 2147483647, %v1428
        %vm1439 = vcmp.eq.f32.partialorder %v1438, 8.507059e+37
        %v1440 = vand.u32 %v1428, 2147483648
        %v1441 = vor.u32 1.1754944e-38, %v1440
        %v1442 = vsel %vm1439, %v1441, %v1437
        %v1443 = vmul.f32 1.0, %v1442
        %v1444 = vmul.f32 %v1424, %v1443
        %v1445 = vld [vmem:[%s4] sm:$0xf]
        %v1446 = vpack.c.bf16 %v1444, %v1444
        %1447 = vset.pattern.permute.xlu0 1
        %1448 = vperm.xlu0 %1447, %v706
        %v1449 = vpop.permute.xlu0 %1448
        %vm1451 = vcmask 64512
        %v1453 = vsel %vm1451, %v1445, 0
        %vm1455 = vcmask 1043456
        %v1457 = vsel %vm1455, %v1446, 0
        %1459 = vmatpush.bf16.msra.mxu0 0
        %1460 = vmatpush.bf16.msra.mxu0 0
        %1461 = vmatpush.bf16.msra.mxu0 0
        %1462 = vmatpush.bf16.msra.mxu0 0
        %1463 = vmatpush.bf16.msra.mxu0 0
        %1464 = vmatpush.bf16.msra.mxu0 0
        %1465 = vmatpush.bf16.msra.mxu0 0
        %1466 = vmatpush.bf16.msra.mxu0 %v1457
        %1467 = vmatmul.bf16.gmra.mxu0 %v1453
        %v1468 = vpop.f32.mrf.mxu0
        %v1469 = vadd.f32 %v1449, %v1468
        %v1470 = vpop.f32.mrf.mxu0
        %1471 = vdwg.mxu0
        %v1472 = vadd.s32 %v530, 4294967295
        %vm1473 = vcmp.eq.s32.totalorder %v708, %v1472
        %vm1474 = vcmp.eq.s32.totalorder %v709, %v1472
        %vm1475 = vcmp.eq.s32.totalorder %v710, %v1472
        %vm1476 = vcmp.eq.s32.totalorder %v711, %v1472
        %vm1477 = vcmp.eq.s32.totalorder %v712, %v1472
        %vm1478 = vcmp.eq.s32.totalorder %v713, %v1472
        %vm1479 = vcmp.eq.s32.totalorder %v714, %v1472
        %vm1480 = vcmp.eq.s32.totalorder %v715, %v1472
        %v1481 = vsel %vm1473, 1, 0
        %v1482 = vsel %vm1474, 1, 0
        %v1483 = vsel %vm1475, 1, 0
        %v1484 = vsel %vm1476, 1, 0
        %v1485 = vsel %vm1477, 1, 0
        %v1486 = vsel %vm1478, 1, 0
        %v1487 = vsel %vm1479, 1, 0
        %v1488 = vsel %vm1480, 1, 0
        %v1489 = vcvt.s32.f32 %v1481
        %v1490 = vcvt.s32.f32 %v1482
        %v1491 = vcvt.s32.f32 %v1483
        %v1492 = vcvt.s32.f32 %v1484
        %v1493 = vcvt.s32.f32 %v1485
        %v1494 = vcvt.s32.f32 %v1486
        %v1495 = vcvt.s32.f32 %v1487
        %v1496 = vcvt.s32.f32 %v1488
        %v1498 = vsel %vm1395, %v1444, 0
        %1500 = vmatpush.msra.mxu0 0.0
        %1501 = vmatpush.msra.mxu0 0.0
        %1502 = vmatpush.msra.mxu0 0.0
        %1503 = vmatpush.msra.mxu0 0.0
        %1504 = vmatpush.msra.mxu0 0.0
        %1505 = vmatpush.msra.mxu0 0.0
        %1506 = vmatpush.msra.mxu0 0.0
        %1507 = vmatpush.msra.mxu0 0.0
        %1508 = vmatpush.msra.mxu0 %v1496
        %1509 = vmatpush.msra.mxu0 %v1495
        %1510 = vmatpush.msra.mxu0 %v1494
        %1511 = vmatpush.msra.mxu0 %v1493
        %1512 = vmatpush.msra.mxu0 %v1492
        %1513 = vmatpush.msra.mxu0 %v1491
        %1514 = vmatpush.msra.mxu0 %v1490
        %1515 = vmatpush.msra.mxu0 %v1489
        %1516 = vmatmul.f32.gmra.mxu0 %v1498
        %v1517 = vpop.f32.mrf.mxu0
        %v1518 = vadd.f32 0.0, %v1517
        %1519 = vdwg.mxu0
        %v1520 = vpack.c.bf16 %v1518, %v1518
        %v1521 = vld [vmem:[%s5] sm:$0xf]
        %s1522 = scalar_lea.vmem %s5, 4
        %v1523 = vld [vmem:[%s1522] sm:$0xf]
        %v1525 = vsel %vm1451, %v1523, 0
        %1527 = vmatpush.bf16.msra.mxu0 0
        %1528 = vmatpush.bf16.msra.mxu0 0
        %1529 = vmatpush.bf16.msra.mxu0 0
        %1530 = vmatpush.bf16.msra.mxu0 0
        %1531 = vmatpush.bf16.msra.mxu0 0
        %1532 = vmatpush.bf16.msra.mxu0 0
        %1533 = vmatpush.bf16.msra.mxu0 0
        %1534 = vmatpush.bf16.msra.mxu0 %v1457
        %1535 = vmatmul.bf16.gmra.mxu0 %v1525
        %v1536 = vpop.f32.mrf.mxu0
        %v1537 = vadd.f32 0.0, %v1536
        %v1538 = vpop.f32.mrf.mxu0
        %1539 = vdwg.mxu0
        %v1541 = vsel %vm1451, %v1521, 0
        %v1544 = vsel %vm1455, %v1520, 0
        %1546 = vmatpush.bf16.msra.mxu0 0
        %1547 = vmatpush.bf16.msra.mxu0 0
        %1548 = vmatpush.bf16.msra.mxu0 0
        %1549 = vmatpush.bf16.msra.mxu0 0
        %1550 = vmatpush.bf16.msra.mxu0 0
        %1551 = vmatpush.bf16.msra.mxu0 0
        %1552 = vmatpush.bf16.msra.mxu0 0
        %1553 = vmatpush.bf16.msra.mxu0 %v1544
        %1554 = vmatmul.bf16.gmra.mxu0 %v1541
        %v1555 = vpop.f32.mrf.mxu0
        %v1556 = vadd.f32 %v1537, %v1555
        %v1557 = vpop.f32.mrf.mxu0
        %1558 = vdwg.mxu0
        %v1559 = vadd.s32 %v530, 1
        %vm1560 = vcmp.eq.s32.totalorder %v708, %v1559
        %vm1561 = vcmp.eq.s32.totalorder %v709, %v1559
        %vm1562 = vcmp.eq.s32.totalorder %v710, %v1559
        %vm1563 = vcmp.eq.s32.totalorder %v711, %v1559
        %vm1564 = vcmp.eq.s32.totalorder %v712, %v1559
        %vm1565 = vcmp.eq.s32.totalorder %v713, %v1559
        %vm1566 = vcmp.eq.s32.totalorder %v714, %v1559
        %vm1567 = vcmp.eq.s32.totalorder %v715, %v1559
        %v1568 = vsel %vm1560, 1, 0
        %v1569 = vsel %vm1561, 1, 0
        %v1570 = vsel %vm1562, 1, 0
        %v1571 = vsel %vm1563, 1, 0
        %v1572 = vsel %vm1564, 1, 0
        %v1573 = vsel %vm1565, 1, 0
        %v1574 = vsel %vm1566, 1, 0
        %v1575 = vsel %vm1567, 1, 0
        %v1576 = vcvt.s32.f32 %v1568
        %v1577 = vcvt.s32.f32 %v1569
        %v1578 = vcvt.s32.f32 %v1570
        %v1579 = vcvt.s32.f32 %v1571
        %v1580 = vcvt.s32.f32 %v1572
        %v1581 = vcvt.s32.f32 %v1573
        %v1582 = vcvt.s32.f32 %v1574
        %v1583 = vcvt.s32.f32 %v1575
        %1584 = vmatpush.msra.mxu0 0.0
        %1585 = vmatpush.msra.mxu0 0.0
        %1586 = vmatpush.msra.mxu0 0.0
        %1587 = vmatpush.msra.mxu0 0.0
        %1588 = vmatpush.msra.mxu0 0.0
        %1589 = vmatpush.msra.mxu0 0.0
        %1590 = vmatpush.msra.mxu0 0.0
        %1591 = vmatpush.msra.mxu0 0.0
        %1592 = vmatpush.msra.mxu0 %v1583
        %1593 = vmatpush.msra.mxu0 %v1582
        %1594 = vmatpush.msra.mxu0 %v1581
        %1595 = vmatpush.msra.mxu0 %v1580
        %1596 = vmatpush.msra.mxu0 %v1579
        %1597 = vmatpush.msra.mxu0 %v1578
        %1598 = vmatpush.msra.mxu0 %v1577
        %1599 = vmatpush.msra.mxu0 %v1576
        %1600 = vmatmul.f32.gmra.mxu0 %v1498
        %v1601 = vpop.f32.mrf.mxu0
        %v1602 = vadd.f32 0.0, %v1601
        %1603 = vdwg.mxu0
        %v1604 = vpack.c.bf16 %v1602, %v1602
        %s1605 = scalar_lea.vmem %s5, 8
        %v1606 = vld [vmem:[%s1605] sm:$0xf]
        %v1608 = vsel %vm1451, %v1606, 0
        %v1611 = vsel %vm1455, %v1604, 0
        %1613 = vmatpush.bf16.msra.mxu0 0
        %1614 = vmatpush.bf16.msra.mxu0 0
        %1615 = vmatpush.bf16.msra.mxu0 0
        %1616 = vmatpush.bf16.msra.mxu0 0
        %1617 = vmatpush.bf16.msra.mxu0 0
        %1618 = vmatpush.bf16.msra.mxu0 0
        %1619 = vmatpush.bf16.msra.mxu0 0
        %1620 = vmatpush.bf16.msra.mxu0 %v1611
        %1621 = vmatmul.bf16.gmra.mxu0 %v1608
        %v1622 = vpop.f32.mrf.mxu0
        %v1623 = vadd.f32 0.0, %v1622
        %v1624 = vpop.f32.mrf.mxu0
        %1625 = vdwg.mxu0
        %v1626 = vadd.f32 %v1556, %v1623
        %1627 = vset.pattern.permute.xlu0 2
        %1628 = vperm.xlu0 %1627, %v706
        %v1629 = vpop.permute.xlu0 %1628
        %v1631 = vadd.f32 %v1626, %v1629
        %v1632 = vsel %vm1395, %v1631, 0.0
        %1633 = vadd.xlane.f32.xlu0 %v1632
        %v1634 = vpop.xlane.xlu0 %1633
        %v1635 = vmul.f32 %v1634, %v1405
        %v1636 = vsub.f32 %v1631, %v1635
        %v1637 = vmul.f32 %v1636, %v1636
        %v1638 = vsel %vm1395, %v1637, 0.0
        %1639 = vadd.xlane.f32.xlu0 %v1638
        %v1640 = vpop.xlane.xlu0 %1639
        %v1641 = vmul.f32 %v1640, %v1405
        %v1642 = vadd.f32 %v1641, 1e-05
        %v1643 = vrsqrt.pop %v1642
        %v1644 = vmul.f32 %v1643, %v1642
        %v1645 = vmul.f32 %v1644, %v1643
        %v1646 = vmul.f32 0.5, %v1645
        %v1647 = vsub.f32 1.5, %v1646
        %v1648 = vmul.f32 %v1643, %v1647
        %vm1649 = vweird.f32 %v1642
        %vm1650 = vweird.f32 %v1643
        %vm1651 = vmor %vm1649, %vm1650
        %v1652 = vsel %vm1651, %v1643, %v1648
        %v1653 = vmul.f32 %v1636, %v1652
        %v1654 = vxor.u32 %v1653, 2147483648
        %v1655 = vmul.f32 %v1654, 1.442695
        %v1656 = vpow.pop %v1655
        %v1657 = vadd.f32 %v1656, 1.0
        %v1658 = vrcp.pop %v1657
        %v1659 = vmul.f32 %v1657, %v1658
        %v1660 = vsub.f32 1.0, %v1659
        %v1661 = vmul.f32 %v1658, %v1660
        %v1662 = vadd.f32 %v1658, %v1661
        %vm1663 = vweird.f32 %v1657
        %vm1664 = vweird.f32 %v1658
        %vm1665 = vmor %vm1663, %vm1664
        %v1666 = vsel %vm1665, %v1658, %v1662
        %v1667 = vand.u32 2147483647, %v1657
        %vm1668 = vcmp.eq.f32.partialorder %v1667, 8.507059e+37
        %v1669 = vand.u32 %v1657, 2147483648
        %v1670 = vor.u32 1.1754944e-38, %v1669
        %v1671 = vsel %vm1668, %v1670, %v1666
        %v1672 = vmul.f32 1.0, %v1671
        %v1673 = vmul.f32 %v1653, %v1672
        %v1675 = vsel %vm1395, %v1673, 0
        %1677 = vmatpush.msra.mxu0 0.0
        %1678 = vmatpush.msra.mxu0 0.0
        %1679 = vmatpush.msra.mxu0 0.0
        %1680 = vmatpush.msra.mxu0 0.0
        %1681 = vmatpush.msra.mxu0 0.0
        %1682 = vmatpush.msra.mxu0 0.0
        %1683 = vmatpush.msra.mxu0 0.0
        %1684 = vmatpush.msra.mxu0 0.0
        %1685 = vmatpush.msra.mxu0 %v1496
        %1686 = vmatpush.msra.mxu0 %v1495
        %1687 = vmatpush.msra.mxu0 %v1494
        %1688 = vmatpush.msra.mxu0 %v1493
        %1689 = vmatpush.msra.mxu0 %v1492
        %1690 = vmatpush.msra.mxu0 %v1491
        %1691 = vmatpush.msra.mxu0 %v1490
        %1692 = vmatpush.msra.mxu0 %v1489
        %1693 = vmatmul.f32.gmra.mxu0 %v1675
        %v1694 = vpop.f32.mrf.mxu0
        %v1695 = vadd.f32 0.0, %v1694
        %1696 = vdwg.mxu0
        %v1697 = vpack.c.bf16 %v1695, %v1695
        %v1698 = vld [vmem:[#allocation2] sm:$0xf]
        %v1699 = vpack.c.bf16 %v1673, %v1673
        %s1700 = scalar_lea.vmem [#allocation2], 4
        %v1701 = vld [vmem:[%s1700] sm:$0xf]
        %v1703 = vsel %vm1451, %v1701, 0
        %v1706 = vsel %vm1455, %v1699, 0
        %1708 = vmatpush.bf16.msra.mxu0 0
        %1709 = vmatpush.bf16.msra.mxu0 0
        %1710 = vmatpush.bf16.msra.mxu0 0
        %1711 = vmatpush.bf16.msra.mxu0 0
        %1712 = vmatpush.bf16.msra.mxu0 0
        %1713 = vmatpush.bf16.msra.mxu0 0
        %1714 = vmatpush.bf16.msra.mxu0 0
        %1715 = vmatpush.bf16.msra.mxu0 %v1706
        %1716 = vmatmul.bf16.gmra.mxu0 %v1703
        %v1717 = vpop.f32.mrf.mxu0
        %v1718 = vadd.f32 0.0, %v1717
        %v1719 = vpop.f32.mrf.mxu0
        %1720 = vdwg.mxu0
        %v1722 = vsel %vm1451, %v1698, 0
        %v1725 = vsel %vm1455, %v1697, 0
        %1727 = vmatpush.bf16.msra.mxu0 0
        %1728 = vmatpush.bf16.msra.mxu0 0
        %1729 = vmatpush.bf16.msra.mxu0 0
        %1730 = vmatpush.bf16.msra.mxu0 0
        %1731 = vmatpush.bf16.msra.mxu0 0
        %1732 = vmatpush.bf16.msra.mxu0 0
        %1733 = vmatpush.bf16.msra.mxu0 0
        %1734 = vmatpush.bf16.msra.mxu0 %v1725
        %1735 = vmatmul.bf16.gmra.mxu0 %v1722
        %v1736 = vpop.f32.mrf.mxu0
        %v1737 = vadd.f32 %v1718, %v1736
        %v1738 = vpop.f32.mrf.mxu0
        %1739 = vdwg.mxu0
        %1740 = vmatpush.msra.mxu0 0.0
        %1741 = vmatpush.msra.mxu0 0.0
        %1742 = vmatpush.msra.mxu0 0.0
        %1743 = vmatpush.msra.mxu0 0.0
        %1744 = vmatpush.msra.mxu0 0.0
        %1745 = vmatpush.msra.mxu0 0.0
        %1746 = vmatpush.msra.mxu0 0.0
        %1747 = vmatpush.msra.mxu0 0.0
        %1748 = vmatpush.msra.mxu0 %v1583
        %1749 = vmatpush.msra.mxu0 %v1582
        %1750 = vmatpush.msra.mxu0 %v1581
        %1751 = vmatpush.msra.mxu0 %v1580
        %1752 = vmatpush.msra.mxu0 %v1579
        %1753 = vmatpush.msra.mxu0 %v1578
        %1754 = vmatpush.msra.mxu0 %v1577
        %1755 = vmatpush.msra.mxu0 %v1576
        %1756 = vmatmul.f32.gmra.mxu0 %v1675
        %v1757 = vpop.f32.mrf.mxu0
        %v1758 = vadd.f32 0.0, %v1757
        %1759 = vdwg.mxu0
        %v1760 = vpack.c.bf16 %v1758, %v1758
        %s1761 = scalar_lea.vmem [#allocation2], 8
        %v1762 = vld [vmem:[%s1761] sm:$0xf]
        %v1764 = vsel %vm1451, %v1762, 0
        %v1767 = vsel %vm1455, %v1760, 0
        %1769 = vmatpush.bf16.msra.mxu0 0
        %1770 = vmatpush.bf16.msra.mxu0 0
        %1771 = vmatpush.bf16.msra.mxu0 0
        %1772 = vmatpush.bf16.msra.mxu0 0
        %1773 = vmatpush.bf16.msra.mxu0 0
        %1774 = vmatpush.bf16.msra.mxu0 0
        %1775 = vmatpush.bf16.msra.mxu0 0
        %1776 = vmatpush.bf16.msra.mxu0 %v1767
        %1777 = vmatmul.bf16.gmra.mxu0 %v1764
        %v1778 = vpop.f32.mrf.mxu0
        %v1779 = vadd.f32 0.0, %v1778
        %v1780 = vpop.f32.mrf.mxu0
        %1781 = vdwg.mxu0
        %v1782 = vadd.f32 %v1737, %v1779
        %1783 = vset.pattern.permute.xlu0 3
        %1784 = vperm.xlu0 %1783, %v706
        %v1785 = vpop.permute.xlu0 %1784
        %v1787 = vadd.f32 %v1782, %v1785
        %v1788 = vadd.f32 %v1469, %v1787
        %v1789 = vld [vmem:[%s12] sm:$0xff]
        %v1790 = vld [vmem:[%s12 + $0x8] sm:$0xff]
        %v1791 = vpack.c.bf16 %v1788, %v1788
        %v1793 = vsel %vm1395, %v1791, 0
        %1795 = vmatpush.bf16.msra.mxu0 0
        %1796 = vmatpush.bf16.msra.mxu0 0
        %1797 = vmatpush.bf16.msra.mxu0 0
        %1798 = vmatpush.bf16.msra.mxu0 0
        %1799 = vmatpush.bf16.msra.mxu0 %v842
        %1800 = vmatpush.bf16.msra.mxu0 %v841
        %1801 = vmatpush.bf16.msra.mxu0 %v840
        %1802 = vmatpush.bf16.msra.mxu0 %v839
        %1803 = vmatmul.bf16.gmra.mxu0 %v1793
        %v1804 = vpop.f32.mrf.mxu0
        %v1805 = vadd.f32 0.0, %v1804
        %v1806 = vpop.f32.mrf.mxu0
        %1807 = vdwg.mxu0
        %v1808 = vld [vmem:[%s8] sm:$0xf]
        %v1809 = vld [vmem:[%s8 + $0x4] sm:$0xf]
        %v1810 = vpack.c.bf16 %v1805, %v1805
        %1811 = vmatpush.bf16.msra.mxu0 0
        %1812 = vmatpush.bf16.msra.mxu0 0
        %1813 = vmatpush.bf16.msra.mxu0 0
        %1814 = vmatpush.bf16.msra.mxu0 0
        %1815 = vmatpush.bf16.msra.mxu0 %v983
        %1816 = vmatpush.bf16.msra.mxu0 %v982
        %1817 = vmatpush.bf16.msra.mxu0 %v981
        %1818 = vmatpush.bf16.msra.mxu0 %v980
        %1819 = vmatmul.bf16.gmra.mxu0 %v1793
        %v1820 = vpop.f32.mrf.mxu0
        %v1821 = vadd.f32 0.0, %v1820
        %v1822 = vpop.f32.mrf.mxu0
        %1823 = vdwg.mxu0
        %s1824 = scalar_lea.vmem %s8, 8
        %v1825 = vld [vmem:[%s1824] sm:$0xf]
        %v1826 = vld [vmem:[%s1824 + $0x4] sm:$0xf]
        %v1827 = vpack.c.bf16 %v1821, %v1821
        %v1830 = vunpack.c.l.b16 %v1825
        %v1831 = vunpack.c.l.b16 %v1826
        %v1832 = vpack.c.b16 %v1831, %v1830
        %v1834 = vsel %vm1451, %v1832, 0
        %v1837 = vsel %vm1455, %v1827, 0
        %1839 = vmatpush.bf16.msra.mxu0 0
        %1840 = vmatpush.bf16.msra.mxu0 0
        %1841 = vmatpush.bf16.msra.mxu0 0
        %1842 = vmatpush.bf16.msra.mxu0 0
        %1843 = vmatpush.bf16.msra.mxu0 0
        %1844 = vmatpush.bf16.msra.mxu0 0
        %1845 = vmatpush.bf16.msra.mxu0 0
        %1846 = vmatpush.bf16.msra.mxu0 %v1837
        %1847 = vmatmul.bf16.gmra.mxu0 %v1834
        %v1848 = vpop.f32.mrf.mxu0
        %v1849 = vadd.f32 0.0, %v1848
        %v1850 = vpop.f32.mrf.mxu0
        %v1851 = vadd.f32 0.0, %v1850
        %1852 = vdwg.mxu0
        %v1855 = vunpack.c.l.b16 %v1808
        %v1856 = vunpack.c.l.b16 %v1809
        %v1857 = vpack.c.b16 %v1856, %v1855
        %v1859 = vsel %vm1451, %v1857, 0
        %v1862 = vsel %vm1455, %v1810, 0
        %1864 = vmatpush.bf16.msra.mxu0 0
        %1865 = vmatpush.bf16.msra.mxu0 0
        %1866 = vmatpush.bf16.msra.mxu0 0
        %1867 = vmatpush.bf16.msra.mxu0 0
        %1868 = vmatpush.bf16.msra.mxu0 0
        %1869 = vmatpush.bf16.msra.mxu0 0
        %1870 = vmatpush.bf16.msra.mxu0 0
        %1871 = vmatpush.bf16.msra.mxu0 %v1862
        %1872 = vmatmul.bf16.gmra.mxu0 %v1859
        %v1873 = vpop.f32.mrf.mxu0
        %v1874 = vadd.f32 %v1849, %v1873
        %v1875 = vpop.f32.mrf.mxu0
        %v1876 = vadd.f32 %v1851, %v1875
        %1877 = vdwg.mxu0
        %1878 = vmatpush.bf16.msra.mxu0 0
        %1879 = vmatpush.bf16.msra.mxu0 0
        %1880 = vmatpush.bf16.msra.mxu0 0
        %1881 = vmatpush.bf16.msra.mxu0 0
        %1882 = vmatpush.bf16.msra.mxu0 %v1165
        %1883 = vmatpush.bf16.msra.mxu0 %v1164
        %1884 = vmatpush.bf16.msra.mxu0 %v1163
        %1885 = vmatpush.bf16.msra.mxu0 %v1162
        %1886 = vmatmul.bf16.gmra.mxu0 %v1793
        %v1887 = vpop.f32.mrf.mxu0
        %v1888 = vadd.f32 0.0, %v1887
        %v1889 = vpop.f32.mrf.mxu0
        %1890 = vdwg.mxu0
        %s1891 = scalar_lea.vmem %s8, 16
        %v1892 = vld [vmem:[%s1891] sm:$0xf]
        %v1893 = vld [vmem:[%s1891 + $0x4] sm:$0xf]
        %v1894 = vpack.c.bf16 %v1888, %v1888
        %v1897 = vunpack.c.l.b16 %v1892
        %v1898 = vunpack.c.l.b16 %v1893
        %v1899 = vpack.c.b16 %v1898, %v1897
        %v1901 = vsel %vm1451, %v1899, 0
        %v1904 = vsel %vm1455, %v1894, 0
        %1906 = vmatpush.bf16.msra.mxu0 0
        %1907 = vmatpush.bf16.msra.mxu0 0
        %1908 = vmatpush.bf16.msra.mxu0 0
        %1909 = vmatpush.bf16.msra.mxu0 0
        %1910 = vmatpush.bf16.msra.mxu0 0
        %1911 = vmatpush.bf16.msra.mxu0 0
        %1912 = vmatpush.bf16.msra.mxu0 0
        %1913 = vmatpush.bf16.msra.mxu0 %v1904
        %1914 = vmatmul.bf16.gmra.mxu0 %v1901
        %v1915 = vpop.f32.mrf.mxu0
        %v1916 = vadd.f32 0.0, %v1915
        %v1917 = vpop.f32.mrf.mxu0
        %v1918 = vadd.f32 0.0, %v1917
        %1919 = vdwg.mxu0
        %v1920 = vadd.f32 %v1874, %v1916
        %v1921 = vadd.f32 %v1876, %v1918
        %1922 = vmatpush.bf16.msra.mxu0 0
        %1923 = vmatpush.bf16.msra.mxu0 0
        %1924 = vmatpush.bf16.msra.mxu0 0
        %1925 = vmatpush.bf16.msra.mxu0 0
        %1926 = vmatpush.bf16.msra.mxu0 %v1327
        %1927 = vmatpush.bf16.msra.mxu0 %v1326
        %1928 = vmatpush.bf16.msra.mxu0 %v1325
        %1929 = vmatpush.bf16.msra.mxu0 %v1324
        %1930 = vmatmul.bf16.gmra.mxu0 %v1793
        %v1931 = vpop.f32.mrf.mxu0
        %v1932 = vadd.f32 0.0, %v1931
        %v1933 = vpop.f32.mrf.mxu0
        %1934 = vdwg.mxu0
        %s1935 = scalar_lea.vmem %s8, 24
        %v1936 = vld [vmem:[%s1935] sm:$0xf]
        %v1937 = vld [vmem:[%s1935 + $0x4] sm:$0xf]
        %v1938 = vpack.c.bf16 %v1932, %v1932
        %v1941 = vunpack.c.l.b16 %v1936
        %v1942 = vunpack.c.l.b16 %v1937
        %v1943 = vpack.c.b16 %v1942, %v1941
        %v1945 = vsel %vm1451, %v1943, 0
        %v1948 = vsel %vm1455, %v1938, 0
        %1950 = vmatpush.bf16.msra.mxu0 0
        %1951 = vmatpush.bf16.msra.mxu0 0
        %1952 = vmatpush.bf16.msra.mxu0 0
        %1953 = vmatpush.bf16.msra.mxu0 0
        %1954 = vmatpush.bf16.msra.mxu0 0
        %1955 = vmatpush.bf16.msra.mxu0 0
        %1956 = vmatpush.bf16.msra.mxu0 0
        %1957 = vmatpush.bf16.msra.mxu0 %v1948
        %1958 = vmatmul.bf16.gmra.mxu0 %v1945
        %v1959 = vpop.f32.mrf.mxu0
        %v1960 = vadd.f32 0.0, %v1959
        %v1961 = vpop.f32.mrf.mxu0
        %v1962 = vadd.f32 0.0, %v1961
        %1963 = vdwg.mxu0
        %v1964 = vadd.f32 %v1920, %v1960
        %v1965 = vadd.f32 %v1921, %v1962
        %1967 = vset.pattern.permute.xlu0 0
        %1968 = vperm.xlu0 %1967, %v1789
        %v1969 = vpop.permute.xlu0 %1968
        %1972 = vset.pattern.permute.xlu0 0
        %1973 = vperm.xlu0 %1972, %v1790
        %v1974 = vpop.permute.xlu0 %1973
        %v1976 = vadd.f32 %v1964, %v1969
        %v1977 = vadd.f32 %v1965, %v1974
        %vm1978 = vcmask 130048
        %v1979 = vsel %vm1978, %v1976, 0.0
        %1980 = vadd.xlane.f32.xlu0 %v1979
        %v1981 = vpop.xlane.xlu0 %1980
        %v1982 = vsel %vm1978, %v1977, 0.0
        %1983 = vadd.xlane.f32.xlu0 %v1982
        %v1984 = vpop.xlane.xlu0 %1983
        %v1985 = vrcp.pop 16.0
        %v1986 = vmul.f32 16.0, %v1985
        %v1987 = vsub.f32 1.0, %v1986
        %v1988 = vmul.f32 %v1985, %v1987
        %v1989 = vadd.f32 %v1985, %v1988
        %vm1990 = vweird.f32 %v1985
        %v1991 = vsel %vm1990, %v1985, %v1989
        %v1992 = vmul.f32 %v1981, %v1991
        %v1993 = vmul.f32 %v1984, %v1991
        %v1994 = vsub.f32 %v1976, %v1992
        %v1995 = vsub.f32 %v1977, %v1993
        %v1996 = vmul.f32 %v1994, %v1994
        %v1997 = vmul.f32 %v1995, %v1995
        %v1998 = vsel %vm1978, %v1996, 0.0
        %1999 = vadd.xlane.f32.xlu0 %v1998
        %v2000 = vpop.xlane.xlu0 %1999
        %v2001 = vsel %vm1978, %v1997, 0.0
        %2002 = vadd.xlane.f32.xlu0 %v2001
        %v2003 = vpop.xlane.xlu0 %2002
        %v2004 = vmul.f32 %v2000, %v1991
        %v2005 = vmul.f32 %v2003, %v1991
        %v2006 = vadd.f32 %v2004, 1e-05
        %v2007 = vadd.f32 %v2005, 1e-05
        %v2008 = vrsqrt.pop %v2006
        %v2009 = vmul.f32 %v2008, %v2006
        %v2010 = vmul.f32 %v2009, %v2008
        %v2011 = vmul.f32 0.5, %v2010
        %v2012 = vsub.f32 1.5, %v2011
        %v2013 = vmul.f32 %v2008, %v2012
        %vm2014 = vweird.f32 %v2006
        %vm2015 = vweird.f32 %v2008
        %vm2016 = vmor %vm2014, %vm2015
        %v2017 = vsel %vm2016, %v2008, %v2013
        %v2018 = vrsqrt.pop %v2007
        %v2019 = vmul.f32 %v2018, %v2007
        %v2020 = vmul.f32 %v2019, %v2018
        %v2021 = vmul.f32 0.5, %v2020
        %v2022 = vsub.f32 1.5, %v2021
        %v2023 = vmul.f32 %v2018, %v2022
        %vm2024 = vweird.f32 %v2007
        %vm2025 = vweird.f32 %v2018
        %vm2026 = vmor %vm2024, %vm2025
        %v2027 = vsel %vm2026, %v2018, %v2023
        %v2028 = vmul.f32 %v1994, %v2017
        %v2029 = vmul.f32 %v1995, %v2027
        %v2030 = vxor.u32 %v2028, 2147483648
        %v2031 = vxor.u32 %v2029, 2147483648
        %v2032 = vmul.f32 %v2030, 1.442695
        %v2033 = vpow.pop %v2032
        %v2034 = vmul.f32 %v2031, 1.442695
        %v2035 = vpow.pop %v2034
        %v2036 = vadd.f32 %v2033, 1.0
        %v2037 = vadd.f32 %v2035, 1.0
        %v2038 = vrcp.pop %v2036
        %v2039 = vmul.f32 %v2036, %v2038
        %v2040 = vsub.f32 1.0, %v2039
        %v2041 = vmul.f32 %v2038, %v2040
        %v2042 = vadd.f32 %v2038, %v2041
        %vm2043 = vweird.f32 %v2036
        %vm2044 = vweird.f32 %v2038
        %vm2045 = vmor %vm2043, %vm2044
        %v2046 = vsel %vm2045, %v2038, %v2042
        %v2047 = vand.u32 2147483647, %v2036
        %vm2048 = vcmp.eq.f32.partialorder %v2047, 8.507059e+37
        %v2049 = vand.u32 %v2036, 2147483648
        %v2050 = vor.u32 1.1754944e-38, %v2049
        %v2051 = vsel %vm2048, %v2050, %v2046
        %v2052 = vmul.f32 1.0, %v2051
        %v2053 = vrcp.pop %v2037
        %v2054 = vmul.f32 %v2037, %v2053
        %v2055 = vsub.f32 1.0, %v2054
        %v2056 = vmul.f32 %v2053, %v2055
        %v2057 = vadd.f32 %v2053, %v2056
        %vm2058 = vweird.f32 %v2037
        %vm2059 = vweird.f32 %v2053
        %vm2060 = vmor %vm2058, %vm2059
        %v2061 = vsel %vm2060, %v2053, %v2057
        %v2062 = vand.u32 2147483647, %v2037
        %vm2063 = vcmp.eq.f32.partialorder %v2062, 8.507059e+37
        %v2064 = vand.u32 %v2037, 2147483648
        %v2065 = vor.u32 1.1754944e-38, %v2064
        %v2066 = vsel %vm2063, %v2065, %v2061
        %v2067 = vmul.f32 1.0, %v2066
        %v2068 = vmul.f32 %v2028, %v2052
        %v2069 = vmul.f32 %v2029, %v2067
        %v2070 = vld [vmem:[#allocation5] sm:$0xf]
        %v2071 = vld [vmem:[#allocation5 + $0x4] sm:$0xf]
        %v2072 = vpack.c.bf16 %v2069, %v2068
        %2073 = vset.pattern.permute.xlu0 1
        %2074 = vperm.xlu0 %2073, %v1789
        %v2075 = vpop.permute.xlu0 %2074
        %2077 = vset.pattern.permute.xlu0 1
        %2078 = vperm.xlu0 %2077, %v1790
        %v2079 = vpop.permute.xlu0 %2078
        %v2083 = vunpack.c.l.b16 %v2070
        %v2084 = vunpack.c.l.b16 %v2071
        %v2085 = vpack.c.b16 %v2084, %v2083
        %v2087 = vsel %vm1978, %v2085, 0
        %2089 = vmatpush.bf16.msra.mxu0 0
        %2090 = vmatpush.bf16.msra.mxu0 0
        %2091 = vmatpush.bf16.msra.mxu0 0
        %2092 = vmatpush.bf16.msra.mxu0 0
        %2093 = vmatpush.bf16.msra.mxu0 0
        %2094 = vmatpush.bf16.msra.mxu0 0
        %2095 = vmatpush.bf16.msra.mxu0 0
        %2096 = vmatpush.bf16.msra.mxu0 %v2072
        %2097 = vmatmul.bf16.gmra.mxu0 %v2087
        %v2098 = vpop.f32.mrf.mxu0
        %v2099 = vadd.f32 %v2075, %v2098
        %v2100 = vpop.f32.mrf.mxu0
        %v2101 = vadd.f32 %v2079, %v2100
        %2102 = vdwg.mxu0
        %v2104 = vsel %vm1978, %v2068, 0
        %v2107 = vsel %vm1978, %v2069, 0
        %2109 = vmatpush.msra.mxu0 0.0
        %2110 = vmatpush.msra.mxu0 0.0
        %2111 = vmatpush.msra.mxu0 0.0
        %2112 = vmatpush.msra.mxu0 0.0
        %2113 = vmatpush.msra.mxu0 0.0
        %2114 = vmatpush.msra.mxu0 0.0
        %2115 = vmatpush.msra.mxu0 0.0
        %2116 = vmatpush.msra.mxu0 0.0
        %2117 = vmatpush.msra.mxu0 0.0
        %2118 = vmatpush.msra.mxu0 0.0
        %2119 = vmatpush.msra.mxu0 0.0
        %2120 = vmatpush.msra.mxu0 0.0
        %2121 = vmatpush.msra.mxu0 0.0
        %2122 = vmatpush.msra.mxu0 0.0
        %2123 = vmatpush.msra.mxu0 %v1490
        %2124 = vmatpush.msra.mxu0 %v1489
        %2125 = vmatmul.f32.gmra.mxu0 %v2104
        %v2126 = vpop.f32.mrf.mxu0
        %v2127 = vadd.f32 0.0, %v2126
        %2128 = vmatmul.f32.gmra.mxu0 %v2107
        %v2129 = vpop.f32.mrf.mxu0
        %v2130 = vadd.f32 0.0, %v2129
        %2131 = vdwg.mxu0
        %v2132 = vpack.c.bf16 %v2130, %v2127
        %v2133 = vld [vmem:[%s10] sm:$0xf]
        %v2134 = vld [vmem:[%s10 + $0x4] sm:$0xf]
        %s2135 = scalar_lea.vmem %s10, 8
        %v2136 = vld [vmem:[%s2135] sm:$0xf]
        %v2137 = vld [vmem:[%s2135 + $0x4] sm:$0xf]
        %v2140 = vunpack.c.l.b16 %v2136
        %v2141 = vunpack.c.l.b16 %v2137
        %v2142 = vpack.c.b16 %v2141, %v2140
        %v2144 = vsel %vm1978, %v2142, 0
        %2146 = vmatpush.bf16.msra.mxu0 0
        %2147 = vmatpush.bf16.msra.mxu0 0
        %2148 = vmatpush.bf16.msra.mxu0 0
        %2149 = vmatpush.bf16.msra.mxu0 0
        %2150 = vmatpush.bf16.msra.mxu0 0
        %2151 = vmatpush.bf16.msra.mxu0 0
        %2152 = vmatpush.bf16.msra.mxu0 0
        %2153 = vmatpush.bf16.msra.mxu0 %v2072
        %2154 = vmatmul.bf16.gmra.mxu0 %v2144
        %v2155 = vpop.f32.mrf.mxu0
        %v2156 = vadd.f32 0.0, %v2155
        %v2157 = vpop.f32.mrf.mxu0
        %v2158 = vadd.f32 0.0, %v2157
        %2159 = vdwg.mxu0
        %v2162 = vunpack.c.l.b16 %v2133
        %v2163 = vunpack.c.l.b16 %v2134
        %v2164 = vpack.c.b16 %v2163, %v2162
        %v2166 = vsel %vm1978, %v2164, 0
        %2168 = vmatpush.bf16.msra.mxu0 0
        %2169 = vmatpush.bf16.msra.mxu0 0
        %2170 = vmatpush.bf16.msra.mxu0 0
        %2171 = vmatpush.bf16.msra.mxu0 0
        %2172 = vmatpush.bf16.msra.mxu0 0
        %2173 = vmatpush.bf16.msra.mxu0 0
        %2174 = vmatpush.bf16.msra.mxu0 0
        %2175 = vmatpush.bf16.msra.mxu0 %v2132
        %2176 = vmatmul.bf16.gmra.mxu0 %v2166
        %v2177 = vpop.f32.mrf.mxu0
        %v2178 = vadd.f32 %v2156, %v2177
        %v2179 = vpop.f32.mrf.mxu0
        %v2180 = vadd.f32 %v2158, %v2179
        %2181 = vdwg.mxu0
        %2182 = vmatpush.msra.mxu0 0.0
        %2183 = vmatpush.msra.mxu0 0.0
        %2184 = vmatpush.msra.mxu0 0.0
        %2185 = vmatpush.msra.mxu0 0.0
        %2186 = vmatpush.msra.mxu0 0.0
        %2187 = vmatpush.msra.mxu0 0.0
        %2188 = vmatpush.msra.mxu0 0.0
        %2189 = vmatpush.msra.mxu0 0.0
        %2190 = vmatpush.msra.mxu0 0.0
        %2191 = vmatpush.msra.mxu0 0.0
        %2192 = vmatpush.msra.mxu0 0.0
        %2193 = vmatpush.msra.mxu0 0.0
        %2194 = vmatpush.msra.mxu0 0.0
        %2195 = vmatpush.msra.mxu0 0.0
        %2196 = vmatpush.msra.mxu0 %v1577
        %2197 = vmatpush.msra.mxu0 %v1576
        %2198 = vmatmul.f32.gmra.mxu0 %v2104
        %v2199 = vpop.f32.mrf.mxu0
        %v2200 = vadd.f32 0.0, %v2199
        %2201 = vmatmul.f32.gmra.mxu0 %v2107
        %v2202 = vpop.f32.mrf.mxu0
        %v2203 = vadd.f32 0.0, %v2202
        %2204 = vdwg.mxu0
        %v2205 = vpack.c.bf16 %v2203, %v2200
        %s2206 = scalar_lea.vmem %s10, 16
        %v2207 = vld [vmem:[%s2206] sm:$0xf]
        %v2208 = vld [vmem:[%s2206 + $0x4] sm:$0xf]
        %v2211 = vunpack.c.l.b16 %v2207
        %v2212 = vunpack.c.l.b16 %v2208
        %v2213 = vpack.c.b16 %v2212, %v2211
        %v2215 = vsel %vm1978, %v2213, 0
        %2217 = vmatpush.bf16.msra.mxu0 0
        %2218 = vmatpush.bf16.msra.mxu0 0
        %2219 = vmatpush.bf16.msra.mxu0 0
        %2220 = vmatpush.bf16.msra.mxu0 0
        %2221 = vmatpush.bf16.msra.mxu0 0
        %2222 = vmatpush.bf16.msra.mxu0 0
        %2223 = vmatpush.bf16.msra.mxu0 0
        %2224 = vmatpush.bf16.msra.mxu0 %v2205
        %2225 = vmatmul.bf16.gmra.mxu0 %v2215
        %v2226 = vpop.f32.mrf.mxu0
        %v2227 = vadd.f32 0.0, %v2226
        %v2228 = vpop.f32.mrf.mxu0
        %v2229 = vadd.f32 0.0, %v2228
        %2230 = vdwg.mxu0
        %v2231 = vadd.f32 %v2178, %v2227
        %v2232 = vadd.f32 %v2180, %v2229
        %2233 = vset.pattern.permute.xlu0 2
        %2234 = vperm.xlu0 %2233, %v1789
        %v2235 = vpop.permute.xlu0 %2234
        %2237 = vset.pattern.permute.xlu0 2
        %2238 = vperm.xlu0 %2237, %v1790
        %v2239 = vpop.permute.xlu0 %2238
        %v2241 = vadd.f32 %v2231, %v2235
        %v2242 = vadd.f32 %v2232, %v2239
        %v2243 = vsel %vm1978, %v2241, 0.0
        %2244 = vadd.xlane.f32.xlu0 %v2243
        %v2245 = vpop.xlane.xlu0 %2244
        %v2246 = vsel %vm1978, %v2242, 0.0
        %2247 = vadd.xlane.f32.xlu0 %v2246
        %v2248 = vpop.xlane.xlu0 %2247
        %v2249 = vmul.f32 %v2245, %v1991
        %v2250 = vmul.f32 %v2248, %v1991
        %v2251 = vsub.f32 %v2241, %v2249
        %v2252 = vsub.f32 %v2242, %v2250
        %v2253 = vmul.f32 %v2251, %v2251
        %v2254 = vmul.f32 %v2252, %v2252
        %v2255 = vsel %vm1978, %v2253, 0.0
        %2256 = vadd.xlane.f32.xlu0 %v2255
        %v2257 = vpop.xlane.xlu0 %2256
        %v2258 = vsel %vm1978, %v2254, 0.0
        %2259 = vadd.xlane.f32.xlu0 %v2258
        %v2260 = vpop.xlane.xlu0 %2259
        %v2261 = vmul.f32 %v2257, %v1991
        %v2262 = vmul.f32 %v2260, %v1991
        %v2263 = vadd.f32 %v2261, 1e-05
        %v2264 = vadd.f32 %v2262, 1e-05
        %v2265 = vrsqrt.pop %v2263
        %v2266 = vmul.f32 %v2265, %v2263
        %v2267 = vmul.f32 %v2266, %v2265
        %v2268 = vmul.f32 0.5, %v2267
        %v2269 = vsub.f32 1.5, %v2268
        %v2270 = vmul.f32 %v2265, %v2269
        %vm2271 = vweird.f32 %v2263
        %vm2272 = vweird.f32 %v2265
        %vm2273 = vmor %vm2271, %vm2272
        %v2274 = vsel %vm2273, %v2265, %v2270
        %v2275 = vrsqrt.pop %v2264
        %v2276 = vmul.f32 %v2275, %v2264
        %v2277 = vmul.f32 %v2276, %v2275
        %v2278 = vmul.f32 0.5, %v2277
        %v2279 = vsub.f32 1.5, %v2278
        %v2280 = vmul.f32 %v2275, %v2279
        %vm2281 = vweird.f32 %v2264
        %vm2282 = vweird.f32 %v2275
        %vm2283 = vmor %vm2281, %vm2282
        %v2284 = vsel %vm2283, %v2275, %v2280
        %v2285 = vmul.f32 %v2251, %v2274
        %v2286 = vmul.f32 %v2252, %v2284
        %v2287 = vxor.u32 %v2285, 2147483648
        %v2288 = vxor.u32 %v2286, 2147483648
        %v2289 = vmul.f32 %v2287, 1.442695
        %v2290 = vpow.pop %v2289
        %v2291 = vmul.f32 %v2288, 1.442695
        %v2292 = vpow.pop %v2291
        %v2293 = vadd.f32 %v2290, 1.0
        %v2294 = vadd.f32 %v2292, 1.0
        %v2295 = vrcp.pop %v2293
        %v2296 = vmul.f32 %v2293, %v2295
        %v2297 = vsub.f32 1.0, %v2296
        %v2298 = vmul.f32 %v2295, %v2297
        %v2299 = vadd.f32 %v2295, %v2298
        %vm2300 = vweird.f32 %v2293
        %vm2301 = vweird.f32 %v2295
        %vm2302 = vmor %vm2300, %vm2301
        %v2303 = vsel %vm2302, %v2295, %v2299
        %v2304 = vand.u32 2147483647, %v2293
        %vm2305 = vcmp.eq.f32.partialorder %v2304, 8.507059e+37
        %v2306 = vand.u32 %v2293, 2147483648
        %v2307 = vor.u32 1.1754944e-38, %v2306
        %v2308 = vsel %vm2305, %v2307, %v2303
        %v2309 = vmul.f32 1.0, %v2308
        %v2310 = vrcp.pop %v2294
        %v2311 = vmul.f32 %v2294, %v2310
        %v2312 = vsub.f32 1.0, %v2311
        %v2313 = vmul.f32 %v2310, %v2312
        %v2314 = vadd.f32 %v2310, %v2313
        %vm2315 = vweird.f32 %v2294
        %vm2316 = vweird.f32 %v2310
        %vm2317 = vmor %vm2315, %vm2316
        %v2318 = vsel %vm2317, %v2310, %v2314
        %v2319 = vand.u32 2147483647, %v2294
        %vm2320 = vcmp.eq.f32.partialorder %v2319, 8.507059e+37
        %v2321 = vand.u32 %v2294, 2147483648
        %v2322 = vor.u32 1.1754944e-38, %v2321
        %v2323 = vsel %vm2320, %v2322, %v2318
        %v2324 = vmul.f32 1.0, %v2323
        %v2325 = vmul.f32 %v2285, %v2309
        %v2326 = vmul.f32 %v2286, %v2324
        %v2328 = vsel %vm1978, %v2325, 0
        %v2331 = vsel %vm1978, %v2326, 0
        %2333 = vmatpush.msra.mxu0 0.0
        %2334 = vmatpush.msra.mxu0 0.0
        %2335 = vmatpush.msra.mxu0 0.0
        %2336 = vmatpush.msra.mxu0 0.0
        %2337 = vmatpush.msra.mxu0 0.0
        %2338 = vmatpush.msra.mxu0 0.0
        %2339 = vmatpush.msra.mxu0 0.0
        %2340 = vmatpush.msra.mxu0 0.0
        %2341 = vmatpush.msra.mxu0 0.0
        %2342 = vmatpush.msra.mxu0 0.0
        %2343 = vmatpush.msra.mxu0 0.0
        %2344 = vmatpush.msra.mxu0 0.0
        %2345 = vmatpush.msra.mxu0 0.0
        %2346 = vmatpush.msra.mxu0 0.0
        %2347 = vmatpush.msra.mxu0 %v1490
        %2348 = vmatpush.msra.mxu0 %v1489
        %2349 = vmatmul.f32.gmra.mxu0 %v2328
        %v2350 = vpop.f32.mrf.mxu0
        %v2351 = vadd.f32 0.0, %v2350
        %2352 = vmatmul.f32.gmra.mxu0 %v2331
        %v2353 = vpop.f32.mrf.mxu0
        %v2354 = vadd.f32 0.0, %v2353
        %2355 = vdwg.mxu0
        %v2356 = vpack.c.bf16 %v2354, %v2351
        %v2357 = vld [vmem:[%s11] sm:$0xf]
        %v2358 = vld [vmem:[%s11 + $0x4] sm:$0xf]
        %v2359 = vpack.c.bf16 %v2326, %v2325
        %s2360 = scalar_lea.vmem %s11, 8
        %v2361 = vld [vmem:[%s2360] sm:$0xf]
        %v2362 = vld [vmem:[%s2360 + $0x4] sm:$0xf]
        %v2365 = vunpack.c.l.b16 %v2361
        %v2366 = vunpack.c.l.b16 %v2362
        %v2367 = vpack.c.b16 %v2366, %v2365
        %v2369 = vsel %vm1978, %v2367, 0
        %2371 = vmatpush.bf16.msra.mxu0 0
        %2372 = vmatpush.bf16.msra.mxu0 0
        %2373 = vmatpush.bf16.msra.mxu0 0
        %2374 = vmatpush.bf16.msra.mxu0 0
        %2375 = vmatpush.bf16.msra.mxu0 0
        %2376 = vmatpush.bf16.msra.mxu0 0
        %2377 = vmatpush.bf16.msra.mxu0 0
        %2378 = vmatpush.bf16.msra.mxu0 %v2359
        %2379 = vmatmul.bf16.gmra.mxu0 %v2369
        %v2380 = vpop.f32.mrf.mxu0
        %v2381 = vadd.f32 0.0, %v2380
        %v2382 = vpop.f32.mrf.mxu0
        %v2383 = vadd.f32 0.0, %v2382
        %2384 = vdwg.mxu0
        %v2387 = vunpack.c.l.b16 %v2357
        %v2388 = vunpack.c.l.b16 %v2358
        %v2389 = vpack.c.b16 %v2388, %v2387
        %v2391 = vsel %vm1978, %v2389, 0
        %2393 = vmatpush.bf16.msra.mxu0 0
        %2394 = vmatpush.bf16.msra.mxu0 0
        %2395 = vmatpush.bf16.msra.mxu0 0
        %2396 = vmatpush.bf16.msra.mxu0 0
        %2397 = vmatpush.bf16.msra.mxu0 0
        %2398 = vmatpush.bf16.msra.mxu0 0
        %2399 = vmatpush.bf16.msra.mxu0 0
        %2400 = vmatpush.bf16.msra.mxu0 %v2356
        %2401 = vmatmul.bf16.gmra.mxu0 %v2391
        %v2402 = vpop.f32.mrf.mxu0
        %v2403 = vadd.f32 %v2381, %v2402
        %v2404 = vpop.f32.mrf.mxu0
        %v2405 = vadd.f32 %v2383, %v2404
        %2406 = vdwg.mxu0
        %2407 = vmatpush.msra.mxu0 0.0
        %2408 = vmatpush.msra.mxu0 0.0
        %2409 = vmatpush.msra.mxu0 0.0
        %2410 = vmatpush.msra.mxu0 0.0
        %2411 = vmatpush.msra.mxu0 0.0
        %2412 = vmatpush.msra.mxu0 0.0
        %2413 = vmatpush.msra.mxu0 0.0
        %2414 = vmatpush.msra.mxu0 0.0
        %2415 = vmatpush.msra.mxu0 0.0
        %2416 = vmatpush.msra.mxu0 0.0
        %2417 = vmatpush.msra.mxu0 0.0
        %2418 = vmatpush.msra.mxu0 0.0
        %2419 = vmatpush.msra.mxu0 0.0
        %2420 = vmatpush.msra.mxu0 0.0
        %2421 = vmatpush.msra.mxu0 %v1577
        %2422 = vmatpush.msra.mxu0 %v1576
        %2423 = vmatmul.f32.gmra.mxu0 %v2328
        %v2424 = vpop.f32.mrf.mxu0
        %v2425 = vadd.f32 0.0, %v2424
        %2426 = vmatmul.f32.gmra.mxu0 %v2331
        %v2427 = vpop.f32.mrf.mxu0
        %v2428 = vadd.f32 0.0, %v2427
        %2429 = vdwg.mxu0
        %v2430 = vpack.c.bf16 %v2428, %v2425
        %s2431 = scalar_lea.vmem %s11, 16
        %v2432 = vld [vmem:[%s2431] sm:$0xf]
        %v2433 = vld [vmem:[%s2431 + $0x4] sm:$0xf]
        %v2436 = vunpack.c.l.b16 %v2432
        %v2437 = vunpack.c.l.b16 %v2433
        %v2438 = vpack.c.b16 %v2437, %v2436
        %v2440 = vsel %vm1978, %v2438, 0
        %2442 = vmatpush.bf16.msra.mxu0 0
        %2443 = vmatpush.bf16.msra.mxu0 0
        %2444 = vmatpush.bf16.msra.mxu0 0
        %2445 = vmatpush.bf16.msra.mxu0 0
        %2446 = vmatpush.bf16.msra.mxu0 0
        %2447 = vmatpush.bf16.msra.mxu0 0
        %2448 = vmatpush.bf16.msra.mxu0 0
        %2449 = vmatpush.bf16.msra.mxu0 %v2430
        %2450 = vmatmul.bf16.gmra.mxu0 %v2440
        %v2451 = vpop.f32.mrf.mxu0
        %v2452 = vadd.f32 0.0, %v2451
        %v2453 = vpop.f32.mrf.mxu0
        %v2454 = vadd.f32 0.0, %v2453
        %2455 = vdwg.mxu0
        %v2456 = vadd.f32 %v2403, %v2452
        %v2457 = vadd.f32 %v2405, %v2454
        %2458 = vset.pattern.permute.xlu0 3
        %2459 = vperm.xlu0 %2458, %v1789
        %v2460 = vpop.permute.xlu0 %2459
        %2462 = vset.pattern.permute.xlu0 3
        %2463 = vperm.xlu0 %2462, %v1790
        %v2464 = vpop.permute.xlu0 %2463
        %v2466 = vadd.f32 %v2456, %v2460
        %v2467 = vadd.f32 %v2457, %v2464
        %v2468 = vadd.f32 %v2099, %v2466
        %v2469 = vadd.f32 %v2101, %v2467
        %v2470 = vsel %vm1978, %v2468, 0.0
        %2471 = vadd.xlane.f32.xlu0 %v2470
        %v2472 = vpop.xlane.xlu0 %2471
        %v2473 = vsel %vm1978, %v2469, 0.0
        %2474 = vadd.xlane.f32.xlu0 %v2473
        %v2475 = vpop.xlane.xlu0 %2474
        %v2476 = vmul.f32 %v2472, %v1991
        %v2477 = vmul.f32 %v2475, %v1991
        %v2478 = vsub.f32 %v2468, %v2476
        %v2479 = vsub.f32 %v2469, %v2477
        %v2480 = vmul.f32 %v2478, %v2478
        %v2481 = vmul.f32 %v2479, %v2479
        %v2482 = vsel %vm1978, %v2480, 0.0
        %2483 = vadd.xlane.f32.xlu0 %v2482
        %v2484 = vpop.xlane.xlu0 %2483
        %v2485 = vsel %vm1978, %v2481, 0.0
        %2486 = vadd.xlane.f32.xlu0 %v2485
        %v2487 = vpop.xlane.xlu0 %2486
        %v2488 = vmul.f32 %v2484, %v1991
        %v2489 = vmul.f32 %v2487, %v1991
        %v2490 = vadd.f32 %v2488, 1e-05
        %v2491 = vadd.f32 %v2489, 1e-05
        %v2492 = vrsqrt.pop %v2490
        %v2493 = vmul.f32 %v2492, %v2490
        %v2494 = vmul.f32 %v2493, %v2492
        %v2495 = vmul.f32 0.5, %v2494
        %v2496 = vsub.f32 1.5, %v2495
        %v2497 = vmul.f32 %v2492, %v2496
        %vm2498 = vweird.f32 %v2490
        %vm2499 = vweird.f32 %v2492
        %vm2500 = vmor %vm2498, %vm2499
        %v2501 = vsel %vm2500, %v2492, %v2497
        %v2502 = vrsqrt.pop %v2491
        %v2503 = vmul.f32 %v2502, %v2491
        %v2504 = vmul.f32 %v2503, %v2502
        %v2505 = vmul.f32 0.5, %v2504
        %v2506 = vsub.f32 1.5, %v2505
        %v2507 = vmul.f32 %v2502, %v2506
        %vm2508 = vweird.f32 %v2491
        %vm2509 = vweird.f32 %v2502
        %vm2510 = vmor %vm2508, %vm2509
        %v2511 = vsel %vm2510, %v2502, %v2507
        %v2512 = vmul.f32 %v2478, %v2501
        %v2513 = vmul.f32 %v2479, %v2511
        %v2514 = vxor.u32 %v2512, 2147483648
        %v2515 = vxor.u32 %v2513, 2147483648
        %v2516 = vmul.f32 %v2514, 1.442695
        %v2517 = vpow.pop %v2516
        %v2518 = vmul.f32 %v2515, 1.442695
        %v2519 = vpow.pop %v2518
        %v2520 = vadd.f32 %v2517, 1.0
        %v2521 = vadd.f32 %v2519, 1.0
        %v2522 = vrcp.pop %v2520
        %v2523 = vmul.f32 %v2520, %v2522
        %v2524 = vsub.f32 1.0, %v2523
        %v2525 = vmul.f32 %v2522, %v2524
        %v2526 = vadd.f32 %v2522, %v2525
        %vm2527 = vweird.f32 %v2520
        %vm2528 = vweird.f32 %v2522
        %vm2529 = vmor %vm2527, %vm2528
        %v2530 = vsel %vm2529, %v2522, %v2526
        %v2531 = vand.u32 2147483647, %v2520
        %vm2532 = vcmp.eq.f32.partialorder %v2531, 8.507059e+37
        %v2533 = vand.u32 %v2520, 2147483648
        %v2534 = vor.u32 1.1754944e-38, %v2533
        %v2535 = vsel %vm2532, %v2534, %v2530
        %v2536 = vmul.f32 1.0, %v2535
        %v2537 = vrcp.pop %v2521
        %v2538 = vmul.f32 %v2521, %v2537
        %v2539 = vsub.f32 1.0, %v2538
        %v2540 = vmul.f32 %v2537, %v2539
        %v2541 = vadd.f32 %v2537, %v2540
        %vm2542 = vweird.f32 %v2521
        %vm2543 = vweird.f32 %v2537
        %vm2544 = vmor %vm2542, %vm2543
        %v2545 = vsel %vm2544, %v2537, %v2541
        %v2546 = vand.u32 2147483647, %v2521
        %vm2547 = vcmp.eq.f32.partialorder %v2546, 8.507059e+37
        %v2548 = vand.u32 %v2521, 2147483648
        %v2549 = vor.u32 1.1754944e-38, %v2548
        %v2550 = vsel %vm2547, %v2549, %v2545
        %v2551 = vmul.f32 1.0, %v2550
        %v2552 = vmul.f32 %v2512, %v2536
        %v2553 = vmul.f32 %v2513, %v2551
        %v2555 = vsel %vm1978, %v2552, 0
        %v2558 = vsel %vm1978, %v2553, 0
        %2560 = vmatpush.msra.mxu0 0.0
        %2561 = vmatpush.msra.mxu0 0.0
        %2562 = vmatpush.msra.mxu0 0.0
        %2563 = vmatpush.msra.mxu0 0.0
        %2564 = vmatpush.msra.mxu0 0.0
        %2565 = vmatpush.msra.mxu0 0.0
        %2566 = vmatpush.msra.mxu0 0.0
        %2567 = vmatpush.msra.mxu0 0.0
        %2568 = vmatpush.msra.mxu0 0.0
        %2569 = vmatpush.msra.mxu0 0.0
        %2570 = vmatpush.msra.mxu0 0.0
        %2571 = vmatpush.msra.mxu0 0.0
        %2572 = vmatpush.msra.mxu0 0.0
        %2573 = vmatpush.msra.mxu0 0.0
        %2574 = vmatpush.msra.mxu0 %v1490
        %2575 = vmatpush.msra.mxu0 %v1489
        %2576 = vmatmul.f32.gmra.mxu0 %v2555
        %v2577 = vpop.f32.mrf.mxu0
        %v2578 = vadd.f32 0.0, %v2577
        %2579 = vmatmul.f32.gmra.mxu0 %v2558
        %v2580 = vpop.f32.mrf.mxu0
        %v2581 = vadd.f32 0.0, %v2580
        %2582 = vdwg.mxu0
        %v2583 = vpack.c.bf16 %v2581, %v2578
        %v2584 = vld [vmem:[%s13] sm:$0xf]
        %v2585 = vld [vmem:[%s13 + $0x4] sm:$0xf]
        %v2586 = vpack.c.bf16 %v2553, %v2552
        %s2587 = scalar_lea.vmem %s13, 8
        %v2588 = vld [vmem:[%s2587] sm:$0xf]
        %v2589 = vld [vmem:[%s2587 + $0x4] sm:$0xf]
        %v2592 = vunpack.c.l.b16 %v2588
        %v2593 = vunpack.c.l.b16 %v2589
        %v2594 = vpack.c.b16 %v2593, %v2592
        %v2596 = vsel %vm1978, %v2594, 0
        %2598 = vmatpush.bf16.msra.mxu0 0
        %2599 = vmatpush.bf16.msra.mxu0 0
        %2600 = vmatpush.bf16.msra.mxu0 0
        %2601 = vmatpush.bf16.msra.mxu0 0
        %2602 = vmatpush.bf16.msra.mxu0 0
        %2603 = vmatpush.bf16.msra.mxu0 0
        %2604 = vmatpush.bf16.msra.mxu0 0
        %2605 = vmatpush.bf16.msra.mxu0 %v2586
        %2606 = vmatmul.bf16.gmra.mxu0 %v2596
        %v2607 = vpop.f32.mrf.mxu0
        %v2608 = vadd.f32 0.0, %v2607
        %v2609 = vpop.f32.mrf.mxu0
        %v2610 = vadd.f32 0.0, %v2609
        %2611 = vdwg.mxu0
        %v2614 = vunpack.c.l.b16 %v2584
        %v2615 = vunpack.c.l.b16 %v2585
        %v2616 = vpack.c.b16 %v2615, %v2614
        %v2618 = vsel %vm1978, %v2616, 0
        %2620 = vmatpush.bf16.msra.mxu0 0
        %2621 = vmatpush.bf16.msra.mxu0 0
        %2622 = vmatpush.bf16.msra.mxu0 0
        %2623 = vmatpush.bf16.msra.mxu0 0
        %2624 = vmatpush.bf16.msra.mxu0 0
        %2625 = vmatpush.bf16.msra.mxu0 0
        %2626 = vmatpush.bf16.msra.mxu0 0
        %2627 = vmatpush.bf16.msra.mxu0 %v2583
        %2628 = vmatmul.bf16.gmra.mxu0 %v2618
        %v2629 = vpop.f32.mrf.mxu0
        %v2630 = vadd.f32 %v2608, %v2629
        %v2631 = vpop.f32.mrf.mxu0
        %v2632 = vadd.f32 %v2610, %v2631
        %2633 = vdwg.mxu0
        %2634 = vmatpush.msra.mxu0 0.0
        %2635 = vmatpush.msra.mxu0 0.0
        %2636 = vmatpush.msra.mxu0 0.0
        %2637 = vmatpush.msra.mxu0 0.0
        %2638 = vmatpush.msra.mxu0 0.0
        %2639 = vmatpush.msra.mxu0 0.0
        %2640 = vmatpush.msra.mxu0 0.0
        %2641 = vmatpush.msra.mxu0 0.0
        %2642 = vmatpush.msra.mxu0 0.0
        %2643 = vmatpush.msra.mxu0 0.0
        %2644 = vmatpush.msra.mxu0 0.0
        %2645 = vmatpush.msra.mxu0 0.0
        %2646 = vmatpush.msra.mxu0 0.0
        %2647 = vmatpush.msra.mxu0 0.0
        %2648 = vmatpush.msra.mxu0 %v1577
        %2649 = vmatpush.msra.mxu0 %v1576
        %2650 = vmatmul.f32.gmra.mxu0 %v2555
        %v2651 = vpop.f32.mrf.mxu0
        %v2652 = vadd.f32 0.0, %v2651
        %2653 = vmatmul.f32.gmra.mxu0 %v2558
        %v2654 = vpop.f32.mrf.mxu0
        %v2655 = vadd.f32 0.0, %v2654
        %2656 = vdwg.mxu0
        %v2657 = vpack.c.bf16 %v2655, %v2652
        %s2658 = scalar_lea.vmem %s13, 16
        %v2659 = vld [vmem:[%s2658] sm:$0xf]
        %v2660 = vld [vmem:[%s2658 + $0x4] sm:$0xf]
        %v2663 = vunpack.c.l.b16 %v2659
        %v2664 = vunpack.c.l.b16 %v2660
        %v2665 = vpack.c.b16 %v2664, %v2663
        %v2667 = vsel %vm1978, %v2665, 0
        %2669 = vmatpush.bf16.msra.mxu0 0
        %2670 = vmatpush.bf16.msra.mxu0 0
        %2671 = vmatpush.bf16.msra.mxu0 0
        %2672 = vmatpush.bf16.msra.mxu0 0
        %2673 = vmatpush.bf16.msra.mxu0 0
        %2674 = vmatpush.bf16.msra.mxu0 0
        %2675 = vmatpush.bf16.msra.mxu0 0
        %2676 = vmatpush.bf16.msra.mxu0 %v2657
        %2677 = vmatmul.bf16.gmra.mxu0 %v2667
        %v2678 = vpop.f32.mrf.mxu0
        %v2679 = vadd.f32 0.0, %v2678
        %v2680 = vpop.f32.mrf.mxu0
        %v2681 = vadd.f32 0.0, %v2680
        %2682 = vdwg.mxu0
        %v2683 = vadd.f32 %v2630, %v2679
        %v2684 = vadd.f32 %v2632, %v2681
        %v2685 = vld [vmem:[%s14] sm:$0xff]
        %v2686 = vld [vmem:[%s14 + $0x8] sm:$0xff]
        %2688 = vset.pattern.permute.xlu0 0
        %2689 = vperm.xlu0 %2688, %v2685
        %v2690 = vpop.permute.xlu0 %2689
        %2693 = vset.pattern.permute.xlu0 0
        %2694 = vperm.xlu0 %2693, %v2686
        %v2695 = vpop.permute.xlu0 %2694
        %v2697 = vadd.f32 %v2683, %v2690
        %v2698 = vadd.f32 %v2684, %v2695
        %v2699 = vxor.u32 %v2697, 2147483648
        %v2700 = vxor.u32 %v2698, 2147483648
        %v2701 = vmul.f32 %v2699, 1.442695
        %v2702 = vpow.pop %v2701
        %v2703 = vmul.f32 %v2700, 1.442695
        %v2704 = vpow.pop %v2703
        %v2705 = vadd.f32 %v2702, 1.0
        %v2706 = vadd.f32 %v2704, 1.0
        %v2707 = vrcp.pop %v2705
        %v2708 = vmul.f32 %v2705, %v2707
        %v2709 = vsub.f32 1.0, %v2708
        %v2710 = vmul.f32 %v2707, %v2709
        %v2711 = vadd.f32 %v2707, %v2710
        %vm2712 = vweird.f32 %v2705
        %vm2713 = vweird.f32 %v2707
        %vm2714 = vmor %vm2712, %vm2713
        %v2715 = vsel %vm2714, %v2707, %v2711
        %v2716 = vand.u32 2147483647, %v2705
        %vm2717 = vcmp.eq.f32.partialorder %v2716, 8.507059e+37
        %v2718 = vand.u32 %v2705, 2147483648
        %v2719 = vor.u32 1.1754944e-38, %v2718
        %v2720 = vsel %vm2717, %v2719, %v2715
        %v2721 = vmul.f32 1.0, %v2720
        %v2722 = vrcp.pop %v2706
        %v2723 = vmul.f32 %v2706, %v2722
        %v2724 = vsub.f32 1.0, %v2723
        %v2725 = vmul.f32 %v2722, %v2724
        %v2726 = vadd.f32 %v2722, %v2725
        %vm2727 = vweird.f32 %v2706
        %vm2728 = vweird.f32 %v2722
        %vm2729 = vmor %vm2727, %vm2728
        %v2730 = vsel %vm2729, %v2722, %v2726
        %v2731 = vand.u32 2147483647, %v2706
        %vm2732 = vcmp.eq.f32.partialorder %v2731, 8.507059e+37
        %v2733 = vand.u32 %v2706, 2147483648
        %v2734 = vor.u32 1.1754944e-38, %v2733
        %v2735 = vsel %vm2732, %v2734, %v2730
        %v2736 = vmul.f32 1.0, %v2735
        %2737 = vst.msk [vmem:[%s521] sm:$0xff] %vm1978, %v2721
        %2738 = vst.msk [vmem:[%s521 + $0x8] sm:$0xff] %vm1978, %v2736
        %s2739 = sand.u32 %s359, 1
        %s2740 = scalar_lea.sflag [#allocation4], %s2739
        %s2741 = sand.u32 %s359, 1
        %s2742 = smul.addr %s2741, 16
        %s2743 = scalar_lea.vmem [#allocation7], %s2742
        // Predicated region
        $region89: #{tpu_custom_call.1} parent=79 // pred_check
          %p2744 = pneg %p369
        $region90: #{tpu_custom_call.1} parent=79 // pred_check_branch
          %2746 = sbr.rel (%p2744) target = $region92
        $region91: #{tpu_custom_call.1} parent=79 // pred_region
          %2748 = vsyncadd %s2740, 0
          %s2749 = smul.addr %s31, 2
          %s2750 = smul.addr %s2749, 8
          %s2751 = scalar_lea.hbm %s15, %s2750
          %s2752 = sshll.u32 %s2743, 4
          %s2753 = int_to_ptr.vmem [resolvable:$true] %s2752
          %s2754 = sshll.u32 %s2751, 4
          %s2755 = int_to_ptr.hbm [resolvable:$true] %s2754
          %2760 = dma.vmem_to_hbm [thread:$0]  %s2753, 256, %s2755, %s2740, 128, 128, 8
        $region92: #{tpu_custom_call.1} parent=79 // pred_fallthru
          _
      $region80: #{tpu_custom_call.1} parent=5 // pred_fallthru
        _
      %p2761 = scmp.le.s32.totalorder 2, %s26
      // Predicated region
      $region93: #{tpu_custom_call.1} parent=5 // pred_check
        %p2762 = pneg %p2761
      $region94: #{tpu_custom_call.1} parent=5 // pred_check_branch
        %2764 = sbr.rel (%p2762) target = $region96
      $region95: #{tpu_custom_call.1} parent=5 // pred_region
        %s2765 = ssub.s32 %s26, 2
        // Predicated region
        $region97: #{tpu_custom_call.1} parent=95 // pred_check
          %p2766 = pneg %p375
        $region98: #{tpu_custom_call.1} parent=95 // pred_check_branch
          %2768 = sbr.rel (%p2766) target = $region100
        $region99: #{tpu_custom_call.1} parent=95 // pred_region
          %s2769 = sand.u32 %s360, 1
          %s2770 = scalar_lea.sflag [#allocation4], %s2769
          %s2771 = sand.u32 %s360, 1
          %s2772 = smul.addr %s2771, 16
          %s2773 = scalar_lea.vmem [#allocation7], %s2772
          %2775 = dma.done %s2770, 256
        $region100: #{tpu_custom_call.1} parent=95 // pred_fallthru
          _
      $region96: #{tpu_custom_call.1} parent=5 // pred_fallthru
        _
    $region6: #{tpu_custom_call.1} parent=1 // loop_footer
      %s30 = sadd.s32 1, %s26
    $region7: #{tpu_custom_call.1} parent=1 // loop_footer_branch
      %25 = sbr.rel target = $region3
    $region8: #{tpu_custom_call.1} parent=1 // loop_exit
      _
    %2776 = vsyncpa [#allocation3], 1
    %s2777 = scalar_lea.sflag [#allocation3], 1
    %2778 = vsyncpa %s2777, 1
    %2779 = vsyncpa [#allocation6], 1
    %2780 = vsyncpa [#allocation4], 1
    %s2781 = scalar_lea.sflag [#allocation4], 1
    %2782 = vsyncpa %s2781, 1

</llo_original>
